<compile_context>
chip_gen: v7x
topology: tpu7x:2x2x1
jax: 0.10.0
libtpu: 0.0.40
codegen_flags: <defaults>
</compile_context>

<pallas_src>
import functools
import math

import jax
import jax.numpy as jnp
from jax.experimental import pallas as pl
from jax.experimental.pallas import tpu as pltpu

# kornia get_gaussian_kernel2d((3, 3), (1.5, 1.5)) == outer(g, g), sum == 1
_WS = 3
_SIGMA = 1.5
_g = [math.exp(-((i - (_WS - 1) / 2.0) ** 2) / (2.0 * _SIGMA ** 2)) for i in range(_WS)]
_gsum = sum(_g)
_G0 = _g[0] / _gsum          # == _g[2] / _gsum (symmetric taps)
_G1 = _g[1] / _gsum

_C1 = (0.01 * 1.0) ** 2
_C2 = (0.03 * 1.0) ** 2


def _mse_ssim_kernel(pred_ref, targ_ref, out_ref, pad_ref, *, nb, n_valid, masked):
    """One (nb, H, W) slab -> partial sum of (sigmoid(pred)-targ)^2 + ssim loss map."""
    pid = pl.program_id(0)

    p = jax.nn.sigmoid(pred_ref[...])            # (nb, H, W) f32
    t = targ_ref[...]
    _, H, W = p.shape

    # ---- per-pixel MSE term (fused into the same reduction) -----------------
    diff = p - t
    pix = diff * diff

    # ---- reflect-padded stack of the 5 filtered quantities (VMEM scratch) ---
    # pad_ref: (5*nb, H+2, W+2); slab q*nb:(q+1)*nb holds quantity q.
    pad_ref[0 * nb:1 * nb, 1:H + 1, 1:W + 1] = p
    pad_ref[1 * nb:2 * nb, 1:H + 1, 1:W + 1] = t
    pad_ref[2 * nb:3 * nb, 1:H + 1, 1:W + 1] = p * p
    pad_ref[3 * nb:4 * nb, 1:H + 1, 1:W + 1] = t * t
    pad_ref[4 * nb:5 * nb, 1:H + 1, 1:W + 1] = p * t
    # reflect halo (PyTorch/kornia 'reflect': pad[-1] = x[1], pad[n] = x[n-2]);
    # the row copies span the full padded width so the corners come out right.
    pad_ref[:, 1:H + 1, 0:1]         = pad_ref[:, 1:H + 1, 2:3]
    pad_ref[:, 1:H + 1, W + 1:W + 2] = pad_ref[:, 1:H + 1, W - 1:W]
    pad_ref[:, 0:1, :]               = pad_ref[:, 2:3, :]
    pad_ref[:, H + 1:H + 2, :]       = pad_ref[:, H - 1:H, :]

    # ---- separable 3x3 gaussian (taps g0, g1, g0) ----------------------------
    g0 = jnp.float32(_G0)
    g1 = jnp.float32(_G1)
    # W pass over all H+2 rows so the H pass can slice its own halo.
    fw = (g1 * pad_ref[:, :, 1:W + 1]
          + g0 * (pad_ref[:, :, 0:W] + pad_ref[:, :, 2:W + 2]))   # (5nb, H+2, W)
    f = (g1 * fw[:, 1:H + 1, :]
         + g0 * (fw[:, 0:H, :] + fw[:, 2:H + 2, :]))              # (5nb, H, W)

    mu1, mu2 = f[0 * nb:1 * nb], f[1 * nb:2 * nb]
    e11, e22, e12 = f[2 * nb:3 * nb], f[3 * nb:4 * nb], f[4 * nb:5 * nb]

    mu1_sq = mu1 * mu1
    mu2_sq = mu2 * mu2
    mu1_mu2 = mu1 * mu2
    s11 = e11 - mu1_sq
    s22 = e22 - mu2_sq
    s12 = e12 - mu1_mu2

    num = (2.0 * mu1_mu2 + _C1) * (2.0 * s12 + _C2)
    den = (mu1_sq + mu2_sq + _C1) * (s11 + s22 + _C2)
    ssim_map = num * pl.reciprocal(den, approx=True)   # EUP slot, off the VPU
    pix = pix + jnp.clip((1.0 - ssim_map) * 0.5, 0.0, 1.0)

    if masked:  # zero-padded tail images (N % nb != 0) contribute nothing
        n_idx = jax.lax.broadcasted_iota(jnp.int32, (nb, 1, 1), 0)
        valid = ((n_idx + pid * nb) < n_valid).astype(pix.dtype)
        pix = pix * valid

    # one fused partial sum per grid step, written to its own lane-dense block
    out_ref[...] = jnp.broadcast_to(jnp.sum(pix), out_ref.shape)


def _ceil_to(x, m):
    return ((x + m - 1) // m) * m


def mse_ssim_loss(pred, target):
    """pred, target: (B, C, H, W); pred are logits (sigmoid applied in-kernel)."""
    B, C, H, W = pred.shape
    assert H >= 2 and W >= 2, "3x3 SSIM with reflect padding needs H, W >= 2"
    N = B * C
    pred_f = pred.reshape(N, H, W).astype(jnp.float32)
    targ_f = target.reshape(N, H, W).astype(jnp.float32)

    # Pick the N-block size from padded (sublane, lane) footprints so scratch +
    # double-buffered inputs + live temporaries stay well inside v7x's 64 MiB.
    lane_w = _ceil_to(W, 128)
    lane_wp = _ceil_to(W + 2, 128)
    sub_h = _ceil_to(H, 8)
    sub_hp = _ceil_to(H + 2, 8)
    per_n_input = sub_h * lane_w * 4                   # one image, one buffer
    per_n_scratch = 5 * sub_hp * lane_wp * 4           # stacked padded slab
    nb = min(
        N,
        max(1, (4 * 1024 * 1024) // (4 * per_n_input)),    # 2 inputs x 2 buffers
        max(1, (2 * 1024 * 1024) // per_n_scratch),
    )
    n_blocks = pl.cdiv(N, nb)
    n_pad = n_blocks * nb
    masked = n_pad != N
    if masked:
        pw = ((0, n_pad - N), (0, 0), (0, 0))
        pred_f = jnp.pad(pred_f, pw)
        targ_f = jnp.pad(targ_f, pw)

    total = N * H * W
    kernel = functools.partial(_mse_ssim_kernel, nb=nb, n_valid=N, masked=masked)

    cost = pl.CostEstimate(
        flops=70 * total,
        transcendentals=2 * total,                      # sigmoid + approx recip
        bytes_accessed=2 * total * 4 + n_blocks * 8 * 128 * 4,
    )

    partial_sums = pl.pallas_call(
        kernel,
        out_shape=jax.ShapeDtypeStruct((n_blocks, 8, 128), jnp.float32),
        grid=(n_blocks,),
        in_specs=[
            pl.BlockSpec((nb, H, W), lambda i: (i, 0, 0)),
            pl.BlockSpec((nb, H, W), lambda i: (i, 0, 0)),
        ],
        out_specs=pl.BlockSpec((1, 8, 128), lambda i: (i, 0, 0)),
        scratch_shapes=[pltpu.VMEM((5 * nb, H + 2, W + 2), jnp.float32)],
        compiler_params=pltpu.CompilerParams(
            # no carried state across grid steps -> both TCs can split it on v7x
            dimension_semantics=("parallel",),
            vmem_limit_bytes=48 * 1024 * 1024,
        ),
        cost_estimate=cost,
    )(pred_f, targ_f)

    # tiny final reduction + normalization in plain JAX:
    # loss = (mse + mean(ssim_loss_map)) / 2, shared denominator N*H*W
    return jnp.sum(partial_sums[:, 0, 0]) * (0.5 / total)


def _reference_loss(pred, target):
    """Pure-JAX reference (reflect-padded 3x3 gaussian SSIM + MSE)."""
    B, C, H, W = pred.shape
    p = jax.nn.sigmoid(pred.astype(jnp.float32))
    t = target.astype(jnp.float32)
    mse = jnp.mean((p - t) ** 2)

    k2d = jnp.outer(jnp.array([_G0, _G1, _G0], jnp.float32),
                    jnp.array([_G0, _G1, _G0], jnp.float32))
    pp = jnp.pad(p.reshape(B * C, H, W), ((0, 0), (1, 1), (1, 1)), mode="reflect")
    tp = jnp.pad(t.reshape(B * C, H, W), ((0, 0), (1, 1), (1, 1)), mode="reflect")

    def filt(x):
        acc = jnp.zeros((B * C, H, W), jnp.float32)
        for dy in range(3):
            for dx in range(3):
                acc = acc + k2d[dy, dx] * x[:, dy:dy + H, dx:dx + W]
        return acc

    mu1, mu2 = filt(pp), filt(tp)
    s11 = filt(pp * pp) - mu1 * mu1
    s22 = filt(tp * tp) - mu2 * mu2
    s12 = filt(pp * tp) - mu1 * mu2
    ssim = ((2 * mu1 * mu2 + _C1) * (2 * s12 + _C2)) / (
        (mu1 * mu1 + mu2 * mu2 + _C1) * (s11 + s22 + _C2))
    ssim_loss = jnp.mean(jnp.clip((1.0 - ssim) * 0.5, 0.0, 1.0))
    return (mse + ssim_loss) * 0.5


if __name__ == "__main__":
    key = jax.random.PRNGKey(0)
    k_pred, k_targ = jax.random.split(key)

    B, C, H, W = 2, 4, 16, 16
    pred = jax.random.normal(k_pred, (B, C, H, W), dtype=jnp.float32)      # logits
    target = jax.random.uniform(k_targ, (B, C, H, W), dtype=jnp.float32)   # in [0, 1]

    loss = mse_ssim_loss(pred, target)
    jax.block_until_ready(loss)

    ref = _reference_loss(pred, target)
    assert loss.shape == ()
    assert bool(jnp.isfinite(loss))
    assert abs(float(loss) - float(ref)) < 1e-2, (float(loss), float(ref))
    print("KERNEL_OK")
</pallas_src>

<mosaic_0001>
module attributes {stable_mosaic.version = 11 : i64} {
  func.func @_mse_ssim_kernel(%arg0: i32, %arg1: memref<8x16x16xf32, #tpu.memory_space<vmem>>, %arg2: memref<8x16x16xf32, #tpu.memory_space<vmem>>, %arg3: memref<1x8x128xf32, #tpu.memory_space<vmem>>, %arg4: memref<40x18x18xf32, #tpu.memory_space<vmem>>) attributes {dimension_semantics = [#tpu.dimension_semantics<parallel>], iteration_bounds = array<i64: 1>, scalar_prefetch = 0 : i64, scratch_operands = 1 : i64, tpu.core_type = #tpu.core_type<tc>, window_params = [{transform_indices = @transform_0, window_bounds = array<i64: 8, 16, 16>}, {transform_indices = @transform_1, window_bounds = array<i64: 8, 16, 16>}, {transform_indices = @transform_2, window_bounds = array<i64: 1, 8, 128>}]} {
    %c0 = arith.constant 0 : index
    %c0_0 = arith.constant 0 : index
    %c0_1 = arith.constant 0 : index
    %0 = vector.load %arg1[%c0, %c0_0, %c0_1] : memref<8x16x16xf32, #tpu.memory_space<vmem>>, vector<8x16x16xf32>
    %1 = arith.negf %0 : vector<8x16x16xf32>
    %2 = math.exp %1 : vector<8x16x16xf32>
    %cst = arith.constant 1.000000e+00 : f32
    %3 = vector.broadcast %cst : f32 to vector<8x16x16xf32>
    %4 = arith.addf %3, %2 : vector<8x16x16xf32>
    %5 = arith.divf %3, %4 : vector<8x16x16xf32>
    %c0_2 = arith.constant 0 : index
    %c0_3 = arith.constant 0 : index
    %c0_4 = arith.constant 0 : index
    %6 = vector.load %arg2[%c0_2, %c0_3, %c0_4] : memref<8x16x16xf32, #tpu.memory_space<vmem>>, vector<8x16x16xf32>
    %7 = arith.subf %5, %6 : vector<8x16x16xf32>
    %8 = arith.mulf %7, %7 : vector<8x16x16xf32>
    %c0_5 = arith.constant 0 : index
    %c1 = arith.constant 1 : index
    %c1_6 = arith.constant 1 : index
    %9 = vector.load %arg4[%c0_5, %c1, %c1_6] : memref<40x18x18xf32, #tpu.memory_space<vmem>>, vector<8x16x16xf32>
    tpu.vector_store %arg4[%c0_5, %c1, %c1_6], %5 {strides = array<i32>} : memref<40x18x18xf32, #tpu.memory_space<vmem>>, vector<8x16x16xf32>,
    %c8 = arith.constant 8 : index
    %c1_7 = arith.constant 1 : index
    %c1_8 = arith.constant 1 : index
    %10 = vector.load %arg4[%c8, %c1_7, %c1_8] : memref<40x18x18xf32, #tpu.memory_space<vmem>>, vector<8x16x16xf32>
    tpu.vector_store %arg4[%c8, %c1_7, %c1_8], %6 {strides = array<i32>} : memref<40x18x18xf32, #tpu.memory_space<vmem>>, vector<8x16x16xf32>,
    %11 = arith.mulf %5, %5 : vector<8x16x16xf32>
    %c16 = arith.constant 16 : index
    %c1_9 = arith.constant 1 : index
    %c1_10 = arith.constant 1 : index
    %12 = vector.load %arg4[%c16, %c1_9, %c1_10] : memref<40x18x18xf32, #tpu.memory_space<vmem>>, vector<8x16x16xf32>
    tpu.vector_store %arg4[%c16, %c1_9, %c1_10], %11 {strides = array<i32>} : memref<40x18x18xf32, #tpu.memory_space<vmem>>, vector<8x16x16xf32>,
    %13 = arith.mulf %6, %6 : vector<8x16x16xf32>
    %c24 = arith.constant 24 : index
    %c1_11 = arith.constant 1 : index
    %c1_12 = arith.constant 1 : index
    %14 = vector.load %arg4[%c24, %c1_11, %c1_12] : memref<40x18x18xf32, #tpu.memory_space<vmem>>, vector<8x16x16xf32>
    tpu.vector_store %arg4[%c24, %c1_11, %c1_12], %13 {strides = array<i32>} : memref<40x18x18xf32, #tpu.memory_space<vmem>>, vector<8x16x16xf32>,
    %15 = arith.mulf %5, %6 : vector<8x16x16xf32>
    %c32 = arith.constant 32 : index
    %c1_13 = arith.constant 1 : index
    %c1_14 = arith.constant 1 : index
    %16 = vector.load %arg4[%c32, %c1_13, %c1_14] : memref<40x18x18xf32, #tpu.memory_space<vmem>>, vector<8x16x16xf32>
    tpu.vector_store %arg4[%c32, %c1_13, %c1_14], %15 {strides = array<i32>} : memref<40x18x18xf32, #tpu.memory_space<vmem>>, vector<8x16x16xf32>,
    %c0_15 = arith.constant 0 : index
    %c1_16 = arith.constant 1 : index
    %c2 = arith.constant 2 : index
    %17 = vector.load %arg4[%c0_15, %c1_16, %c2] : memref<40x18x18xf32, #tpu.memory_space<vmem>>, vector<40x16x1xf32>
    %c0_17 = arith.constant 0 : index
    %c1_18 = arith.constant 1 : index
    %c0_19 = arith.constant 0 : index
    %18 = vector.load %arg4[%c0_17, %c1_18, %c0_19] : memref<40x18x18xf32, #tpu.memory_space<vmem>>, vector<40x16x1xf32>
    tpu.vector_store %arg4[%c0_17, %c1_18, %c0_19], %17 {strides = array<i32>} : memref<40x18x18xf32, #tpu.memory_space<vmem>>, vector<40x16x1xf32>,
    %c0_20 = arith.constant 0 : index
    %c1_21 = arith.constant 1 : index
    %c15 = arith.constant 15 : index
    %19 = vector.load %arg4[%c0_20, %c1_21, %c15] : memref<40x18x18xf32, #tpu.memory_space<vmem>>, vector<40x16x1xf32>
    %c0_22 = arith.constant 0 : index
    %c1_23 = arith.constant 1 : index
    %c17 = arith.constant 17 : index
    %20 = vector.load %arg4[%c0_22, %c1_23, %c17] : memref<40x18x18xf32, #tpu.memory_space<vmem>>, vector<40x16x1xf32>
    tpu.vector_store %arg4[%c0_22, %c1_23, %c17], %19 {strides = array<i32>} : memref<40x18x18xf32, #tpu.memory_space<vmem>>, vector<40x16x1xf32>,
    %c0_24 = arith.constant 0 : index
    %c2_25 = arith.constant 2 : index
    %c0_26 = arith.constant 0 : index
    %21 = vector.load %arg4[%c0_24, %c2_25, %c0_26] : memref<40x18x18xf32, #tpu.memory_space<vmem>>, vector<40x1x18xf32>
    %c0_27 = arith.constant 0 : index
    %c0_28 = arith.constant 0 : index
    %c0_29 = arith.constant 0 : index
    %22 = vector.load %arg4[%c0_27, %c0_28, %c0_29] : memref<40x18x18xf32, #tpu.memory_space<vmem>>, vector<40x1x18xf32>
    tpu.vector_store %arg4[%c0_27, %c0_28, %c0_29], %21 {strides = array<i32>} : memref<40x18x18xf32, #tpu.memory_space<vmem>>, vector<40x1x18xf32>,
    %c0_30 = arith.constant 0 : index
    %c15_31 = arith.constant 15 : index
    %c0_32 = arith.constant 0 : index
    %23 = vector.load %arg4[%c0_30, %c15_31, %c0_32] : memref<40x18x18xf32, #tpu.memory_space<vmem>>, vector<40x1x18xf32>
    %c0_33 = arith.constant 0 : index
    %c17_34 = arith.constant 17 : index
    %c0_35 = arith.constant 0 : index
    %24 = vector.load %arg4[%c0_33, %c17_34, %c0_35] : memref<40x18x18xf32, #tpu.memory_space<vmem>>, vector<40x1x18xf32>
    tpu.vector_store %arg4[%c0_33, %c17_34, %c0_35], %23 {strides = array<i32>} : memref<40x18x18xf32, #tpu.memory_space<vmem>>, vector<40x1x18xf32>,
    %c0_36 = arith.constant 0 : index
    %c0_37 = arith.constant 0 : index
    %c1_38 = arith.constant 1 : index
    %25 = vector.load %arg4[%c0_36, %c0_37, %c1_38] : memref<40x18x18xf32, #tpu.memory_space<vmem>>, vector<40x18x16xf32>
    %cst_39 = arith.constant 0.384397328 : f32
    %26 = vector.broadcast %cst_39 : f32 to vector<40x18x16xf32>
    %27 = arith.mulf %26, %25 : vector<40x18x16xf32>
    %c0_40 = arith.constant 0 : index
    %c0_41 = arith.constant 0 : index
    %c0_42 = arith.constant 0 : index
    %28 = vector.load %arg4[%c0_40, %c0_41, %c0_42] : memref<40x18x18xf32, #tpu.memory_space<vmem>>, vector<40x18x16xf32>
    %c0_43 = arith.constant 0 : index
    %c0_44 = arith.constant 0 : index
    %c2_45 = arith.constant 2 : index
    %29 = vector.load %arg4[%c0_43, %c0_44, %c2_45] : memref<40x18x18xf32, #tpu.memory_space<vmem>>, vector<40x18x16xf32>
    %30 = arith.addf %28, %29 : vector<40x18x16xf32>
    %cst_46 = arith.constant 0.307801336 : f32
    %31 = vector.broadcast %cst_46 : f32 to vector<40x18x16xf32>
    %32 = arith.mulf %31, %30 : vector<40x18x16xf32>
    %33 = arith.addf %27, %32 : vector<40x18x16xf32>
    %34 = vector.extract_strided_slice %33 {offsets = [0, 1, 0], sizes = [40, 16, 16], strides = [1, 1, 1]} : vector<40x18x16xf32> to vector<40x16x16xf32>
    %cst_47 = arith.constant 0.384397328 : f32
    %35 = vector.broadcast %cst_47 : f32 to vector<40x16x16xf32>
    %36 = arith.mulf %35, %34 : vector<40x16x16xf32>
    %37 = vector.extract_strided_slice %33 {offsets = [0, 0, 0], sizes = [40, 16, 16], strides = [1, 1, 1]} : vector<40x18x16xf32> to vector<40x16x16xf32>
    %38 = vector.extract_strided_slice %33 {offsets = [0, 2, 0], sizes = [40, 16, 16], strides = [1, 1, 1]} : vector<40x18x16xf32> to vector<40x16x16xf32>
    %39 = arith.addf %37, %38 : vector<40x16x16xf32>
    %cst_48 = arith.constant 0.307801336 : f32
    %40 = vector.broadcast %cst_48 : f32 to vector<40x16x16xf32>
    %41 = arith.mulf %40, %39 : vector<40x16x16xf32>
    %42 = arith.addf %36, %41 : vector<40x16x16xf32>
    %43 = vector.extract_strided_slice %42 {offsets = [0, 0, 0], sizes = [8, 16, 16], strides = [1, 1, 1]} : vector<40x16x16xf32> to vector<8x16x16xf32>
    %44 = vector.extract_strided_slice %42 {offsets = [8, 0, 0], sizes = [8, 16, 16], strides = [1, 1, 1]} : vector<40x16x16xf32> to vector<8x16x16xf32>
    %45 = vector.extract_strided_slice %42 {offsets = [16, 0, 0], sizes = [8, 16, 16], strides = [1, 1, 1]} : vector<40x16x16xf32> to vector<8x16x16xf32>
    %46 = vector.extract_strided_slice %42 {offsets = [24, 0, 0], sizes = [8, 16, 16], strides = [1, 1, 1]} : vector<40x16x16xf32> to vector<8x16x16xf32>
    %47 = vector.extract_strided_slice %42 {offsets = [32, 0, 0], sizes = [8, 16, 16], strides = [1, 1, 1]} : vector<40x16x16xf32> to vector<8x16x16xf32>
    %48 = arith.mulf %43, %43 : vector<8x16x16xf32>
    %49 = arith.mulf %44, %44 : vector<8x16x16xf32>
    %50 = arith.mulf %43, %44 : vector<8x16x16xf32>
    %51 = arith.subf %45, %48 : vector<8x16x16xf32>
    %52 = arith.subf %46, %49 : vector<8x16x16xf32>
    %53 = arith.subf %47, %50 : vector<8x16x16xf32>
    %cst_49 = arith.constant 2.000000e+00 : f32
    %54 = vector.broadcast %cst_49 : f32 to vector<8x16x16xf32>
    %55 = arith.mulf %54, %50 : vector<8x16x16xf32>
    %cst_50 = arith.constant 9.99999974E-5 : f32
    %56 = vector.broadcast %cst_50 : f32 to vector<8x16x16xf32>
    %57 = arith.addf %55, %56 : vector<8x16x16xf32>
    %cst_51 = arith.constant 2.000000e+00 : f32
    %58 = vector.broadcast %cst_51 : f32 to vector<8x16x16xf32>
    %59 = arith.mulf %58, %53 : vector<8x16x16xf32>
    %cst_52 = arith.constant 8.99999984E-4 : f32
    %60 = vector.broadcast %cst_52 : f32 to vector<8x16x16xf32>
    %61 = arith.addf %59, %60 : vector<8x16x16xf32>
    %62 = arith.mulf %57, %61 : vector<8x16x16xf32>
    %63 = arith.addf %48, %49 : vector<8x16x16xf32>
    %cst_53 = arith.constant 9.99999974E-5 : f32
    %64 = vector.broadcast %cst_53 : f32 to vector<8x16x16xf32>
    %65 = arith.addf %63, %64 : vector<8x16x16xf32>
    %66 = arith.addf %51, %52 : vector<8x16x16xf32>
    %cst_54 = arith.constant 8.99999984E-4 : f32
    %67 = vector.broadcast %cst_54 : f32 to vector<8x16x16xf32>
    %68 = arith.addf %66, %67 : vector<8x16x16xf32>
    %69 = arith.mulf %65, %68 : vector<8x16x16xf32>
    %70 = tpu.reciprocal %69 {approx = true} : vector<8x16x16xf32> -> vector<8x16x16xf32>
    %71 = arith.mulf %62, %70 : vector<8x16x16xf32>
    %cst_55 = arith.constant 1.000000e+00 : f32
    %72 = vector.broadcast %cst_55 : f32 to vector<8x16x16xf32>
    %73 = arith.subf %72, %71 : vector<8x16x16xf32>
    %cst_56 = arith.constant 5.000000e-01 : f32
    %74 = vector.broadcast %cst_56 : f32 to vector<8x16x16xf32>
    %75 = arith.mulf %73, %74 : vector<8x16x16xf32>
    %cst_57 = arith.constant 0.000000e+00 : f32
    %cst_58 = arith.constant 1.000000e+00 : f32
    %76 = vector.broadcast %cst_57 : f32 to vector<8x16x16xf32>
    %77 = arith.maximumf %76, %75 : vector<8x16x16xf32>
    %78 = vector.broadcast %cst_58 : f32 to vector<8x16x16xf32>
    %79 = arith.minimumf %78, %77 : vector<8x16x16xf32>
    %80 = arith.addf %8, %79 : vector<8x16x16xf32>
    %81 = vector.shape_cast %80 : vector<8x16x16xf32> to vector<1x8x16x16xf32>
    %cst_59 = arith.constant dense<0.000000e+00> : vector<1xf32>
    %82 = vector.multi_reduction <add>, %81, %cst_59 [1, 2, 3] : vector<1x8x16x16xf32> to vector<1xf32>
    %83 = vector.shape_cast %82 : vector<1xf32> to vector<1x1x1x1xf32>
    %84 = vector.extract %83[0, 0, 0, 0] : f32 from vector<1x1x1x1xf32>
    %85 = vector.broadcast %84 : f32 to vector<1x8x128xf32>
    %c0_60 = arith.constant 0 : index
    %c0_61 = arith.constant 0 : index
    %c0_62 = arith.constant 0 : index
    %86 = vector.load %arg3[%c0_60, %c0_61, %c0_62] : memref<1x8x128xf32, #tpu.memory_space<vmem>>, vector<1x8x128xf32>
    tpu.vector_store %arg3[%c0_60, %c0_61, %c0_62], %85 {strides = array<i32>} : memref<1x8x128xf32, #tpu.memory_space<vmem>>, vector<1x8x128xf32>,
    return
  }
  func.func @transform_0(%arg0: i32) -> (i32, i32, i32) {
    %c0_i32 = arith.constant 0 : i32
    %c0_i32_0 = arith.constant 0 : i32
    %c0_i32_1 = arith.constant 0 : i32
    return %arg0, %c0_i32, %c0_i32_0 : i32, i32, i32
  }
  func.func @transform_1(%arg0: i32) -> (i32, i32, i32) {
    %c0_i32 = arith.constant 0 : i32
    %c0_i32_0 = arith.constant 0 : i32
    %c0_i32_1 = arith.constant 0 : i32
    return %arg0, %c0_i32, %c0_i32_0 : i32, i32, i32
  }
  func.func @transform_2(%arg0: i32) -> (i32, i32, i32) {
    %c0_i32 = arith.constant 0 : i32
    %c0_i32_0 = arith.constant 0 : i32
    %c0_i32_1 = arith.constant 0 : i32
    return %arg0, %c0_i32, %c0_i32_0 : i32, i32, i32
  }
}

</mosaic_0001>

<llo_original>
// kernel: tpu_custom_call.1
$region0: #{tpu_custom_call.1}
  #allocation0 [shape = 'u32[]', space=smem, size = 0x4, offset = 0x4, fixed_abs, tag = 'smem constant byte address 0x4 - core index']
  #allocation1 [shape = 'u32[144,128]{1,0:T(1,128)}', space=vmem, size = 0x12000, scoped, tag = 'internal scratch']
  #allocation2 [shape = 'f32[40,18,18]{2,1,0:T(8,128)}', space=vmem, size = 0x78000, scoped, tag = 'scratch operand']
  %s0 = inlined_call_operand.hbm [shape: f32[8,16,16], index: 0, kind: input, shape index: {}]
  %s1 = inlined_call_operand.hbm [shape: f32[8,16,16], index: 1, kind: input, shape index: {}]
  %s2 = inlined_call_operand.hbm [shape: f32[1,8,128], index: 2, kind: output, shape index: {}]
  %s3 = sld [smem:[#allocation0]]
  $region26: #{tpu_custom_call.1} parent=0
    _
  %s5 = ssub.s32 1, %s3
  %s6 = scalar_select 0, %s5, %s3
  $region1: #{tpu_custom_call.1} parent=0
    #allocation3 [shape = 'u8[65536]{0}', space=vmem, size = 0x10000, scoped, tag = 'input window, operand 0, single buffered']
    #allocation4 [shape = 's32[1]{0}', space=sflag, size = 0x4, scoped, tag = 'scoped memory for tpu_custom_call.1']
    #allocation5 [shape = 's32[1]{0}', space=sflag, size = 0x4, scoped, tag = 'scoped memory for tpu_custom_call.1']
    #allocation6 [shape = 'u8[65536]{0}', space=vmem, size = 0x10000, scoped, tag = 'input window, operand 1, single buffered']
    #allocation7 [shape = 's32[1]{0}', space=sflag, size = 0x4, scoped, tag = 'scoped memory for tpu_custom_call.1']
    #allocation8 [shape = 'u8[4096]{0}', space=vmem, size = 0x1000, scoped, tag = 'output window, operand 0, single buffered']
    %7 = vsyncpa [#allocation4], 0
    %8 = vsyncpa [#allocation7], 0
    %9 = vsyncpa [#allocation5], 0
    // Predicated region
    $region2: #{tpu_custom_call.1} parent=1 // pred_check
      _
    $region3: #{tpu_custom_call.1} parent=1 // pred_check_branch
      %11 = sbr.rel (0) target = $region5
    $region4: #{tpu_custom_call.1} parent=1 // pred_region
      %s13 = ssub.s32 2048, 2048
      %14 = vsyncadd [#allocation4], %s13
      %s15 = sshll.u32 [#allocation3], 4
      %s16 = int_to_ptr.vmem [resolvable:$true] %s15
      %21 = dma.hbm_to_vmem [thread:$0]  %s0, 2048, %s16, [#allocation4], 128, 128, 8
    $region5: #{tpu_custom_call.1} parent=1 // pred_fallthru
      _
    // Predicated region
    $region6: #{tpu_custom_call.1} parent=1 // pred_check
      _
    $region7: #{tpu_custom_call.1} parent=1 // pred_check_branch
      %23 = sbr.rel (0) target = $region9
    $region8: #{tpu_custom_call.1} parent=1 // pred_region
      %s25 = ssub.s32 2048, 2048
      %26 = vsyncadd [#allocation7], %s25
      %s27 = sshll.u32 [#allocation6], 4
      %s28 = int_to_ptr.vmem [resolvable:$true] %s27
      %33 = dma.hbm_to_vmem [thread:$0]  %s1, 2048, %s28, [#allocation7], 128, 128, 8
    $region9: #{tpu_custom_call.1} parent=1 // pred_fallthru
      _
    // Predicated region
    $region10: #{tpu_custom_call.1} parent=1 // pred_check
      _
    $region11: #{tpu_custom_call.1} parent=1 // pred_check_branch
      %35 = sbr.rel (0) target = $region13
    $region12: #{tpu_custom_call.1} parent=1 // pred_region
      %36 = dma.done [#allocation4], 2048
    $region13: #{tpu_custom_call.1} parent=1 // pred_fallthru
      _
    // Predicated region
    $region14: #{tpu_custom_call.1} parent=1 // pred_check
      _
    $region15: #{tpu_custom_call.1} parent=1 // pred_check_branch
      %38 = sbr.rel (0) target = $region17
    $region16: #{tpu_custom_call.1} parent=1 // pred_region
      %39 = dma.done [#allocation7], 2048
    $region17: #{tpu_custom_call.1} parent=1 // pred_fallthru
      _
    %v40 = vld [vmem:[#allocation3] sm:$0xff]
    %v41 = vld [vmem:[#allocation3 + $0x8] sm:$0xff]
    %v42 = vld [vmem:[#allocation3 + $0x10] sm:$0xff]
    %v43 = vld [vmem:[#allocation3 + $0x18] sm:$0xff]
    %v44 = vld [vmem:[#allocation3 + $0x20] sm:$0xff]
    %v45 = vld [vmem:[#allocation3 + $0x28] sm:$0xff]
    %v46 = vld [vmem:[#allocation3 + $0x30] sm:$0xff]
    %v47 = vld [vmem:[#allocation3 + $0x38] sm:$0xff]
    %v48 = vld [vmem:[#allocation3 + $0x40] sm:$0xff]
    %v49 = vld [vmem:[#allocation3 + $0x48] sm:$0xff]
    %v50 = vld [vmem:[#allocation3 + $0x50] sm:$0xff]
    %v51 = vld [vmem:[#allocation3 + $0x58] sm:$0xff]
    %v52 = vld [vmem:[#allocation3 + $0x60] sm:$0xff]
    %v53 = vld [vmem:[#allocation3 + $0x68] sm:$0xff]
    %v54 = vld [vmem:[#allocation3 + $0x70] sm:$0xff]
    %v55 = vld [vmem:[#allocation3 + $0x78] sm:$0xff]
    %v56 = vxor.u32 %v40, 2147483648
    %v57 = vxor.u32 %v41, 2147483648
    %v58 = vxor.u32 %v42, 2147483648
    %v59 = vxor.u32 %v43, 2147483648
    %v60 = vxor.u32 %v44, 2147483648
    %v61 = vxor.u32 %v45, 2147483648
    %v62 = vxor.u32 %v46, 2147483648
    %v63 = vxor.u32 %v47, 2147483648
    %v64 = vxor.u32 %v48, 2147483648
    %v65 = vxor.u32 %v49, 2147483648
    %v66 = vxor.u32 %v50, 2147483648
    %v67 = vxor.u32 %v51, 2147483648
    %v68 = vxor.u32 %v52, 2147483648
    %v69 = vxor.u32 %v53, 2147483648
    %v70 = vxor.u32 %v54, 2147483648
    %v71 = vxor.u32 %v55, 2147483648
    %v72 = vmul.f32 %v56, 1.442695
    %v73 = vpow.pop %v72
    %v74 = vmul.f32 %v57, 1.442695
    %v75 = vpow.pop %v74
    %v76 = vmul.f32 %v58, 1.442695
    %v77 = vpow.pop %v76
    %v78 = vmul.f32 %v59, 1.442695
    %v79 = vpow.pop %v78
    %v80 = vmul.f32 %v60, 1.442695
    %v81 = vpow.pop %v80
    %v82 = vmul.f32 %v61, 1.442695
    %v83 = vpow.pop %v82
    %v84 = vmul.f32 %v62, 1.442695
    %v85 = vpow.pop %v84
    %v86 = vmul.f32 %v63, 1.442695
    %v87 = vpow.pop %v86
    %v88 = vmul.f32 %v64, 1.442695
    %v89 = vpow.pop %v88
    %v90 = vmul.f32 %v65, 1.442695
    %v91 = vpow.pop %v90
    %v92 = vmul.f32 %v66, 1.442695
    %v93 = vpow.pop %v92
    %v94 = vmul.f32 %v67, 1.442695
    %v95 = vpow.pop %v94
    %v96 = vmul.f32 %v68, 1.442695
    %v97 = vpow.pop %v96
    %v98 = vmul.f32 %v69, 1.442695
    %v99 = vpow.pop %v98
    %v100 = vmul.f32 %v70, 1.442695
    %v101 = vpow.pop %v100
    %v102 = vmul.f32 %v71, 1.442695
    %v103 = vpow.pop %v102
    %v104 = vadd.f32 %v73, 1.0
    %v105 = vadd.f32 %v75, 1.0
    %v106 = vadd.f32 %v77, 1.0
    %v107 = vadd.f32 %v79, 1.0
    %v108 = vadd.f32 %v81, 1.0
    %v109 = vadd.f32 %v83, 1.0
    %v110 = vadd.f32 %v85, 1.0
    %v111 = vadd.f32 %v87, 1.0
    %v112 = vadd.f32 %v89, 1.0
    %v113 = vadd.f32 %v91, 1.0
    %v114 = vadd.f32 %v93, 1.0
    %v115 = vadd.f32 %v95, 1.0
    %v116 = vadd.f32 %v97, 1.0
    %v117 = vadd.f32 %v99, 1.0
    %v118 = vadd.f32 %v101, 1.0
    %v119 = vadd.f32 %v103, 1.0
    %v120 = vrcp.pop %v104
    %v121 = vmul.f32 1.0, %v120
    %v122 = vrcp.pop %v105
    %v123 = vmul.f32 1.0, %v122
    %v124 = vrcp.pop %v106
    %v125 = vmul.f32 1.0, %v124
    %v126 = vrcp.pop %v107
    %v127 = vmul.f32 1.0, %v126
    %v128 = vrcp.pop %v108
    %v129 = vmul.f32 1.0, %v128
    %v130 = vrcp.pop %v109
    %v131 = vmul.f32 1.0, %v130
    %v132 = vrcp.pop %v110
    %v133 = vmul.f32 1.0, %v132
    %v134 = vrcp.pop %v111
    %v135 = vmul.f32 1.0, %v134
    %v136 = vrcp.pop %v112
    %v137 = vmul.f32 1.0, %v136
    %v138 = vrcp.pop %v113
    %v139 = vmul.f32 1.0, %v138
    %v140 = vrcp.pop %v114
    %v141 = vmul.f32 1.0, %v140
    %v142 = vrcp.pop %v115
    %v143 = vmul.f32 1.0, %v142
    %v144 = vrcp.pop %v116
    %v145 = vmul.f32 1.0, %v144
    %v146 = vrcp.pop %v117
    %v147 = vmul.f32 1.0, %v146
    %v148 = vrcp.pop %v118
    %v149 = vmul.f32 1.0, %v148
    %v150 = vrcp.pop %v119
    %v151 = vmul.f32 1.0, %v150
    %v152 = vld [vmem:[#allocation6] sm:$0xff]
    %v153 = vld [vmem:[#allocation6 + $0x8] sm:$0xff]
    %v154 = vld [vmem:[#allocation6 + $0x10] sm:$0xff]
    %v155 = vld [vmem:[#allocation6 + $0x18] sm:$0xff]
    %v156 = vld [vmem:[#allocation6 + $0x20] sm:$0xff]
    %v157 = vld [vmem:[#allocation6 + $0x28] sm:$0xff]
    %v158 = vld [vmem:[#allocation6 + $0x30] sm:$0xff]
    %v159 = vld [vmem:[#allocation6 + $0x38] sm:$0xff]
    %v160 = vld [vmem:[#allocation6 + $0x40] sm:$0xff]
    %v161 = vld [vmem:[#allocation6 + $0x48] sm:$0xff]
    %v162 = vld [vmem:[#allocation6 + $0x50] sm:$0xff]
    %v163 = vld [vmem:[#allocation6 + $0x58] sm:$0xff]
    %v164 = vld [vmem:[#allocation6 + $0x60] sm:$0xff]
    %v165 = vld [vmem:[#allocation6 + $0x68] sm:$0xff]
    %v166 = vld [vmem:[#allocation6 + $0x70] sm:$0xff]
    %v167 = vld [vmem:[#allocation6 + $0x78] sm:$0xff]
    %v168 = vsub.f32 %v121, %v152
    %v169 = vsub.f32 %v123, %v153
    %v170 = vsub.f32 %v125, %v154
    %v171 = vsub.f32 %v127, %v155
    %v172 = vsub.f32 %v129, %v156
    %v173 = vsub.f32 %v131, %v157
    %v174 = vsub.f32 %v133, %v158
    %v175 = vsub.f32 %v135, %v159
    %v176 = vsub.f32 %v137, %v160
    %v177 = vsub.f32 %v139, %v161
    %v178 = vsub.f32 %v141, %v162
    %v179 = vsub.f32 %v143, %v163
    %v180 = vsub.f32 %v145, %v164
    %v181 = vsub.f32 %v147, %v165
    %v182 = vsub.f32 %v149, %v166
    %v183 = vsub.f32 %v151, %v167
    %v184 = vmul.f32 %v168, %v168
    %v185 = vmul.f32 %v169, %v169
    %v186 = vmul.f32 %v170, %v170
    %v187 = vmul.f32 %v171, %v171
    %v188 = vmul.f32 %v172, %v172
    %v189 = vmul.f32 %v173, %v173
    %v190 = vmul.f32 %v174, %v174
    %v191 = vmul.f32 %v175, %v175
    %v192 = vmul.f32 %v176, %v176
    %v193 = vmul.f32 %v177, %v177
    %v194 = vmul.f32 %v178, %v178
    %v195 = vmul.f32 %v179, %v179
    %v196 = vmul.f32 %v180, %v180
    %v197 = vmul.f32 %v181, %v181
    %v198 = vmul.f32 %v182, %v182
    %v199 = vmul.f32 %v183, %v183
    %216 = vrot.lane.b32.xlu0 %v121, 1
    %v217 = vpop.permute.xlu0 %216
    %218 = vrot.lane.b32.xlu0 %v123, 1
    %v219 = vpop.permute.xlu0 %218
    %220 = vrot.lane.b32.xlu0 %v125, 1
    %v221 = vpop.permute.xlu0 %220
    %222 = vrot.lane.b32.xlu0 %v127, 1
    %v223 = vpop.permute.xlu0 %222
    %224 = vrot.lane.b32.xlu0 %v129, 1
    %v225 = vpop.permute.xlu0 %224
    %226 = vrot.lane.b32.xlu0 %v131, 1
    %v227 = vpop.permute.xlu0 %226
    %228 = vrot.lane.b32.xlu0 %v133, 1
    %v229 = vpop.permute.xlu0 %228
    %230 = vrot.lane.b32.xlu0 %v135, 1
    %v231 = vpop.permute.xlu0 %230
    %232 = vrot.lane.b32.xlu0 %v137, 1
    %v233 = vpop.permute.xlu0 %232
    %234 = vrot.lane.b32.xlu0 %v139, 1
    %v235 = vpop.permute.xlu0 %234
    %236 = vrot.lane.b32.xlu0 %v141, 1
    %v237 = vpop.permute.xlu0 %236
    %238 = vrot.lane.b32.xlu0 %v143, 1
    %v239 = vpop.permute.xlu0 %238
    %240 = vrot.lane.b32.xlu0 %v145, 1
    %v241 = vpop.permute.xlu0 %240
    %242 = vrot.lane.b32.xlu0 %v147, 1
    %v243 = vpop.permute.xlu0 %242
    %244 = vrot.lane.b32.xlu0 %v149, 1
    %v245 = vpop.permute.xlu0 %244
    %246 = vrot.lane.b32.xlu0 %v151, 1
    %v247 = vpop.permute.xlu0 %246
    %vm264 = vcmask 138248
    %265 = vst.msk [vmem:[#allocation2 + $0x1] sm:$0xff] %vm264, %v217
    %266 = vst.msk [vmem:[#allocation2 + $0x9] sm:$0xff] %vm264, %v219
    %267 = vst.msk [vmem:[#allocation2 + $0x19] sm:$0xff] %vm264, %v221
    %268 = vst.msk [vmem:[#allocation2 + $0x21] sm:$0xff] %vm264, %v223
    %269 = vst.msk [vmem:[#allocation2 + $0x31] sm:$0xff] %vm264, %v225
    %270 = vst.msk [vmem:[#allocation2 + $0x39] sm:$0xff] %vm264, %v227
    %271 = vst.msk [vmem:[#allocation2 + $0x49] sm:$0xff] %vm264, %v229
    %272 = vst.msk [vmem:[#allocation2 + $0x51] sm:$0xff] %vm264, %v231
    %273 = vst.msk [vmem:[#allocation2 + $0x61] sm:$0xff] %vm264, %v233
    %274 = vst.msk [vmem:[#allocation2 + $0x69] sm:$0xff] %vm264, %v235
    %275 = vst.msk [vmem:[#allocation2 + $0x79] sm:$0xff] %vm264, %v237
    %276 = vst.msk [vmem:[#allocation2 + $0x81] sm:$0xff] %vm264, %v239
    %277 = vst.msk [vmem:[#allocation2 + $0x91] sm:$0xff] %vm264, %v241
    %278 = vst.msk [vmem:[#allocation2 + $0x99] sm:$0xff] %vm264, %v243
    %279 = vst.msk [vmem:[#allocation2 + $0xa9] sm:$0xff] %vm264, %v245
    %280 = vst.msk [vmem:[#allocation2 + $0xb1] sm:$0xff] %vm264, %v247
    %297 = vrot.lane.b32.xlu0 %v152, 1
    %v298 = vpop.permute.xlu0 %297
    %299 = vrot.lane.b32.xlu0 %v153, 1
    %v300 = vpop.permute.xlu0 %299
    %301 = vrot.lane.b32.xlu0 %v154, 1
    %v302 = vpop.permute.xlu0 %301
    %303 = vrot.lane.b32.xlu0 %v155, 1
    %v304 = vpop.permute.xlu0 %303
    %305 = vrot.lane.b32.xlu0 %v156, 1
    %v306 = vpop.permute.xlu0 %305
    %307 = vrot.lane.b32.xlu0 %v157, 1
    %v308 = vpop.permute.xlu0 %307
    %309 = vrot.lane.b32.xlu0 %v158, 1
    %v310 = vpop.permute.xlu0 %309
    %311 = vrot.lane.b32.xlu0 %v159, 1
    %v312 = vpop.permute.xlu0 %311
    %313 = vrot.lane.b32.xlu0 %v160, 1
    %v314 = vpop.permute.xlu0 %313
    %315 = vrot.lane.b32.xlu0 %v161, 1
    %v316 = vpop.permute.xlu0 %315
    %317 = vrot.lane.b32.xlu0 %v162, 1
    %v318 = vpop.permute.xlu0 %317
    %319 = vrot.lane.b32.xlu0 %v163, 1
    %v320 = vpop.permute.xlu0 %319
    %321 = vrot.lane.b32.xlu0 %v164, 1
    %v322 = vpop.permute.xlu0 %321
    %323 = vrot.lane.b32.xlu0 %v165, 1
    %v324 = vpop.permute.xlu0 %323
    %325 = vrot.lane.b32.xlu0 %v166, 1
    %v326 = vpop.permute.xlu0 %325
    %327 = vrot.lane.b32.xlu0 %v167, 1
    %v328 = vpop.permute.xlu0 %327
    %s345 = scalar_lea.vmem [#allocation2], 192
    %346 = vst.msk [vmem:[%s345 + $0x1] sm:$0xff] %vm264, %v298
    %347 = vst.msk [vmem:[%s345 + $0x9] sm:$0xff] %vm264, %v300
    %348 = vst.msk [vmem:[%s345 + $0x19] sm:$0xff] %vm264, %v302
    %349 = vst.msk [vmem:[%s345 + $0x21] sm:$0xff] %vm264, %v304
    %350 = vst.msk [vmem:[%s345 + $0x31] sm:$0xff] %vm264, %v306
    %351 = vst.msk [vmem:[%s345 + $0x39] sm:$0xff] %vm264, %v308
    %352 = vst.msk [vmem:[%s345 + $0x49] sm:$0xff] %vm264, %v310
    %353 = vst.msk [vmem:[%s345 + $0x51] sm:$0xff] %vm264, %v312
    %354 = vst.msk [vmem:[%s345 + $0x61] sm:$0xff] %vm264, %v314
    %355 = vst.msk [vmem:[%s345 + $0x69] sm:$0xff] %vm264, %v316
    %356 = vst.msk [vmem:[%s345 + $0x79] sm:$0xff] %vm264, %v318
    %357 = vst.msk [vmem:[%s345 + $0x81] sm:$0xff] %vm264, %v320
    %358 = vst.msk [vmem:[%s345 + $0x91] sm:$0xff] %vm264, %v322
    %359 = vst.msk [vmem:[%s345 + $0x99] sm:$0xff] %vm264, %v324
    %360 = vst.msk [vmem:[%s345 + $0xa9] sm:$0xff] %vm264, %v326
    %361 = vst.msk [vmem:[%s345 + $0xb1] sm:$0xff] %vm264, %v328
    %v362 = vmul.f32 %v121, %v121
    %v363 = vmul.f32 %v123, %v123
    %v364 = vmul.f32 %v125, %v125
    %v365 = vmul.f32 %v127, %v127
    %v366 = vmul.f32 %v129, %v129
    %v367 = vmul.f32 %v131, %v131
    %v368 = vmul.f32 %v133, %v133
    %v369 = vmul.f32 %v135, %v135
    %v370 = vmul.f32 %v137, %v137
    %v371 = vmul.f32 %v139, %v139
    %v372 = vmul.f32 %v141, %v141
    %v373 = vmul.f32 %v143, %v143
    %v374 = vmul.f32 %v145, %v145
    %v375 = vmul.f32 %v147, %v147
    %v376 = vmul.f32 %v149, %v149
    %v377 = vmul.f32 %v151, %v151
    %394 = vrot.lane.b32.xlu0 %v362, 1
    %v395 = vpop.permute.xlu0 %394
    %396 = vrot.lane.b32.xlu0 %v363, 1
    %v397 = vpop.permute.xlu0 %396
    %398 = vrot.lane.b32.xlu0 %v364, 1
    %v399 = vpop.permute.xlu0 %398
    %400 = vrot.lane.b32.xlu0 %v365, 1
    %v401 = vpop.permute.xlu0 %400
    %402 = vrot.lane.b32.xlu0 %v366, 1
    %v403 = vpop.permute.xlu0 %402
    %404 = vrot.lane.b32.xlu0 %v367, 1
    %v405 = vpop.permute.xlu0 %404
    %406 = vrot.lane.b32.xlu0 %v368, 1
    %v407 = vpop.permute.xlu0 %406
    %408 = vrot.lane.b32.xlu0 %v369, 1
    %v409 = vpop.permute.xlu0 %408
    %410 = vrot.lane.b32.xlu0 %v370, 1
    %v411 = vpop.permute.xlu0 %410
    %412 = vrot.lane.b32.xlu0 %v371, 1
    %v413 = vpop.permute.xlu0 %412
    %414 = vrot.lane.b32.xlu0 %v372, 1
    %v415 = vpop.permute.xlu0 %414
    %416 = vrot.lane.b32.xlu0 %v373, 1
    %v417 = vpop.permute.xlu0 %416
    %418 = vrot.lane.b32.xlu0 %v374, 1
    %v419 = vpop.permute.xlu0 %418
    %420 = vrot.lane.b32.xlu0 %v375, 1
    %v421 = vpop.permute.xlu0 %420
    %422 = vrot.lane.b32.xlu0 %v376, 1
    %v423 = vpop.permute.xlu0 %422
    %424 = vrot.lane.b32.xlu0 %v377, 1
    %v425 = vpop.permute.xlu0 %424
    %s442 = scalar_lea.vmem [#allocation2], 384
    %443 = vst.msk [vmem:[%s442 + $0x1] sm:$0xff] %vm264, %v395
    %444 = vst.msk [vmem:[%s442 + $0x9] sm:$0xff] %vm264, %v397
    %445 = vst.msk [vmem:[%s442 + $0x19] sm:$0xff] %vm264, %v399
    %446 = vst.msk [vmem:[%s442 + $0x21] sm:$0xff] %vm264, %v401
    %447 = vst.msk [vmem:[%s442 + $0x31] sm:$0xff] %vm264, %v403
    %448 = vst.msk [vmem:[%s442 + $0x39] sm:$0xff] %vm264, %v405
    %449 = vst.msk [vmem:[%s442 + $0x49] sm:$0xff] %vm264, %v407
    %450 = vst.msk [vmem:[%s442 + $0x51] sm:$0xff] %vm264, %v409
    %451 = vst.msk [vmem:[%s442 + $0x61] sm:$0xff] %vm264, %v411
    %452 = vst.msk [vmem:[%s442 + $0x69] sm:$0xff] %vm264, %v413
    %453 = vst.msk [vmem:[%s442 + $0x79] sm:$0xff] %vm264, %v415
    %454 = vst.msk [vmem:[%s442 + $0x81] sm:$0xff] %vm264, %v417
    %455 = vst.msk [vmem:[%s442 + $0x91] sm:$0xff] %vm264, %v419
    %456 = vst.msk [vmem:[%s442 + $0x99] sm:$0xff] %vm264, %v421
    %457 = vst.msk [vmem:[%s442 + $0xa9] sm:$0xff] %vm264, %v423
    %458 = vst.msk [vmem:[%s442 + $0xb1] sm:$0xff] %vm264, %v425
    %v459 = vmul.f32 %v152, %v152
    %v460 = vmul.f32 %v153, %v153
    %v461 = vmul.f32 %v154, %v154
    %v462 = vmul.f32 %v155, %v155
    %v463 = vmul.f32 %v156, %v156
    %v464 = vmul.f32 %v157, %v157
    %v465 = vmul.f32 %v158, %v158
    %v466 = vmul.f32 %v159, %v159
    %v467 = vmul.f32 %v160, %v160
    %v468 = vmul.f32 %v161, %v161
    %v469 = vmul.f32 %v162, %v162
    %v470 = vmul.f32 %v163, %v163
    %v471 = vmul.f32 %v164, %v164
    %v472 = vmul.f32 %v165, %v165
    %v473 = vmul.f32 %v166, %v166
    %v474 = vmul.f32 %v167, %v167
    %491 = vrot.lane.b32.xlu0 %v459, 1
    %v492 = vpop.permute.xlu0 %491
    %493 = vrot.lane.b32.xlu0 %v460, 1
    %v494 = vpop.permute.xlu0 %493
    %495 = vrot.lane.b32.xlu0 %v461, 1
    %v496 = vpop.permute.xlu0 %495
    %497 = vrot.lane.b32.xlu0 %v462, 1
    %v498 = vpop.permute.xlu0 %497
    %499 = vrot.lane.b32.xlu0 %v463, 1
    %v500 = vpop.permute.xlu0 %499
    %501 = vrot.lane.b32.xlu0 %v464, 1
    %v502 = vpop.permute.xlu0 %501
    %503 = vrot.lane.b32.xlu0 %v465, 1
    %v504 = vpop.permute.xlu0 %503
    %505 = vrot.lane.b32.xlu0 %v466, 1
    %v506 = vpop.permute.xlu0 %505
    %507 = vrot.lane.b32.xlu0 %v467, 1
    %v508 = vpop.permute.xlu0 %507
    %509 = vrot.lane.b32.xlu0 %v468, 1
    %v510 = vpop.permute.xlu0 %509
    %511 = vrot.lane.b32.xlu0 %v469, 1
    %v512 = vpop.permute.xlu0 %511
    %513 = vrot.lane.b32.xlu0 %v470, 1
    %v514 = vpop.permute.xlu0 %513
    %515 = vrot.lane.b32.xlu0 %v471, 1
    %v516 = vpop.permute.xlu0 %515
    %517 = vrot.lane.b32.xlu0 %v472, 1
    %v518 = vpop.permute.xlu0 %517
    %519 = vrot.lane.b32.xlu0 %v473, 1
    %v520 = vpop.permute.xlu0 %519
    %521 = vrot.lane.b32.xlu0 %v474, 1
    %v522 = vpop.permute.xlu0 %521
    %s539 = scalar_lea.vmem [#allocation2], 576
    %540 = vst.msk [vmem:[%s539 + $0x1] sm:$0xff] %vm264, %v492
    %541 = vst.msk [vmem:[%s539 + $0x9] sm:$0xff] %vm264, %v494
    %542 = vst.msk [vmem:[%s539 + $0x19] sm:$0xff] %vm264, %v496
    %543 = vst.msk [vmem:[%s539 + $0x21] sm:$0xff] %vm264, %v498
    %544 = vst.msk [vmem:[%s539 + $0x31] sm:$0xff] %vm264, %v500
    %545 = vst.msk [vmem:[%s539 + $0x39] sm:$0xff] %vm264, %v502
    %546 = vst.msk [vmem:[%s539 + $0x49] sm:$0xff] %vm264, %v504
    %547 = vst.msk [vmem:[%s539 + $0x51] sm:$0xff] %vm264, %v506
    %548 = vst.msk [vmem:[%s539 + $0x61] sm:$0xff] %vm264, %v508
    %549 = vst.msk [vmem:[%s539 + $0x69] sm:$0xff] %vm264, %v510
    %550 = vst.msk [vmem:[%s539 + $0x79] sm:$0xff] %vm264, %v512
    %551 = vst.msk [vmem:[%s539 + $0x81] sm:$0xff] %vm264, %v514
    %552 = vst.msk [vmem:[%s539 + $0x91] sm:$0xff] %vm264, %v516
    %553 = vst.msk [vmem:[%s539 + $0x99] sm:$0xff] %vm264, %v518
    %554 = vst.msk [vmem:[%s539 + $0xa9] sm:$0xff] %vm264, %v520
    %555 = vst.msk [vmem:[%s539 + $0xb1] sm:$0xff] %vm264, %v522
    %v556 = vmul.f32 %v121, %v152
    %v557 = vmul.f32 %v123, %v153
    %v558 = vmul.f32 %v125, %v154
    %v559 = vmul.f32 %v127, %v155
    %v560 = vmul.f32 %v129, %v156
    %v561 = vmul.f32 %v131, %v157
    %v562 = vmul.f32 %v133, %v158
    %v563 = vmul.f32 %v135, %v159
    %v564 = vmul.f32 %v137, %v160
    %v565 = vmul.f32 %v139, %v161
    %v566 = vmul.f32 %v141, %v162
    %v567 = vmul.f32 %v143, %v163
    %v568 = vmul.f32 %v145, %v164
    %v569 = vmul.f32 %v147, %v165
    %v570 = vmul.f32 %v149, %v166
    %v571 = vmul.f32 %v151, %v167
    %588 = vrot.lane.b32.xlu0 %v556, 1
    %v589 = vpop.permute.xlu0 %588
    %590 = vrot.lane.b32.xlu0 %v557, 1
    %v591 = vpop.permute.xlu0 %590
    %592 = vrot.lane.b32.xlu0 %v558, 1
    %v593 = vpop.permute.xlu0 %592
    %594 = vrot.lane.b32.xlu0 %v559, 1
    %v595 = vpop.permute.xlu0 %594
    %596 = vrot.lane.b32.xlu0 %v560, 1
    %v597 = vpop.permute.xlu0 %596
    %598 = vrot.lane.b32.xlu0 %v561, 1
    %v599 = vpop.permute.xlu0 %598
    %600 = vrot.lane.b32.xlu0 %v562, 1
    %v601 = vpop.permute.xlu0 %600
    %602 = vrot.lane.b32.xlu0 %v563, 1
    %v603 = vpop.permute.xlu0 %602
    %604 = vrot.lane.b32.xlu0 %v564, 1
    %v605 = vpop.permute.xlu0 %604
    %606 = vrot.lane.b32.xlu0 %v565, 1
    %v607 = vpop.permute.xlu0 %606
    %608 = vrot.lane.b32.xlu0 %v566, 1
    %v609 = vpop.permute.xlu0 %608
    %610 = vrot.lane.b32.xlu0 %v567, 1
    %v611 = vpop.permute.xlu0 %610
    %612 = vrot.lane.b32.xlu0 %v568, 1
    %v613 = vpop.permute.xlu0 %612
    %614 = vrot.lane.b32.xlu0 %v569, 1
    %v615 = vpop.permute.xlu0 %614
    %616 = vrot.lane.b32.xlu0 %v570, 1
    %v617 = vpop.permute.xlu0 %616
    %618 = vrot.lane.b32.xlu0 %v571, 1
    %v619 = vpop.permute.xlu0 %618
    %s636 = scalar_lea.vmem [#allocation2], 768
    %637 = vst.msk [vmem:[%s636 + $0x1] sm:$0xff] %vm264, %v589
    %638 = vst.msk [vmem:[%s636 + $0x9] sm:$0xff] %vm264, %v591
    %639 = vst.msk [vmem:[%s636 + $0x19] sm:$0xff] %vm264, %v593
    %640 = vst.msk [vmem:[%s636 + $0x21] sm:$0xff] %vm264, %v595
    %641 = vst.msk [vmem:[%s636 + $0x31] sm:$0xff] %vm264, %v597
    %642 = vst.msk [vmem:[%s636 + $0x39] sm:$0xff] %vm264, %v599
    %643 = vst.msk [vmem:[%s636 + $0x49] sm:$0xff] %vm264, %v601
    %644 = vst.msk [vmem:[%s636 + $0x51] sm:$0xff] %vm264, %v603
    %645 = vst.msk [vmem:[%s636 + $0x61] sm:$0xff] %vm264, %v605
    %646 = vst.msk [vmem:[%s636 + $0x69] sm:$0xff] %vm264, %v607
    %647 = vst.msk [vmem:[%s636 + $0x79] sm:$0xff] %vm264, %v609
    %648 = vst.msk [vmem:[%s636 + $0x81] sm:$0xff] %vm264, %v611
    %649 = vst.msk [vmem:[%s636 + $0x91] sm:$0xff] %vm264, %v613
    %650 = vst.msk [vmem:[%s636 + $0x99] sm:$0xff] %vm264, %v615
    %651 = vst.msk [vmem:[%s636 + $0xa9] sm:$0xff] %vm264, %v617
    %652 = vst.msk [vmem:[%s636 + $0xb1] sm:$0xff] %vm264, %v619
    %v653 = vld [vmem:[#allocation2 + $0x1] sm:$0xff]
    %v654 = vld [vmem:[#allocation2 + $0x9] sm:$0xff]
    %v655 = vld [vmem:[#allocation2 + $0x19] sm:$0xff]
    %v656 = vld [vmem:[#allocation2 + $0x21] sm:$0xff]
    %v657 = vld [vmem:[#allocation2 + $0x31] sm:$0xff]
    %v658 = vld [vmem:[#allocation2 + $0x39] sm:$0xff]
    %v659 = vld [vmem:[#allocation2 + $0x49] sm:$0xff]
    %v660 = vld [vmem:[#allocation2 + $0x51] sm:$0xff]
    %v661 = vld [vmem:[#allocation2 + $0x61] sm:$0xff]
    %v662 = vld [vmem:[#allocation2 + $0x69] sm:$0xff]
    %v663 = vld [vmem:[#allocation2 + $0x79] sm:$0xff]
    %v664 = vld [vmem:[#allocation2 + $0x81] sm:$0xff]
    %v665 = vld [vmem:[#allocation2 + $0x91] sm:$0xff]
    %v666 = vld [vmem:[#allocation2 + $0x99] sm:$0xff]
    %v667 = vld [vmem:[#allocation2 + $0xa9] sm:$0xff]
    %v668 = vld [vmem:[#allocation2 + $0xb1] sm:$0xff]
    %v669 = vld [vmem:[#allocation2 + $0xc1] sm:$0xff]
    %v670 = vld [vmem:[#allocation2 + $0xc9] sm:$0xff]
    %v671 = vld [vmem:[#allocation2 + $0xd9] sm:$0xff]
    %v672 = vld [vmem:[#allocation2 + $0xe1] sm:$0xff]
    %v673 = vld [vmem:[#allocation2 + $0xf1] sm:$0xff]
    %v674 = vld [vmem:[#allocation2 + $0xf9] sm:$0xff]
    %v675 = vld [vmem:[#allocation2 + $0x109] sm:$0xff]
    %v676 = vld [vmem:[#allocation2 + $0x111] sm:$0xff]
    %v677 = vld [vmem:[#allocation2 + $0x121] sm:$0xff]
    %v678 = vld [vmem:[#allocation2 + $0x129] sm:$0xff]
    %v679 = vld [vmem:[#allocation2 + $0x139] sm:$0xff]
    %v680 = vld [vmem:[#allocation2 + $0x141] sm:$0xff]
    %v681 = vld [vmem:[#allocation2 + $0x151] sm:$0xff]
    %v682 = vld [vmem:[#allocation2 + $0x159] sm:$0xff]
    %v683 = vld [vmem:[#allocation2 + $0x169] sm:$0xff]
    %v684 = vld [vmem:[#allocation2 + $0x171] sm:$0xff]
    %v685 = vld [vmem:[#allocation2 + $0x181] sm:$0xff]
    %v686 = vld [vmem:[#allocation2 + $0x189] sm:$0xff]
    %v687 = vld [vmem:[#allocation2 + $0x199] sm:$0xff]
    %v688 = vld [vmem:[#allocation2 + $0x1a1] sm:$0xff]
    %v689 = vld [vmem:[#allocation2 + $0x1b1] sm:$0xff]
    %v690 = vld [vmem:[#allocation2 + $0x1b9] sm:$0xff]
    %v691 = vld [vmem:[#allocation2 + $0x1c9] sm:$0xff]
    %v692 = vld [vmem:[#allocation2 + $0x1d1] sm:$0xff]
    %v693 = vld [vmem:[#allocation2 + $0x1e1] sm:$0xff]
    %v694 = vld [vmem:[#allocation2 + $0x1e9] sm:$0xff]
    %v695 = vld [vmem:[#allocation2 + $0x1f9] sm:$0xff]
    %v696 = vld [vmem:[#allocation2 + $0x201] sm:$0xff]
    %v697 = vld [vmem:[#allocation2 + $0x211] sm:$0xff]
    %v698 = vld [vmem:[#allocation2 + $0x219] sm:$0xff]
    %v699 = vld [vmem:[#allocation2 + $0x229] sm:$0xff]
    %v700 = vld [vmem:[#allocation2 + $0x231] sm:$0xff]
    %v701 = vld [vmem:[#allocation2 + $0x241] sm:$0xff]
    %v702 = vld [vmem:[#allocation2 + $0x249] sm:$0xff]
    %v703 = vld [vmem:[#allocation2 + $0x259] sm:$0xff]
    %v704 = vld [vmem:[#allocation2 + $0x261] sm:$0xff]
    %v705 = vld [vmem:[#allocation2 + $0x271] sm:$0xff]
    %v706 = vld [vmem:[#allocation2 + $0x279] sm:$0xff]
    %v707 = vld [vmem:[#allocation2 + $0x289] sm:$0xff]
    %v708 = vld [vmem:[#allocation2 + $0x291] sm:$0xff]
    %v709 = vld [vmem:[#allocation2 + $0x2a1] sm:$0xff]
    %v710 = vld [vmem:[#allocation2 + $0x2a9] sm:$0xff]
    %v711 = vld [vmem:[#allocation2 + $0x2b9] sm:$0xff]
    %v712 = vld [vmem:[#allocation2 + $0x2c1] sm:$0xff]
    %v713 = vld [vmem:[#allocation2 + $0x2d1] sm:$0xff]
    %v714 = vld [vmem:[#allocation2 + $0x2d9] sm:$0xff]
    %v715 = vld [vmem:[#allocation2 + $0x2e9] sm:$0xff]
    %v716 = vld [vmem:[#allocation2 + $0x2f1] sm:$0xff]
    %v717 = vld [vmem:[#allocation2 + $0x301] sm:$0xff]
    %v718 = vld [vmem:[#allocation2 + $0x309] sm:$0xff]
    %v719 = vld [vmem:[#allocation2 + $0x319] sm:$0xff]
    %v720 = vld [vmem:[#allocation2 + $0x321] sm:$0xff]
    %v721 = vld [vmem:[#allocation2 + $0x331] sm:$0xff]
    %v722 = vld [vmem:[#allocation2 + $0x339] sm:$0xff]
    %v723 = vld [vmem:[#allocation2 + $0x349] sm:$0xff]
    %v724 = vld [vmem:[#allocation2 + $0x351] sm:$0xff]
    %v725 = vld [vmem:[#allocation2 + $0x361] sm:$0xff]
    %v726 = vld [vmem:[#allocation2 + $0x369] sm:$0xff]
    %v727 = vld [vmem:[#allocation2 + $0x379] sm:$0xff]
    %v728 = vld [vmem:[#allocation2 + $0x381] sm:$0xff]
    %v729 = vld [vmem:[#allocation2 + $0x391] sm:$0xff]
    %v730 = vld [vmem:[#allocation2 + $0x399] sm:$0xff]
    %v731 = vld [vmem:[#allocation2 + $0x3a9] sm:$0xff]
    %v732 = vld [vmem:[#allocation2 + $0x3b1] sm:$0xff]
    %813 = vrot.lane.b32.xlu0 %v653, 126
    %v814 = vpop.permute.xlu0 %813
    %815 = vrot.lane.b32.xlu0 %v654, 126
    %v816 = vpop.permute.xlu0 %815
    %817 = vrot.lane.b32.xlu0 %v655, 126
    %v818 = vpop.permute.xlu0 %817
    %819 = vrot.lane.b32.xlu0 %v656, 126
    %v820 = vpop.permute.xlu0 %819
    %821 = vrot.lane.b32.xlu0 %v657, 126
    %v822 = vpop.permute.xlu0 %821
    %823 = vrot.lane.b32.xlu0 %v658, 126
    %v824 = vpop.permute.xlu0 %823
    %825 = vrot.lane.b32.xlu0 %v659, 126
    %v826 = vpop.permute.xlu0 %825
    %827 = vrot.lane.b32.xlu0 %v660, 126
    %v828 = vpop.permute.xlu0 %827
    %829 = vrot.lane.b32.xlu0 %v661, 126
    %v830 = vpop.permute.xlu0 %829
    %831 = vrot.lane.b32.xlu0 %v662, 126
    %v832 = vpop.permute.xlu0 %831
    %833 = vrot.lane.b32.xlu0 %v663, 126
    %v834 = vpop.permute.xlu0 %833
    %835 = vrot.lane.b32.xlu0 %v664, 126
    %v836 = vpop.permute.xlu0 %835
    %837 = vrot.lane.b32.xlu0 %v665, 126
    %v838 = vpop.permute.xlu0 %837
    %839 = vrot.lane.b32.xlu0 %v666, 126
    %v840 = vpop.permute.xlu0 %839
    %841 = vrot.lane.b32.xlu0 %v667, 126
    %v842 = vpop.permute.xlu0 %841
    %843 = vrot.lane.b32.xlu0 %v668, 126
    %v844 = vpop.permute.xlu0 %843
    %845 = vrot.lane.b32.xlu0 %v669, 126
    %v846 = vpop.permute.xlu0 %845
    %847 = vrot.lane.b32.xlu0 %v670, 126
    %v848 = vpop.permute.xlu0 %847
    %849 = vrot.lane.b32.xlu0 %v671, 126
    %v850 = vpop.permute.xlu0 %849
    %851 = vrot.lane.b32.xlu0 %v672, 126
    %v852 = vpop.permute.xlu0 %851
    %853 = vrot.lane.b32.xlu0 %v673, 126
    %v854 = vpop.permute.xlu0 %853
    %855 = vrot.lane.b32.xlu0 %v674, 126
    %v856 = vpop.permute.xlu0 %855
    %857 = vrot.lane.b32.xlu0 %v675, 126
    %v858 = vpop.permute.xlu0 %857
    %859 = vrot.lane.b32.xlu0 %v676, 126
    %v860 = vpop.permute.xlu0 %859
    %861 = vrot.lane.b32.xlu0 %v677, 126
    %v862 = vpop.permute.xlu0 %861
    %863 = vrot.lane.b32.xlu0 %v678, 126
    %v864 = vpop.permute.xlu0 %863
    %865 = vrot.lane.b32.xlu0 %v679, 126
    %v866 = vpop.permute.xlu0 %865
    %867 = vrot.lane.b32.xlu0 %v680, 126
    %v868 = vpop.permute.xlu0 %867
    %869 = vrot.lane.b32.xlu0 %v681, 126
    %v870 = vpop.permute.xlu0 %869
    %871 = vrot.lane.b32.xlu0 %v682, 126
    %v872 = vpop.permute.xlu0 %871
    %873 = vrot.lane.b32.xlu0 %v683, 126
    %v874 = vpop.permute.xlu0 %873
    %875 = vrot.lane.b32.xlu0 %v684, 126
    %v876 = vpop.permute.xlu0 %875
    %877 = vrot.lane.b32.xlu0 %v685, 126
    %v878 = vpop.permute.xlu0 %877
    %879 = vrot.lane.b32.xlu0 %v686, 126
    %v880 = vpop.permute.xlu0 %879
    %881 = vrot.lane.b32.xlu0 %v687, 126
    %v882 = vpop.permute.xlu0 %881
    %883 = vrot.lane.b32.xlu0 %v688, 126
    %v884 = vpop.permute.xlu0 %883
    %885 = vrot.lane.b32.xlu0 %v689, 126
    %v886 = vpop.permute.xlu0 %885
    %887 = vrot.lane.b32.xlu0 %v690, 126
    %v888 = vpop.permute.xlu0 %887
    %889 = vrot.lane.b32.xlu0 %v691, 126
    %v890 = vpop.permute.xlu0 %889
    %891 = vrot.lane.b32.xlu0 %v692, 126
    %v892 = vpop.permute.xlu0 %891
    %893 = vrot.lane.b32.xlu0 %v693, 126
    %v894 = vpop.permute.xlu0 %893
    %895 = vrot.lane.b32.xlu0 %v694, 126
    %v896 = vpop.permute.xlu0 %895
    %897 = vrot.lane.b32.xlu0 %v695, 126
    %v898 = vpop.permute.xlu0 %897
    %899 = vrot.lane.b32.xlu0 %v696, 126
    %v900 = vpop.permute.xlu0 %899
    %901 = vrot.lane.b32.xlu0 %v697, 126
    %v902 = vpop.permute.xlu0 %901
    %903 = vrot.lane.b32.xlu0 %v698, 126
    %v904 = vpop.permute.xlu0 %903
    %905 = vrot.lane.b32.xlu0 %v699, 126
    %v906 = vpop.permute.xlu0 %905
    %907 = vrot.lane.b32.xlu0 %v700, 126
    %v908 = vpop.permute.xlu0 %907
    %909 = vrot.lane.b32.xlu0 %v701, 126
    %v910 = vpop.permute.xlu0 %909
    %911 = vrot.lane.b32.xlu0 %v702, 126
    %v912 = vpop.permute.xlu0 %911
    %913 = vrot.lane.b32.xlu0 %v703, 126
    %v914 = vpop.permute.xlu0 %913
    %915 = vrot.lane.b32.xlu0 %v704, 126
    %v916 = vpop.permute.xlu0 %915
    %917 = vrot.lane.b32.xlu0 %v705, 126
    %v918 = vpop.permute.xlu0 %917
    %919 = vrot.lane.b32.xlu0 %v706, 126
    %v920 = vpop.permute.xlu0 %919
    %921 = vrot.lane.b32.xlu0 %v707, 126
    %v922 = vpop.permute.xlu0 %921
    %923 = vrot.lane.b32.xlu0 %v708, 126
    %v924 = vpop.permute.xlu0 %923
    %925 = vrot.lane.b32.xlu0 %v709, 126
    %v926 = vpop.permute.xlu0 %925
    %927 = vrot.lane.b32.xlu0 %v710, 126
    %v928 = vpop.permute.xlu0 %927
    %929 = vrot.lane.b32.xlu0 %v711, 126
    %v930 = vpop.permute.xlu0 %929
    %931 = vrot.lane.b32.xlu0 %v712, 126
    %v932 = vpop.permute.xlu0 %931
    %933 = vrot.lane.b32.xlu0 %v713, 126
    %v934 = vpop.permute.xlu0 %933
    %935 = vrot.lane.b32.xlu0 %v714, 126
    %v936 = vpop.permute.xlu0 %935
    %937 = vrot.lane.b32.xlu0 %v715, 126
    %v938 = vpop.permute.xlu0 %937
    %939 = vrot.lane.b32.xlu0 %v716, 126
    %v940 = vpop.permute.xlu0 %939
    %941 = vrot.lane.b32.xlu0 %v717, 126
    %v942 = vpop.permute.xlu0 %941
    %943 = vrot.lane.b32.xlu0 %v718, 126
    %v944 = vpop.permute.xlu0 %943
    %945 = vrot.lane.b32.xlu0 %v719, 126
    %v946 = vpop.permute.xlu0 %945
    %947 = vrot.lane.b32.xlu0 %v720, 126
    %v948 = vpop.permute.xlu0 %947
    %949 = vrot.lane.b32.xlu0 %v721, 126
    %v950 = vpop.permute.xlu0 %949
    %951 = vrot.lane.b32.xlu0 %v722, 126
    %v952 = vpop.permute.xlu0 %951
    %953 = vrot.lane.b32.xlu0 %v723, 126
    %v954 = vpop.permute.xlu0 %953
    %955 = vrot.lane.b32.xlu0 %v724, 126
    %v956 = vpop.permute.xlu0 %955
    %957 = vrot.lane.b32.xlu0 %v725, 126
    %v958 = vpop.permute.xlu0 %957
    %959 = vrot.lane.b32.xlu0 %v726, 126
    %v960 = vpop.permute.xlu0 %959
    %961 = vrot.lane.b32.xlu0 %v727, 126
    %v962 = vpop.permute.xlu0 %961
    %963 = vrot.lane.b32.xlu0 %v728, 126
    %v964 = vpop.permute.xlu0 %963
    %965 = vrot.lane.b32.xlu0 %v729, 126
    %v966 = vpop.permute.xlu0 %965
    %967 = vrot.lane.b32.xlu0 %v730, 126
    %v968 = vpop.permute.xlu0 %967
    %969 = vrot.lane.b32.xlu0 %v731, 126
    %v970 = vpop.permute.xlu0 %969
    %971 = vrot.lane.b32.xlu0 %v732, 126
    %v972 = vpop.permute.xlu0 %971
    %vm1053 = vcmask 7168
    %1054 = vst.msk [vmem:[#allocation2 + $0x1] sm:$0xff] %vm1053, %v814
    %1055 = vst.msk [vmem:[#allocation2 + $0x9] sm:$0xff] %vm1053, %v816
    %1056 = vst.msk [vmem:[#allocation2 + $0x19] sm:$0xff] %vm1053, %v818
    %1057 = vst.msk [vmem:[#allocation2 + $0x21] sm:$0xff] %vm1053, %v820
    %1058 = vst.msk [vmem:[#allocation2 + $0x31] sm:$0xff] %vm1053, %v822
    %1059 = vst.msk [vmem:[#allocation2 + $0x39] sm:$0xff] %vm1053, %v824
    %1060 = vst.msk [vmem:[#allocation2 + $0x49] sm:$0xff] %vm1053, %v826
    %1061 = vst.msk [vmem:[#allocation2 + $0x51] sm:$0xff] %vm1053, %v828
    %1062 = vst.msk [vmem:[#allocation2 + $0x61] sm:$0xff] %vm1053, %v830
    %1063 = vst.msk [vmem:[#allocation2 + $0x69] sm:$0xff] %vm1053, %v832
    %1064 = vst.msk [vmem:[#allocation2 + $0x79] sm:$0xff] %vm1053, %v834
    %1065 = vst.msk [vmem:[#allocation2 + $0x81] sm:$0xff] %vm1053, %v836
    %1066 = vst.msk [vmem:[#allocation2 + $0x91] sm:$0xff] %vm1053, %v838
    %1067 = vst.msk [vmem:[#allocation2 + $0x99] sm:$0xff] %vm1053, %v840
    %1068 = vst.msk [vmem:[#allocation2 + $0xa9] sm:$0xff] %vm1053, %v842
    %1069 = vst.msk [vmem:[#allocation2 + $0xb1] sm:$0xff] %vm1053, %v844
    %1070 = vst.msk [vmem:[#allocation2 + $0xc1] sm:$0xff] %vm1053, %v846
    %1071 = vst.msk [vmem:[#allocation2 + $0xc9] sm:$0xff] %vm1053, %v848
    %1072 = vst.msk [vmem:[#allocation2 + $0xd9] sm:$0xff] %vm1053, %v850
    %1073 = vst.msk [vmem:[#allocation2 + $0xe1] sm:$0xff] %vm1053, %v852
    %1074 = vst.msk [vmem:[#allocation2 + $0xf1] sm:$0xff] %vm1053, %v854
    %1075 = vst.msk [vmem:[#allocation2 + $0xf9] sm:$0xff] %vm1053, %v856
    %1076 = vst.msk [vmem:[#allocation2 + $0x109] sm:$0xff] %vm1053, %v858
    %1077 = vst.msk [vmem:[#allocation2 + $0x111] sm:$0xff] %vm1053, %v860
    %1078 = vst.msk [vmem:[#allocation2 + $0x121] sm:$0xff] %vm1053, %v862
    %1079 = vst.msk [vmem:[#allocation2 + $0x129] sm:$0xff] %vm1053, %v864
    %1080 = vst.msk [vmem:[#allocation2 + $0x139] sm:$0xff] %vm1053, %v866
    %1081 = vst.msk [vmem:[#allocation2 + $0x141] sm:$0xff] %vm1053, %v868
    %1082 = vst.msk [vmem:[#allocation2 + $0x151] sm:$0xff] %vm1053, %v870
    %1083 = vst.msk [vmem:[#allocation2 + $0x159] sm:$0xff] %vm1053, %v872
    %1084 = vst.msk [vmem:[#allocation2 + $0x169] sm:$0xff] %vm1053, %v874
    %1085 = vst.msk [vmem:[#allocation2 + $0x171] sm:$0xff] %vm1053, %v876
    %1086 = vst.msk [vmem:[#allocation2 + $0x181] sm:$0xff] %vm1053, %v878
    %1087 = vst.msk [vmem:[#allocation2 + $0x189] sm:$0xff] %vm1053, %v880
    %1088 = vst.msk [vmem:[#allocation2 + $0x199] sm:$0xff] %vm1053, %v882
    %1089 = vst.msk [vmem:[#allocation2 + $0x1a1] sm:$0xff] %vm1053, %v884
    %1090 = vst.msk [vmem:[#allocation2 + $0x1b1] sm:$0xff] %vm1053, %v886
    %1091 = vst.msk [vmem:[#allocation2 + $0x1b9] sm:$0xff] %vm1053, %v888
    %1092 = vst.msk [vmem:[#allocation2 + $0x1c9] sm:$0xff] %vm1053, %v890
    %1093 = vst.msk [vmem:[#allocation2 + $0x1d1] sm:$0xff] %vm1053, %v892
    %1094 = vst.msk [vmem:[#allocation2 + $0x1e1] sm:$0xff] %vm1053, %v894
    %1095 = vst.msk [vmem:[#allocation2 + $0x1e9] sm:$0xff] %vm1053, %v896
    %1096 = vst.msk [vmem:[#allocation2 + $0x1f9] sm:$0xff] %vm1053, %v898
    %1097 = vst.msk [vmem:[#allocation2 + $0x201] sm:$0xff] %vm1053, %v900
    %1098 = vst.msk [vmem:[#allocation2 + $0x211] sm:$0xff] %vm1053, %v902
    %1099 = vst.msk [vmem:[#allocation2 + $0x219] sm:$0xff] %vm1053, %v904
    %1100 = vst.msk [vmem:[#allocation2 + $0x229] sm:$0xff] %vm1053, %v906
    %1101 = vst.msk [vmem:[#allocation2 + $0x231] sm:$0xff] %vm1053, %v908
    %1102 = vst.msk [vmem:[#allocation2 + $0x241] sm:$0xff] %vm1053, %v910
    %1103 = vst.msk [vmem:[#allocation2 + $0x249] sm:$0xff] %vm1053, %v912
    %1104 = vst.msk [vmem:[#allocation2 + $0x259] sm:$0xff] %vm1053, %v914
    %1105 = vst.msk [vmem:[#allocation2 + $0x261] sm:$0xff] %vm1053, %v916
    %1106 = vst.msk [vmem:[#allocation2 + $0x271] sm:$0xff] %vm1053, %v918
    %1107 = vst.msk [vmem:[#allocation2 + $0x279] sm:$0xff] %vm1053, %v920
    %1108 = vst.msk [vmem:[#allocation2 + $0x289] sm:$0xff] %vm1053, %v922
    %1109 = vst.msk [vmem:[#allocation2 + $0x291] sm:$0xff] %vm1053, %v924
    %1110 = vst.msk [vmem:[#allocation2 + $0x2a1] sm:$0xff] %vm1053, %v926
    %1111 = vst.msk [vmem:[#allocation2 + $0x2a9] sm:$0xff] %vm1053, %v928
    %1112 = vst.msk [vmem:[#allocation2 + $0x2b9] sm:$0xff] %vm1053, %v930
    %1113 = vst.msk [vmem:[#allocation2 + $0x2c1] sm:$0xff] %vm1053, %v932
    %1114 = vst.msk [vmem:[#allocation2 + $0x2d1] sm:$0xff] %vm1053, %v934
    %1115 = vst.msk [vmem:[#allocation2 + $0x2d9] sm:$0xff] %vm1053, %v936
    %1116 = vst.msk [vmem:[#allocation2 + $0x2e9] sm:$0xff] %vm1053, %v938
    %1117 = vst.msk [vmem:[#allocation2 + $0x2f1] sm:$0xff] %vm1053, %v940
    %1118 = vst.msk [vmem:[#allocation2 + $0x301] sm:$0xff] %vm1053, %v942
    %1119 = vst.msk [vmem:[#allocation2 + $0x309] sm:$0xff] %vm1053, %v944
    %1120 = vst.msk [vmem:[#allocation2 + $0x319] sm:$0xff] %vm1053, %v946
    %1121 = vst.msk [vmem:[#allocation2 + $0x321] sm:$0xff] %vm1053, %v948
    %1122 = vst.msk [vmem:[#allocation2 + $0x331] sm:$0xff] %vm1053, %v950
    %1123 = vst.msk [vmem:[#allocation2 + $0x339] sm:$0xff] %vm1053, %v952
    %1124 = vst.msk [vmem:[#allocation2 + $0x349] sm:$0xff] %vm1053, %v954
    %1125 = vst.msk [vmem:[#allocation2 + $0x351] sm:$0xff] %vm1053, %v956
    %1126 = vst.msk [vmem:[#allocation2 + $0x361] sm:$0xff] %vm1053, %v958
    %1127 = vst.msk [vmem:[#allocation2 + $0x369] sm:$0xff] %vm1053, %v960
    %1128 = vst.msk [vmem:[#allocation2 + $0x379] sm:$0xff] %vm1053, %v962
    %1129 = vst.msk [vmem:[#allocation2 + $0x381] sm:$0xff] %vm1053, %v964
    %1130 = vst.msk [vmem:[#allocation2 + $0x391] sm:$0xff] %vm1053, %v966
    %1131 = vst.msk [vmem:[#allocation2 + $0x399] sm:$0xff] %vm1053, %v968
    %1132 = vst.msk [vmem:[#allocation2 + $0x3a9] sm:$0xff] %vm1053, %v970
    %1133 = vst.msk [vmem:[#allocation2 + $0x3b1] sm:$0xff] %vm1053, %v972
    %v1134 = vld [vmem:[#allocation2 + $0x1] sm:$0xff]
    %v1135 = vld [vmem:[#allocation2 + $0x9] sm:$0xff]
    %v1136 = vld [vmem:[#allocation2 + $0x19] sm:$0xff]
    %v1137 = vld [vmem:[#allocation2 + $0x21] sm:$0xff]
    %v1138 = vld [vmem:[#allocation2 + $0x31] sm:$0xff]
    %v1139 = vld [vmem:[#allocation2 + $0x39] sm:$0xff]
    %v1140 = vld [vmem:[#allocation2 + $0x49] sm:$0xff]
    %v1141 = vld [vmem:[#allocation2 + $0x51] sm:$0xff]
    %v1142 = vld [vmem:[#allocation2 + $0x61] sm:$0xff]
    %v1143 = vld [vmem:[#allocation2 + $0x69] sm:$0xff]
    %v1144 = vld [vmem:[#allocation2 + $0x79] sm:$0xff]
    %v1145 = vld [vmem:[#allocation2 + $0x81] sm:$0xff]
    %v1146 = vld [vmem:[#allocation2 + $0x91] sm:$0xff]
    %v1147 = vld [vmem:[#allocation2 + $0x99] sm:$0xff]
    %v1148 = vld [vmem:[#allocation2 + $0xa9] sm:$0xff]
    %v1149 = vld [vmem:[#allocation2 + $0xb1] sm:$0xff]
    %v1150 = vld [vmem:[#allocation2 + $0xc1] sm:$0xff]
    %v1151 = vld [vmem:[#allocation2 + $0xc9] sm:$0xff]
    %v1152 = vld [vmem:[#allocation2 + $0xd9] sm:$0xff]
    %v1153 = vld [vmem:[#allocation2 + $0xe1] sm:$0xff]
    %v1154 = vld [vmem:[#allocation2 + $0xf1] sm:$0xff]
    %v1155 = vld [vmem:[#allocation2 + $0xf9] sm:$0xff]
    %v1156 = vld [vmem:[#allocation2 + $0x109] sm:$0xff]
    %v1157 = vld [vmem:[#allocation2 + $0x111] sm:$0xff]
    %v1158 = vld [vmem:[#allocation2 + $0x121] sm:$0xff]
    %v1159 = vld [vmem:[#allocation2 + $0x129] sm:$0xff]
    %v1160 = vld [vmem:[#allocation2 + $0x139] sm:$0xff]
    %v1161 = vld [vmem:[#allocation2 + $0x141] sm:$0xff]
    %v1162 = vld [vmem:[#allocation2 + $0x151] sm:$0xff]
    %v1163 = vld [vmem:[#allocation2 + $0x159] sm:$0xff]
    %v1164 = vld [vmem:[#allocation2 + $0x169] sm:$0xff]
    %v1165 = vld [vmem:[#allocation2 + $0x171] sm:$0xff]
    %v1166 = vld [vmem:[#allocation2 + $0x181] sm:$0xff]
    %v1167 = vld [vmem:[#allocation2 + $0x189] sm:$0xff]
    %v1168 = vld [vmem:[#allocation2 + $0x199] sm:$0xff]
    %v1169 = vld [vmem:[#allocation2 + $0x1a1] sm:$0xff]
    %v1170 = vld [vmem:[#allocation2 + $0x1b1] sm:$0xff]
    %v1171 = vld [vmem:[#allocation2 + $0x1b9] sm:$0xff]
    %v1172 = vld [vmem:[#allocation2 + $0x1c9] sm:$0xff]
    %v1173 = vld [vmem:[#allocation2 + $0x1d1] sm:$0xff]
    %v1174 = vld [vmem:[#allocation2 + $0x1e1] sm:$0xff]
    %v1175 = vld [vmem:[#allocation2 + $0x1e9] sm:$0xff]
    %v1176 = vld [vmem:[#allocation2 + $0x1f9] sm:$0xff]
    %v1177 = vld [vmem:[#allocation2 + $0x201] sm:$0xff]
    %v1178 = vld [vmem:[#allocation2 + $0x211] sm:$0xff]
    %v1179 = vld [vmem:[#allocation2 + $0x219] sm:$0xff]
    %v1180 = vld [vmem:[#allocation2 + $0x229] sm:$0xff]
    %v1181 = vld [vmem:[#allocation2 + $0x231] sm:$0xff]
    %v1182 = vld [vmem:[#allocation2 + $0x241] sm:$0xff]
    %v1183 = vld [vmem:[#allocation2 + $0x249] sm:$0xff]
    %v1184 = vld [vmem:[#allocation2 + $0x259] sm:$0xff]
    %v1185 = vld [vmem:[#allocation2 + $0x261] sm:$0xff]
    %v1186 = vld [vmem:[#allocation2 + $0x271] sm:$0xff]
    %v1187 = vld [vmem:[#allocation2 + $0x279] sm:$0xff]
    %v1188 = vld [vmem:[#allocation2 + $0x289] sm:$0xff]
    %v1189 = vld [vmem:[#allocation2 + $0x291] sm:$0xff]
    %v1190 = vld [vmem:[#allocation2 + $0x2a1] sm:$0xff]
    %v1191 = vld [vmem:[#allocation2 + $0x2a9] sm:$0xff]
    %v1192 = vld [vmem:[#allocation2 + $0x2b9] sm:$0xff]
    %v1193 = vld [vmem:[#allocation2 + $0x2c1] sm:$0xff]
    %v1194 = vld [vmem:[#allocation2 + $0x2d1] sm:$0xff]
    %v1195 = vld [vmem:[#allocation2 + $0x2d9] sm:$0xff]
    %v1196 = vld [vmem:[#allocation2 + $0x2e9] sm:$0xff]
    %v1197 = vld [vmem:[#allocation2 + $0x2f1] sm:$0xff]
    %v1198 = vld [vmem:[#allocation2 + $0x301] sm:$0xff]
    %v1199 = vld [vmem:[#allocation2 + $0x309] sm:$0xff]
    %v1200 = vld [vmem:[#allocation2 + $0x319] sm:$0xff]
    %v1201 = vld [vmem:[#allocation2 + $0x321] sm:$0xff]
    %v1202 = vld [vmem:[#allocation2 + $0x331] sm:$0xff]
    %v1203 = vld [vmem:[#allocation2 + $0x339] sm:$0xff]
    %v1204 = vld [vmem:[#allocation2 + $0x349] sm:$0xff]
    %v1205 = vld [vmem:[#allocation2 + $0x351] sm:$0xff]
    %v1206 = vld [vmem:[#allocation2 + $0x361] sm:$0xff]
    %v1207 = vld [vmem:[#allocation2 + $0x369] sm:$0xff]
    %v1208 = vld [vmem:[#allocation2 + $0x379] sm:$0xff]
    %v1209 = vld [vmem:[#allocation2 + $0x381] sm:$0xff]
    %v1210 = vld [vmem:[#allocation2 + $0x391] sm:$0xff]
    %v1211 = vld [vmem:[#allocation2 + $0x399] sm:$0xff]
    %v1212 = vld [vmem:[#allocation2 + $0x3a9] sm:$0xff]
    %v1213 = vld [vmem:[#allocation2 + $0x3b1] sm:$0xff]
    %1294 = vrot.lane.b32.xlu0 %v1134, 2
    %v1295 = vpop.permute.xlu0 %1294
    %1296 = vrot.lane.b32.xlu0 %v1135, 2
    %v1297 = vpop.permute.xlu0 %1296
    %1298 = vrot.lane.b32.xlu0 %v1136, 2
    %v1299 = vpop.permute.xlu0 %1298
    %1300 = vrot.lane.b32.xlu0 %v1137, 2
    %v1301 = vpop.permute.xlu0 %1300
    %1302 = vrot.lane.b32.xlu0 %v1138, 2
    %v1303 = vpop.permute.xlu0 %1302
    %1304 = vrot.lane.b32.xlu0 %v1139, 2
    %v1305 = vpop.permute.xlu0 %1304
    %1306 = vrot.lane.b32.xlu0 %v1140, 2
    %v1307 = vpop.permute.xlu0 %1306
    %1308 = vrot.lane.b32.xlu0 %v1141, 2
    %v1309 = vpop.permute.xlu0 %1308
    %1310 = vrot.lane.b32.xlu0 %v1142, 2
    %v1311 = vpop.permute.xlu0 %1310
    %1312 = vrot.lane.b32.xlu0 %v1143, 2
    %v1313 = vpop.permute.xlu0 %1312
    %1314 = vrot.lane.b32.xlu0 %v1144, 2
    %v1315 = vpop.permute.xlu0 %1314
    %1316 = vrot.lane.b32.xlu0 %v1145, 2
    %v1317 = vpop.permute.xlu0 %1316
    %1318 = vrot.lane.b32.xlu0 %v1146, 2
    %v1319 = vpop.permute.xlu0 %1318
    %1320 = vrot.lane.b32.xlu0 %v1147, 2
    %v1321 = vpop.permute.xlu0 %1320
    %1322 = vrot.lane.b32.xlu0 %v1148, 2
    %v1323 = vpop.permute.xlu0 %1322
    %1324 = vrot.lane.b32.xlu0 %v1149, 2
    %v1325 = vpop.permute.xlu0 %1324
    %1326 = vrot.lane.b32.xlu0 %v1150, 2
    %v1327 = vpop.permute.xlu0 %1326
    %1328 = vrot.lane.b32.xlu0 %v1151, 2
    %v1329 = vpop.permute.xlu0 %1328
    %1330 = vrot.lane.b32.xlu0 %v1152, 2
    %v1331 = vpop.permute.xlu0 %1330
    %1332 = vrot.lane.b32.xlu0 %v1153, 2
    %v1333 = vpop.permute.xlu0 %1332
    %1334 = vrot.lane.b32.xlu0 %v1154, 2
    %v1335 = vpop.permute.xlu0 %1334
    %1336 = vrot.lane.b32.xlu0 %v1155, 2
    %v1337 = vpop.permute.xlu0 %1336
    %1338 = vrot.lane.b32.xlu0 %v1156, 2
    %v1339 = vpop.permute.xlu0 %1338
    %1340 = vrot.lane.b32.xlu0 %v1157, 2
    %v1341 = vpop.permute.xlu0 %1340
    %1342 = vrot.lane.b32.xlu0 %v1158, 2
    %v1343 = vpop.permute.xlu0 %1342
    %1344 = vrot.lane.b32.xlu0 %v1159, 2
    %v1345 = vpop.permute.xlu0 %1344
    %1346 = vrot.lane.b32.xlu0 %v1160, 2
    %v1347 = vpop.permute.xlu0 %1346
    %1348 = vrot.lane.b32.xlu0 %v1161, 2
    %v1349 = vpop.permute.xlu0 %1348
    %1350 = vrot.lane.b32.xlu0 %v1162, 2
    %v1351 = vpop.permute.xlu0 %1350
    %1352 = vrot.lane.b32.xlu0 %v1163, 2
    %v1353 = vpop.permute.xlu0 %1352
    %1354 = vrot.lane.b32.xlu0 %v1164, 2
    %v1355 = vpop.permute.xlu0 %1354
    %1356 = vrot.lane.b32.xlu0 %v1165, 2
    %v1357 = vpop.permute.xlu0 %1356
    %1358 = vrot.lane.b32.xlu0 %v1166, 2
    %v1359 = vpop.permute.xlu0 %1358
    %1360 = vrot.lane.b32.xlu0 %v1167, 2
    %v1361 = vpop.permute.xlu0 %1360
    %1362 = vrot.lane.b32.xlu0 %v1168, 2
    %v1363 = vpop.permute.xlu0 %1362
    %1364 = vrot.lane.b32.xlu0 %v1169, 2
    %v1365 = vpop.permute.xlu0 %1364
    %1366 = vrot.lane.b32.xlu0 %v1170, 2
    %v1367 = vpop.permute.xlu0 %1366
    %1368 = vrot.lane.b32.xlu0 %v1171, 2
    %v1369 = vpop.permute.xlu0 %1368
    %1370 = vrot.lane.b32.xlu0 %v1172, 2
    %v1371 = vpop.permute.xlu0 %1370
    %1372 = vrot.lane.b32.xlu0 %v1173, 2
    %v1373 = vpop.permute.xlu0 %1372
    %1374 = vrot.lane.b32.xlu0 %v1174, 2
    %v1375 = vpop.permute.xlu0 %1374
    %1376 = vrot.lane.b32.xlu0 %v1175, 2
    %v1377 = vpop.permute.xlu0 %1376
    %1378 = vrot.lane.b32.xlu0 %v1176, 2
    %v1379 = vpop.permute.xlu0 %1378
    %1380 = vrot.lane.b32.xlu0 %v1177, 2
    %v1381 = vpop.permute.xlu0 %1380
    %1382 = vrot.lane.b32.xlu0 %v1178, 2
    %v1383 = vpop.permute.xlu0 %1382
    %1384 = vrot.lane.b32.xlu0 %v1179, 2
    %v1385 = vpop.permute.xlu0 %1384
    %1386 = vrot.lane.b32.xlu0 %v1180, 2
    %v1387 = vpop.permute.xlu0 %1386
    %1388 = vrot.lane.b32.xlu0 %v1181, 2
    %v1389 = vpop.permute.xlu0 %1388
    %1390 = vrot.lane.b32.xlu0 %v1182, 2
    %v1391 = vpop.permute.xlu0 %1390
    %1392 = vrot.lane.b32.xlu0 %v1183, 2
    %v1393 = vpop.permute.xlu0 %1392
    %1394 = vrot.lane.b32.xlu0 %v1184, 2
    %v1395 = vpop.permute.xlu0 %1394
    %1396 = vrot.lane.b32.xlu0 %v1185, 2
    %v1397 = vpop.permute.xlu0 %1396
    %1398 = vrot.lane.b32.xlu0 %v1186, 2
    %v1399 = vpop.permute.xlu0 %1398
    %1400 = vrot.lane.b32.xlu0 %v1187, 2
    %v1401 = vpop.permute.xlu0 %1400
    %1402 = vrot.lane.b32.xlu0 %v1188, 2
    %v1403 = vpop.permute.xlu0 %1402
    %1404 = vrot.lane.b32.xlu0 %v1189, 2
    %v1405 = vpop.permute.xlu0 %1404
    %1406 = vrot.lane.b32.xlu0 %v1190, 2
    %v1407 = vpop.permute.xlu0 %1406
    %1408 = vrot.lane.b32.xlu0 %v1191, 2
    %v1409 = vpop.permute.xlu0 %1408
    %1410 = vrot.lane.b32.xlu0 %v1192, 2
    %v1411 = vpop.permute.xlu0 %1410
    %1412 = vrot.lane.b32.xlu0 %v1193, 2
    %v1413 = vpop.permute.xlu0 %1412
    %1414 = vrot.lane.b32.xlu0 %v1194, 2
    %v1415 = vpop.permute.xlu0 %1414
    %1416 = vrot.lane.b32.xlu0 %v1195, 2
    %v1417 = vpop.permute.xlu0 %1416
    %1418 = vrot.lane.b32.xlu0 %v1196, 2
    %v1419 = vpop.permute.xlu0 %1418
    %1420 = vrot.lane.b32.xlu0 %v1197, 2
    %v1421 = vpop.permute.xlu0 %1420
    %1422 = vrot.lane.b32.xlu0 %v1198, 2
    %v1423 = vpop.permute.xlu0 %1422
    %1424 = vrot.lane.b32.xlu0 %v1199, 2
    %v1425 = vpop.permute.xlu0 %1424
    %1426 = vrot.lane.b32.xlu0 %v1200, 2
    %v1427 = vpop.permute.xlu0 %1426
    %1428 = vrot.lane.b32.xlu0 %v1201, 2
    %v1429 = vpop.permute.xlu0 %1428
    %1430 = vrot.lane.b32.xlu0 %v1202, 2
    %v1431 = vpop.permute.xlu0 %1430
    %1432 = vrot.lane.b32.xlu0 %v1203, 2
    %v1433 = vpop.permute.xlu0 %1432
    %1434 = vrot.lane.b32.xlu0 %v1204, 2
    %v1435 = vpop.permute.xlu0 %1434
    %1436 = vrot.lane.b32.xlu0 %v1205, 2
    %v1437 = vpop.permute.xlu0 %1436
    %1438 = vrot.lane.b32.xlu0 %v1206, 2
    %v1439 = vpop.permute.xlu0 %1438
    %1440 = vrot.lane.b32.xlu0 %v1207, 2
    %v1441 = vpop.permute.xlu0 %1440
    %1442 = vrot.lane.b32.xlu0 %v1208, 2
    %v1443 = vpop.permute.xlu0 %1442
    %1444 = vrot.lane.b32.xlu0 %v1209, 2
    %v1445 = vpop.permute.xlu0 %1444
    %1446 = vrot.lane.b32.xlu0 %v1210, 2
    %v1447 = vpop.permute.xlu0 %1446
    %1448 = vrot.lane.b32.xlu0 %v1211, 2
    %v1449 = vpop.permute.xlu0 %1448
    %1450 = vrot.lane.b32.xlu0 %v1212, 2
    %v1451 = vpop.permute.xlu0 %1450
    %1452 = vrot.lane.b32.xlu0 %v1213, 2
    %v1453 = vpop.permute.xlu0 %1452
    %vm1534 = vcmask 146568
    %1535 = vst.msk [vmem:[#allocation2 + $0x1] sm:$0xff] %vm1534, %v1295
    %1536 = vst.msk [vmem:[#allocation2 + $0x9] sm:$0xff] %vm1534, %v1297
    %1537 = vst.msk [vmem:[#allocation2 + $0x19] sm:$0xff] %vm1534, %v1299
    %1538 = vst.msk [vmem:[#allocation2 + $0x21] sm:$0xff] %vm1534, %v1301
    %1539 = vst.msk [vmem:[#allocation2 + $0x31] sm:$0xff] %vm1534, %v1303
    %1540 = vst.msk [vmem:[#allocation2 + $0x39] sm:$0xff] %vm1534, %v1305
    %1541 = vst.msk [vmem:[#allocation2 + $0x49] sm:$0xff] %vm1534, %v1307
    %1542 = vst.msk [vmem:[#allocation2 + $0x51] sm:$0xff] %vm1534, %v1309
    %1543 = vst.msk [vmem:[#allocation2 + $0x61] sm:$0xff] %vm1534, %v1311
    %1544 = vst.msk [vmem:[#allocation2 + $0x69] sm:$0xff] %vm1534, %v1313
    %1545 = vst.msk [vmem:[#allocation2 + $0x79] sm:$0xff] %vm1534, %v1315
    %1546 = vst.msk [vmem:[#allocation2 + $0x81] sm:$0xff] %vm1534, %v1317
    %1547 = vst.msk [vmem:[#allocation2 + $0x91] sm:$0xff] %vm1534, %v1319
    %1548 = vst.msk [vmem:[#allocation2 + $0x99] sm:$0xff] %vm1534, %v1321
    %1549 = vst.msk [vmem:[#allocation2 + $0xa9] sm:$0xff] %vm1534, %v1323
    %1550 = vst.msk [vmem:[#allocation2 + $0xb1] sm:$0xff] %vm1534, %v1325
    %1551 = vst.msk [vmem:[#allocation2 + $0xc1] sm:$0xff] %vm1534, %v1327
    %1552 = vst.msk [vmem:[#allocation2 + $0xc9] sm:$0xff] %vm1534, %v1329
    %1553 = vst.msk [vmem:[#allocation2 + $0xd9] sm:$0xff] %vm1534, %v1331
    %1554 = vst.msk [vmem:[#allocation2 + $0xe1] sm:$0xff] %vm1534, %v1333
    %1555 = vst.msk [vmem:[#allocation2 + $0xf1] sm:$0xff] %vm1534, %v1335
    %1556 = vst.msk [vmem:[#allocation2 + $0xf9] sm:$0xff] %vm1534, %v1337
    %1557 = vst.msk [vmem:[#allocation2 + $0x109] sm:$0xff] %vm1534, %v1339
    %1558 = vst.msk [vmem:[#allocation2 + $0x111] sm:$0xff] %vm1534, %v1341
    %1559 = vst.msk [vmem:[#allocation2 + $0x121] sm:$0xff] %vm1534, %v1343
    %1560 = vst.msk [vmem:[#allocation2 + $0x129] sm:$0xff] %vm1534, %v1345
    %1561 = vst.msk [vmem:[#allocation2 + $0x139] sm:$0xff] %vm1534, %v1347
    %1562 = vst.msk [vmem:[#allocation2 + $0x141] sm:$0xff] %vm1534, %v1349
    %1563 = vst.msk [vmem:[#allocation2 + $0x151] sm:$0xff] %vm1534, %v1351
    %1564 = vst.msk [vmem:[#allocation2 + $0x159] sm:$0xff] %vm1534, %v1353
    %1565 = vst.msk [vmem:[#allocation2 + $0x169] sm:$0xff] %vm1534, %v1355
    %1566 = vst.msk [vmem:[#allocation2 + $0x171] sm:$0xff] %vm1534, %v1357
    %1567 = vst.msk [vmem:[#allocation2 + $0x181] sm:$0xff] %vm1534, %v1359
    %1568 = vst.msk [vmem:[#allocation2 + $0x189] sm:$0xff] %vm1534, %v1361
    %1569 = vst.msk [vmem:[#allocation2 + $0x199] sm:$0xff] %vm1534, %v1363
    %1570 = vst.msk [vmem:[#allocation2 + $0x1a1] sm:$0xff] %vm1534, %v1365
    %1571 = vst.msk [vmem:[#allocation2 + $0x1b1] sm:$0xff] %vm1534, %v1367
    %1572 = vst.msk [vmem:[#allocation2 + $0x1b9] sm:$0xff] %vm1534, %v1369
    %1573 = vst.msk [vmem:[#allocation2 + $0x1c9] sm:$0xff] %vm1534, %v1371
    %1574 = vst.msk [vmem:[#allocation2 + $0x1d1] sm:$0xff] %vm1534, %v1373
    %1575 = vst.msk [vmem:[#allocation2 + $0x1e1] sm:$0xff] %vm1534, %v1375
    %1576 = vst.msk [vmem:[#allocation2 + $0x1e9] sm:$0xff] %vm1534, %v1377
    %1577 = vst.msk [vmem:[#allocation2 + $0x1f9] sm:$0xff] %vm1534, %v1379
    %1578 = vst.msk [vmem:[#allocation2 + $0x201] sm:$0xff] %vm1534, %v1381
    %1579 = vst.msk [vmem:[#allocation2 + $0x211] sm:$0xff] %vm1534, %v1383
    %1580 = vst.msk [vmem:[#allocation2 + $0x219] sm:$0xff] %vm1534, %v1385
    %1581 = vst.msk [vmem:[#allocation2 + $0x229] sm:$0xff] %vm1534, %v1387
    %1582 = vst.msk [vmem:[#allocation2 + $0x231] sm:$0xff] %vm1534, %v1389
    %1583 = vst.msk [vmem:[#allocation2 + $0x241] sm:$0xff] %vm1534, %v1391
    %1584 = vst.msk [vmem:[#allocation2 + $0x249] sm:$0xff] %vm1534, %v1393
    %1585 = vst.msk [vmem:[#allocation2 + $0x259] sm:$0xff] %vm1534, %v1395
    %1586 = vst.msk [vmem:[#allocation2 + $0x261] sm:$0xff] %vm1534, %v1397
    %1587 = vst.msk [vmem:[#allocation2 + $0x271] sm:$0xff] %vm1534, %v1399
    %1588 = vst.msk [vmem:[#allocation2 + $0x279] sm:$0xff] %vm1534, %v1401
    %1589 = vst.msk [vmem:[#allocation2 + $0x289] sm:$0xff] %vm1534, %v1403
    %1590 = vst.msk [vmem:[#allocation2 + $0x291] sm:$0xff] %vm1534, %v1405
    %1591 = vst.msk [vmem:[#allocation2 + $0x2a1] sm:$0xff] %vm1534, %v1407
    %1592 = vst.msk [vmem:[#allocation2 + $0x2a9] sm:$0xff] %vm1534, %v1409
    %1593 = vst.msk [vmem:[#allocation2 + $0x2b9] sm:$0xff] %vm1534, %v1411
    %1594 = vst.msk [vmem:[#allocation2 + $0x2c1] sm:$0xff] %vm1534, %v1413
    %1595 = vst.msk [vmem:[#allocation2 + $0x2d1] sm:$0xff] %vm1534, %v1415
    %1596 = vst.msk [vmem:[#allocation2 + $0x2d9] sm:$0xff] %vm1534, %v1417
    %1597 = vst.msk [vmem:[#allocation2 + $0x2e9] sm:$0xff] %vm1534, %v1419
    %1598 = vst.msk [vmem:[#allocation2 + $0x2f1] sm:$0xff] %vm1534, %v1421
    %1599 = vst.msk [vmem:[#allocation2 + $0x301] sm:$0xff] %vm1534, %v1423
    %1600 = vst.msk [vmem:[#allocation2 + $0x309] sm:$0xff] %vm1534, %v1425
    %1601 = vst.msk [vmem:[#allocation2 + $0x319] sm:$0xff] %vm1534, %v1427
    %1602 = vst.msk [vmem:[#allocation2 + $0x321] sm:$0xff] %vm1534, %v1429
    %1603 = vst.msk [vmem:[#allocation2 + $0x331] sm:$0xff] %vm1534, %v1431
    %1604 = vst.msk [vmem:[#allocation2 + $0x339] sm:$0xff] %vm1534, %v1433
    %1605 = vst.msk [vmem:[#allocation2 + $0x349] sm:$0xff] %vm1534, %v1435
    %1606 = vst.msk [vmem:[#allocation2 + $0x351] sm:$0xff] %vm1534, %v1437
    %1607 = vst.msk [vmem:[#allocation2 + $0x361] sm:$0xff] %vm1534, %v1439
    %1608 = vst.msk [vmem:[#allocation2 + $0x369] sm:$0xff] %vm1534, %v1441
    %1609 = vst.msk [vmem:[#allocation2 + $0x379] sm:$0xff] %vm1534, %v1443
    %1610 = vst.msk [vmem:[#allocation2 + $0x381] sm:$0xff] %vm1534, %v1445
    %1611 = vst.msk [vmem:[#allocation2 + $0x391] sm:$0xff] %vm1534, %v1447
    %1612 = vst.msk [vmem:[#allocation2 + $0x399] sm:$0xff] %vm1534, %v1449
    %1613 = vst.msk [vmem:[#allocation2 + $0x3a9] sm:$0xff] %vm1534, %v1451
    %1614 = vst.msk [vmem:[#allocation2 + $0x3b1] sm:$0xff] %vm1534, %v1453
    %v1615 = vld [vmem:[#allocation2 + $0x2] sm:$0x1]
    %v1616 = vld [vmem:[#allocation2 + $0x1a] sm:$0x1]
    %v1617 = vld [vmem:[#allocation2 + $0x32] sm:$0x1]
    %v1618 = vld [vmem:[#allocation2 + $0x4a] sm:$0x1]
    %v1619 = vld [vmem:[#allocation2 + $0x62] sm:$0x1]
    %v1620 = vld [vmem:[#allocation2 + $0x7a] sm:$0x1]
    %v1621 = vld [vmem:[#allocation2 + $0x92] sm:$0x1]
    %v1622 = vld [vmem:[#allocation2 + $0xaa] sm:$0x1]
    %v1623 = vld [vmem:[#allocation2 + $0xc2] sm:$0x1]
    %v1624 = vld [vmem:[#allocation2 + $0xda] sm:$0x1]
    %v1625 = vld [vmem:[#allocation2 + $0xf2] sm:$0x1]
    %v1626 = vld [vmem:[#allocation2 + $0x10a] sm:$0x1]
    %v1627 = vld [vmem:[#allocation2 + $0x122] sm:$0x1]
    %v1628 = vld [vmem:[#allocation2 + $0x13a] sm:$0x1]
    %v1629 = vld [vmem:[#allocation2 + $0x152] sm:$0x1]
    %v1630 = vld [vmem:[#allocation2 + $0x16a] sm:$0x1]
    %v1631 = vld [vmem:[#allocation2 + $0x182] sm:$0x1]
    %v1632 = vld [vmem:[#allocation2 + $0x19a] sm:$0x1]
    %v1633 = vld [vmem:[#allocation2 + $0x1b2] sm:$0x1]
    %v1634 = vld [vmem:[#allocation2 + $0x1ca] sm:$0x1]
    %v1635 = vld [vmem:[#allocation2 + $0x1e2] sm:$0x1]
    %v1636 = vld [vmem:[#allocation2 + $0x1fa] sm:$0x1]
    %v1637 = vld [vmem:[#allocation2 + $0x212] sm:$0x1]
    %v1638 = vld [vmem:[#allocation2 + $0x22a] sm:$0x1]
    %v1639 = vld [vmem:[#allocation2 + $0x242] sm:$0x1]
    %v1640 = vld [vmem:[#allocation2 + $0x25a] sm:$0x1]
    %v1641 = vld [vmem:[#allocation2 + $0x272] sm:$0x1]
    %v1642 = vld [vmem:[#allocation2 + $0x28a] sm:$0x1]
    %v1643 = vld [vmem:[#allocation2 + $0x2a2] sm:$0x1]
    %v1644 = vld [vmem:[#allocation2 + $0x2ba] sm:$0x1]
    %v1645 = vld [vmem:[#allocation2 + $0x2d2] sm:$0x1]
    %v1646 = vld [vmem:[#allocation2 + $0x2ea] sm:$0x1]
    %v1647 = vld [vmem:[#allocation2 + $0x302] sm:$0x1]
    %v1648 = vld [vmem:[#allocation2 + $0x31a] sm:$0x1]
    %v1649 = vld [vmem:[#allocation2 + $0x332] sm:$0x1]
    %v1650 = vld [vmem:[#allocation2 + $0x34a] sm:$0x1]
    %v1651 = vld [vmem:[#allocation2 + $0x362] sm:$0x1]
    %v1652 = vld [vmem:[#allocation2 + $0x37a] sm:$0x1]
    %v1653 = vld [vmem:[#allocation2 + $0x392] sm:$0x1]
    %v1654 = vld [vmem:[#allocation2 + $0x3aa] sm:$0x1]
    %vm1655 = vcmask 139264
    %1656 = vst.msk [vmem:[#allocation2] sm:$0x1] %vm1655, %v1615
    %1657 = vst.msk [vmem:[#allocation2 + $0x18] sm:$0x1] %vm1655, %v1616
    %1658 = vst.msk [vmem:[#allocation2 + $0x30] sm:$0x1] %vm1655, %v1617
    %1659 = vst.msk [vmem:[#allocation2 + $0x48] sm:$0x1] %vm1655, %v1618
    %1660 = vst.msk [vmem:[#allocation2 + $0x60] sm:$0x1] %vm1655, %v1619
    %1661 = vst.msk [vmem:[#allocation2 + $0x78] sm:$0x1] %vm1655, %v1620
    %1662 = vst.msk [vmem:[#allocation2 + $0x90] sm:$0x1] %vm1655, %v1621
    %1663 = vst.msk [vmem:[#allocation2 + $0xa8] sm:$0x1] %vm1655, %v1622
    %1664 = vst.msk [vmem:[#allocation2 + $0xc0] sm:$0x1] %vm1655, %v1623
    %1665 = vst.msk [vmem:[#allocation2 + $0xd8] sm:$0x1] %vm1655, %v1624
    %1666 = vst.msk [vmem:[#allocation2 + $0xf0] sm:$0x1] %vm1655, %v1625
    %1667 = vst.msk [vmem:[#allocation2 + $0x108] sm:$0x1] %vm1655, %v1626
    %1668 = vst.msk [vmem:[#allocation2 + $0x120] sm:$0x1] %vm1655, %v1627
    %1669 = vst.msk [vmem:[#allocation2 + $0x138] sm:$0x1] %vm1655, %v1628
    %1670 = vst.msk [vmem:[#allocation2 + $0x150] sm:$0x1] %vm1655, %v1629
    %1671 = vst.msk [vmem:[#allocation2 + $0x168] sm:$0x1] %vm1655, %v1630
    %1672 = vst.msk [vmem:[#allocation2 + $0x180] sm:$0x1] %vm1655, %v1631
    %1673 = vst.msk [vmem:[#allocation2 + $0x198] sm:$0x1] %vm1655, %v1632
    %1674 = vst.msk [vmem:[#allocation2 + $0x1b0] sm:$0x1] %vm1655, %v1633
    %1675 = vst.msk [vmem:[#allocation2 + $0x1c8] sm:$0x1] %vm1655, %v1634
    %1676 = vst.msk [vmem:[#allocation2 + $0x1e0] sm:$0x1] %vm1655, %v1635
    %1677 = vst.msk [vmem:[#allocation2 + $0x1f8] sm:$0x1] %vm1655, %v1636
    %1678 = vst.msk [vmem:[#allocation2 + $0x210] sm:$0x1] %vm1655, %v1637
    %1679 = vst.msk [vmem:[#allocation2 + $0x228] sm:$0x1] %vm1655, %v1638
    %1680 = vst.msk [vmem:[#allocation2 + $0x240] sm:$0x1] %vm1655, %v1639
    %1681 = vst.msk [vmem:[#allocation2 + $0x258] sm:$0x1] %vm1655, %v1640
    %1682 = vst.msk [vmem:[#allocation2 + $0x270] sm:$0x1] %vm1655, %v1641
    %1683 = vst.msk [vmem:[#allocation2 + $0x288] sm:$0x1] %vm1655, %v1642
    %1684 = vst.msk [vmem:[#allocation2 + $0x2a0] sm:$0x1] %vm1655, %v1643
    %1685 = vst.msk [vmem:[#allocation2 + $0x2b8] sm:$0x1] %vm1655, %v1644
    %1686 = vst.msk [vmem:[#allocation2 + $0x2d0] sm:$0x1] %vm1655, %v1645
    %1687 = vst.msk [vmem:[#allocation2 + $0x2e8] sm:$0x1] %vm1655, %v1646
    %1688 = vst.msk [vmem:[#allocation2 + $0x300] sm:$0x1] %vm1655, %v1647
    %1689 = vst.msk [vmem:[#allocation2 + $0x318] sm:$0x1] %vm1655, %v1648
    %1690 = vst.msk [vmem:[#allocation2 + $0x330] sm:$0x1] %vm1655, %v1649
    %1691 = vst.msk [vmem:[#allocation2 + $0x348] sm:$0x1] %vm1655, %v1650
    %1692 = vst.msk [vmem:[#allocation2 + $0x360] sm:$0x1] %vm1655, %v1651
    %1693 = vst.msk [vmem:[#allocation2 + $0x378] sm:$0x1] %vm1655, %v1652
    %1694 = vst.msk [vmem:[#allocation2 + $0x390] sm:$0x1] %vm1655, %v1653
    %1695 = vst.msk [vmem:[#allocation2 + $0x3a8] sm:$0x1] %vm1655, %v1654
    %v1696 = vld [vmem:[#allocation2 + $0xf] sm:$0x1]
    %v1697 = vld [vmem:[#allocation2 + $0x27] sm:$0x1]
    %v1698 = vld [vmem:[#allocation2 + $0x3f] sm:$0x1]
    %v1699 = vld [vmem:[#allocation2 + $0x57] sm:$0x1]
    %v1700 = vld [vmem:[#allocation2 + $0x6f] sm:$0x1]
    %v1701 = vld [vmem:[#allocation2 + $0x87] sm:$0x1]
    %v1702 = vld [vmem:[#allocation2 + $0x9f] sm:$0x1]
    %v1703 = vld [vmem:[#allocation2 + $0xb7] sm:$0x1]
    %v1704 = vld [vmem:[#allocation2 + $0xcf] sm:$0x1]
    %v1705 = vld [vmem:[#allocation2 + $0xe7] sm:$0x1]
    %v1706 = vld [vmem:[#allocation2 + $0xff] sm:$0x1]
    %v1707 = vld [vmem:[#allocation2 + $0x117] sm:$0x1]
    %v1708 = vld [vmem:[#allocation2 + $0x12f] sm:$0x1]
    %v1709 = vld [vmem:[#allocation2 + $0x147] sm:$0x1]
    %v1710 = vld [vmem:[#allocation2 + $0x15f] sm:$0x1]
    %v1711 = vld [vmem:[#allocation2 + $0x177] sm:$0x1]
    %v1712 = vld [vmem:[#allocation2 + $0x18f] sm:$0x1]
    %v1713 = vld [vmem:[#allocation2 + $0x1a7] sm:$0x1]
    %v1714 = vld [vmem:[#allocation2 + $0x1bf] sm:$0x1]
    %v1715 = vld [vmem:[#allocation2 + $0x1d7] sm:$0x1]
    %v1716 = vld [vmem:[#allocation2 + $0x1ef] sm:$0x1]
    %v1717 = vld [vmem:[#allocation2 + $0x207] sm:$0x1]
    %v1718 = vld [vmem:[#allocation2 + $0x21f] sm:$0x1]
    %v1719 = vld [vmem:[#allocation2 + $0x237] sm:$0x1]
    %v1720 = vld [vmem:[#allocation2 + $0x24f] sm:$0x1]
    %v1721 = vld [vmem:[#allocation2 + $0x267] sm:$0x1]
    %v1722 = vld [vmem:[#allocation2 + $0x27f] sm:$0x1]
    %v1723 = vld [vmem:[#allocation2 + $0x297] sm:$0x1]
    %v1724 = vld [vmem:[#allocation2 + $0x2af] sm:$0x1]
    %v1725 = vld [vmem:[#allocation2 + $0x2c7] sm:$0x1]
    %v1726 = vld [vmem:[#allocation2 + $0x2df] sm:$0x1]
    %v1727 = vld [vmem:[#allocation2 + $0x2f7] sm:$0x1]
    %v1728 = vld [vmem:[#allocation2 + $0x30f] sm:$0x1]
    %v1729 = vld [vmem:[#allocation2 + $0x327] sm:$0x1]
    %v1730 = vld [vmem:[#allocation2 + $0x33f] sm:$0x1]
    %v1731 = vld [vmem:[#allocation2 + $0x357] sm:$0x1]
    %v1732 = vld [vmem:[#allocation2 + $0x36f] sm:$0x1]
    %v1733 = vld [vmem:[#allocation2 + $0x387] sm:$0x1]
    %v1734 = vld [vmem:[#allocation2 + $0x39f] sm:$0x1]
    %v1735 = vld [vmem:[#allocation2 + $0x3b7] sm:$0x1]
    %1736 = vst.msk [vmem:[#allocation2 + $0x11] sm:$0x1] %vm1655, %v1696
    %1737 = vst.msk [vmem:[#allocation2 + $0x29] sm:$0x1] %vm1655, %v1697
    %1738 = vst.msk [vmem:[#allocation2 + $0x41] sm:$0x1] %vm1655, %v1698
    %1739 = vst.msk [vmem:[#allocation2 + $0x59] sm:$0x1] %vm1655, %v1699
    %1740 = vst.msk [vmem:[#allocation2 + $0x71] sm:$0x1] %vm1655, %v1700
    %1741 = vst.msk [vmem:[#allocation2 + $0x89] sm:$0x1] %vm1655, %v1701
    %1742 = vst.msk [vmem:[#allocation2 + $0xa1] sm:$0x1] %vm1655, %v1702
    %1743 = vst.msk [vmem:[#allocation2 + $0xb9] sm:$0x1] %vm1655, %v1703
    %1744 = vst.msk [vmem:[#allocation2 + $0xd1] sm:$0x1] %vm1655, %v1704
    %1745 = vst.msk [vmem:[#allocation2 + $0xe9] sm:$0x1] %vm1655, %v1705
    %1746 = vst.msk [vmem:[#allocation2 + $0x101] sm:$0x1] %vm1655, %v1706
    %1747 = vst.msk [vmem:[#allocation2 + $0x119] sm:$0x1] %vm1655, %v1707
    %1748 = vst.msk [vmem:[#allocation2 + $0x131] sm:$0x1] %vm1655, %v1708
    %1749 = vst.msk [vmem:[#allocation2 + $0x149] sm:$0x1] %vm1655, %v1709
    %1750 = vst.msk [vmem:[#allocation2 + $0x161] sm:$0x1] %vm1655, %v1710
    %1751 = vst.msk [vmem:[#allocation2 + $0x179] sm:$0x1] %vm1655, %v1711
    %1752 = vst.msk [vmem:[#allocation2 + $0x191] sm:$0x1] %vm1655, %v1712
    %1753 = vst.msk [vmem:[#allocation2 + $0x1a9] sm:$0x1] %vm1655, %v1713
    %1754 = vst.msk [vmem:[#allocation2 + $0x1c1] sm:$0x1] %vm1655, %v1714
    %1755 = vst.msk [vmem:[#allocation2 + $0x1d9] sm:$0x1] %vm1655, %v1715
    %1756 = vst.msk [vmem:[#allocation2 + $0x1f1] sm:$0x1] %vm1655, %v1716
    %1757 = vst.msk [vmem:[#allocation2 + $0x209] sm:$0x1] %vm1655, %v1717
    %1758 = vst.msk [vmem:[#allocation2 + $0x221] sm:$0x1] %vm1655, %v1718
    %1759 = vst.msk [vmem:[#allocation2 + $0x239] sm:$0x1] %vm1655, %v1719
    %1760 = vst.msk [vmem:[#allocation2 + $0x251] sm:$0x1] %vm1655, %v1720
    %1761 = vst.msk [vmem:[#allocation2 + $0x269] sm:$0x1] %vm1655, %v1721
    %1762 = vst.msk [vmem:[#allocation2 + $0x281] sm:$0x1] %vm1655, %v1722
    %1763 = vst.msk [vmem:[#allocation2 + $0x299] sm:$0x1] %vm1655, %v1723
    %1764 = vst.msk [vmem:[#allocation2 + $0x2b1] sm:$0x1] %vm1655, %v1724
    %1765 = vst.msk [vmem:[#allocation2 + $0x2c9] sm:$0x1] %vm1655, %v1725
    %1766 = vst.msk [vmem:[#allocation2 + $0x2e1] sm:$0x1] %vm1655, %v1726
    %1767 = vst.msk [vmem:[#allocation2 + $0x2f9] sm:$0x1] %vm1655, %v1727
    %1768 = vst.msk [vmem:[#allocation2 + $0x311] sm:$0x1] %vm1655, %v1728
    %1769 = vst.msk [vmem:[#allocation2 + $0x329] sm:$0x1] %vm1655, %v1729
    %1770 = vst.msk [vmem:[#allocation2 + $0x341] sm:$0x1] %vm1655, %v1730
    %1771 = vst.msk [vmem:[#allocation2 + $0x359] sm:$0x1] %vm1655, %v1731
    %1772 = vst.msk [vmem:[#allocation2 + $0x371] sm:$0x1] %vm1655, %v1732
    %1773 = vst.msk [vmem:[#allocation2 + $0x389] sm:$0x1] %vm1655, %v1733
    %1774 = vst.msk [vmem:[#allocation2 + $0x3a1] sm:$0x1] %vm1655, %v1734
    %1775 = vst.msk [vmem:[#allocation2 + $0x3b9] sm:$0x1] %vm1655, %v1735
    %v1776 = vld [vmem:[#allocation2] sm:$0xff]
    %v1777 = vld [vmem:[#allocation2 + $0x8] sm:$0xff]
    %v1778 = vld [vmem:[#allocation2 + $0x10] sm:$0x3]
    %v1779 = vld [vmem:[#allocation2 + $0x18] sm:$0xff]
    %v1780 = vld [vmem:[#allocation2 + $0x20] sm:$0xff]
    %v1781 = vld [vmem:[#allocation2 + $0x28] sm:$0x3]
    %v1782 = vld [vmem:[#allocation2 + $0x30] sm:$0xff]
    %v1783 = vld [vmem:[#allocation2 + $0x38] sm:$0xff]
    %v1784 = vld [vmem:[#allocation2 + $0x40] sm:$0x3]
    %v1785 = vld [vmem:[#allocation2 + $0x48] sm:$0xff]
    %v1786 = vld [vmem:[#allocation2 + $0x50] sm:$0xff]
    %v1787 = vld [vmem:[#allocation2 + $0x58] sm:$0x3]
    %v1788 = vld [vmem:[#allocation2 + $0x60] sm:$0xff]
    %v1789 = vld [vmem:[#allocation2 + $0x68] sm:$0xff]
    %v1790 = vld [vmem:[#allocation2 + $0x70] sm:$0x3]
    %v1791 = vld [vmem:[#allocation2 + $0x78] sm:$0xff]
    %v1792 = vld [vmem:[#allocation2 + $0x80] sm:$0xff]
    %v1793 = vld [vmem:[#allocation2 + $0x88] sm:$0x3]
    %v1794 = vld [vmem:[#allocation2 + $0x90] sm:$0xff]
    %v1795 = vld [vmem:[#allocation2 + $0x98] sm:$0xff]
    %v1796 = vld [vmem:[#allocation2 + $0xa0] sm:$0x3]
    %v1797 = vld [vmem:[#allocation2 + $0xa8] sm:$0xff]
    %v1798 = vld [vmem:[#allocation2 + $0xb0] sm:$0xff]
    %v1799 = vld [vmem:[#allocation2 + $0xb8] sm:$0x3]
    %v1800 = vld [vmem:[#allocation2 + $0xc0] sm:$0xff]
    %v1801 = vld [vmem:[#allocation2 + $0xc8] sm:$0xff]
    %v1802 = vld [vmem:[#allocation2 + $0xd0] sm:$0x3]
    %v1803 = vld [vmem:[#allocation2 + $0xd8] sm:$0xff]
    %v1804 = vld [vmem:[#allocation2 + $0xe0] sm:$0xff]
    %v1805 = vld [vmem:[#allocation2 + $0xe8] sm:$0x3]
    %v1806 = vld [vmem:[#allocation2 + $0xf0] sm:$0xff]
    %v1807 = vld [vmem:[#allocation2 + $0xf8] sm:$0xff]
    %v1808 = vld [vmem:[#allocation2 + $0x100] sm:$0x3]
    %v1809 = vld [vmem:[#allocation2 + $0x108] sm:$0xff]
    %v1810 = vld [vmem:[#allocation2 + $0x110] sm:$0xff]
    %v1811 = vld [vmem:[#allocation2 + $0x118] sm:$0x3]
    %v1812 = vld [vmem:[#allocation2 + $0x120] sm:$0xff]
    %v1813 = vld [vmem:[#allocation2 + $0x128] sm:$0xff]
    %v1814 = vld [vmem:[#allocation2 + $0x130] sm:$0x3]
    %v1815 = vld [vmem:[#allocation2 + $0x138] sm:$0xff]
    %v1816 = vld [vmem:[#allocation2 + $0x140] sm:$0xff]
    %v1817 = vld [vmem:[#allocation2 + $0x148] sm:$0x3]
    %v1818 = vld [vmem:[#allocation2 + $0x150] sm:$0xff]
    %v1819 = vld [vmem:[#allocation2 + $0x158] sm:$0xff]
    %v1820 = vld [vmem:[#allocation2 + $0x160] sm:$0x3]
    %v1821 = vld [vmem:[#allocation2 + $0x168] sm:$0xff]
    %v1822 = vld [vmem:[#allocation2 + $0x170] sm:$0xff]
    %v1823 = vld [vmem:[#allocation2 + $0x178] sm:$0x3]
    %v1824 = vld [vmem:[#allocation2 + $0x180] sm:$0xff]
    %v1825 = vld [vmem:[#allocation2 + $0x188] sm:$0xff]
    %v1826 = vld [vmem:[#allocation2 + $0x190] sm:$0x3]
    %v1827 = vld [vmem:[#allocation2 + $0x198] sm:$0xff]
    %v1828 = vld [vmem:[#allocation2 + $0x1a0] sm:$0xff]
    %v1829 = vld [vmem:[#allocation2 + $0x1a8] sm:$0x3]
    %v1830 = vld [vmem:[#allocation2 + $0x1b0] sm:$0xff]
    %v1831 = vld [vmem:[#allocation2 + $0x1b8] sm:$0xff]
    %v1832 = vld [vmem:[#allocation2 + $0x1c0] sm:$0x3]
    %v1833 = vld [vmem:[#allocation2 + $0x1c8] sm:$0xff]
    %v1834 = vld [vmem:[#allocation2 + $0x1d0] sm:$0xff]
    %v1835 = vld [vmem:[#allocation2 + $0x1d8] sm:$0x3]
    %v1836 = vld [vmem:[#allocation2 + $0x1e0] sm:$0xff]
    %v1837 = vld [vmem:[#allocation2 + $0x1e8] sm:$0xff]
    %v1838 = vld [vmem:[#allocation2 + $0x1f0] sm:$0x3]
    %v1839 = vld [vmem:[#allocation2 + $0x1f8] sm:$0xff]
    %v1840 = vld [vmem:[#allocation2 + $0x200] sm:$0xff]
    %v1841 = vld [vmem:[#allocation2 + $0x208] sm:$0x3]
    %v1842 = vld [vmem:[#allocation2 + $0x210] sm:$0xff]
    %v1843 = vld [vmem:[#allocation2 + $0x218] sm:$0xff]
    %v1844 = vld [vmem:[#allocation2 + $0x220] sm:$0x3]
    %v1845 = vld [vmem:[#allocation2 + $0x228] sm:$0xff]
    %v1846 = vld [vmem:[#allocation2 + $0x230] sm:$0xff]
    %v1847 = vld [vmem:[#allocation2 + $0x238] sm:$0x3]
    %v1848 = vld [vmem:[#allocation2 + $0x240] sm:$0xff]
    %v1849 = vld [vmem:[#allocation2 + $0x248] sm:$0xff]
    %v1850 = vld [vmem:[#allocation2 + $0x250] sm:$0x3]
    %v1851 = vld [vmem:[#allocation2 + $0x258] sm:$0xff]
    %v1852 = vld [vmem:[#allocation2 + $0x260] sm:$0xff]
    %v1853 = vld [vmem:[#allocation2 + $0x268] sm:$0x3]
    %v1854 = vld [vmem:[#allocation2 + $0x270] sm:$0xff]
    %v1855 = vld [vmem:[#allocation2 + $0x278] sm:$0xff]
    %v1856 = vld [vmem:[#allocation2 + $0x280] sm:$0x3]
    %v1857 = vld [vmem:[#allocation2 + $0x288] sm:$0xff]
    %v1858 = vld [vmem:[#allocation2 + $0x290] sm:$0xff]
    %v1859 = vld [vmem:[#allocation2 + $0x298] sm:$0x3]
    %v1860 = vld [vmem:[#allocation2 + $0x2a0] sm:$0xff]
    %v1861 = vld [vmem:[#allocation2 + $0x2a8] sm:$0xff]
    %v1862 = vld [vmem:[#allocation2 + $0x2b0] sm:$0x3]
    %v1863 = vld [vmem:[#allocation2 + $0x2b8] sm:$0xff]
    %v1864 = vld [vmem:[#allocation2 + $0x2c0] sm:$0xff]
    %v1865 = vld [vmem:[#allocation2 + $0x2c8] sm:$0x3]
    %v1866 = vld [vmem:[#allocation2 + $0x2d0] sm:$0xff]
    %v1867 = vld [vmem:[#allocation2 + $0x2d8] sm:$0xff]
    %v1868 = vld [vmem:[#allocation2 + $0x2e0] sm:$0x3]
    %v1869 = vld [vmem:[#allocation2 + $0x2e8] sm:$0xff]
    %v1870 = vld [vmem:[#allocation2 + $0x2f0] sm:$0xff]
    %v1871 = vld [vmem:[#allocation2 + $0x2f8] sm:$0x3]
    %v1872 = vld [vmem:[#allocation2 + $0x300] sm:$0xff]
    %v1873 = vld [vmem:[#allocation2 + $0x308] sm:$0xff]
    %v1874 = vld [vmem:[#allocation2 + $0x310] sm:$0x3]
    %v1875 = vld [vmem:[#allocation2 + $0x318] sm:$0xff]
    %v1876 = vld [vmem:[#allocation2 + $0x320] sm:$0xff]
    %v1877 = vld [vmem:[#allocation2 + $0x328] sm:$0x3]
    %v1878 = vld [vmem:[#allocation2 + $0x330] sm:$0xff]
    %v1879 = vld [vmem:[#allocation2 + $0x338] sm:$0xff]
    %v1880 = vld [vmem:[#allocation2 + $0x340] sm:$0x3]
    %v1881 = vld [vmem:[#allocation2 + $0x348] sm:$0xff]
    %v1882 = vld [vmem:[#allocation2 + $0x350] sm:$0xff]
    %v1883 = vld [vmem:[#allocation2 + $0x358] sm:$0x3]
    %v1884 = vld [vmem:[#allocation2 + $0x360] sm:$0xff]
    %v1885 = vld [vmem:[#allocation2 + $0x368] sm:$0xff]
    %v1886 = vld [vmem:[#allocation2 + $0x370] sm:$0x3]
    %v1887 = vld [vmem:[#allocation2 + $0x378] sm:$0xff]
    %v1888 = vld [vmem:[#allocation2 + $0x380] sm:$0xff]
    %v1889 = vld [vmem:[#allocation2 + $0x388] sm:$0x3]
    %v1890 = vld [vmem:[#allocation2 + $0x390] sm:$0xff]
    %v1891 = vld [vmem:[#allocation2 + $0x398] sm:$0xff]
    %v1892 = vld [vmem:[#allocation2 + $0x3a0] sm:$0x3]
    %v1893 = vld [vmem:[#allocation2 + $0x3a8] sm:$0xff]
    %v1894 = vld [vmem:[#allocation2 + $0x3b0] sm:$0xff]
    %v1895 = vld [vmem:[#allocation2 + $0x3b8] sm:$0x3]
    %v1896 = vmul.f32 %v1776, 0.38439733
    %v1897 = vmul.f32 %v1777, 0.38439733
    %v1898 = vmul.f32 %v1778, 0.38439733
    %v1899 = vmul.f32 %v1779, 0.38439733
    %v1900 = vmul.f32 %v1780, 0.38439733
    %v1901 = vmul.f32 %v1781, 0.38439733
    %v1902 = vmul.f32 %v1782, 0.38439733
    %v1903 = vmul.f32 %v1783, 0.38439733
    %v1904 = vmul.f32 %v1784, 0.38439733
    %v1905 = vmul.f32 %v1785, 0.38439733
    %v1906 = vmul.f32 %v1786, 0.38439733
    %v1907 = vmul.f32 %v1787, 0.38439733
    %v1908 = vmul.f32 %v1788, 0.38439733
    %v1909 = vmul.f32 %v1789, 0.38439733
    %v1910 = vmul.f32 %v1790, 0.38439733
    %v1911 = vmul.f32 %v1791, 0.38439733
    %v1912 = vmul.f32 %v1792, 0.38439733
    %v1913 = vmul.f32 %v1793, 0.38439733
    %v1914 = vmul.f32 %v1794, 0.38439733
    %v1915 = vmul.f32 %v1795, 0.38439733
    %v1916 = vmul.f32 %v1796, 0.38439733
    %v1917 = vmul.f32 %v1797, 0.38439733
    %v1918 = vmul.f32 %v1798, 0.38439733
    %v1919 = vmul.f32 %v1799, 0.38439733
    %v1920 = vmul.f32 %v1800, 0.38439733
    %v1921 = vmul.f32 %v1801, 0.38439733
    %v1922 = vmul.f32 %v1802, 0.38439733
    %v1923 = vmul.f32 %v1803, 0.38439733
    %v1924 = vmul.f32 %v1804, 0.38439733
    %v1925 = vmul.f32 %v1805, 0.38439733
    %v1926 = vmul.f32 %v1806, 0.38439733
    %v1927 = vmul.f32 %v1807, 0.38439733
    %v1928 = vmul.f32 %v1808, 0.38439733
    %v1929 = vmul.f32 %v1809, 0.38439733
    %v1930 = vmul.f32 %v1810, 0.38439733
    %v1931 = vmul.f32 %v1811, 0.38439733
    %v1932 = vmul.f32 %v1812, 0.38439733
    %v1933 = vmul.f32 %v1813, 0.38439733
    %v1934 = vmul.f32 %v1814, 0.38439733
    %v1935 = vmul.f32 %v1815, 0.38439733
    %v1936 = vmul.f32 %v1816, 0.38439733
    %v1937 = vmul.f32 %v1817, 0.38439733
    %v1938 = vmul.f32 %v1818, 0.38439733
    %v1939 = vmul.f32 %v1819, 0.38439733
    %v1940 = vmul.f32 %v1820, 0.38439733
    %v1941 = vmul.f32 %v1821, 0.38439733
    %v1942 = vmul.f32 %v1822, 0.38439733
    %v1943 = vmul.f32 %v1823, 0.38439733
    %v1944 = vmul.f32 %v1824, 0.38439733
    %v1945 = vmul.f32 %v1825, 0.38439733
    %v1946 = vmul.f32 %v1826, 0.38439733
    %v1947 = vmul.f32 %v1827, 0.38439733
    %v1948 = vmul.f32 %v1828, 0.38439733
    %v1949 = vmul.f32 %v1829, 0.38439733
    %v1950 = vmul.f32 %v1830, 0.38439733
    %v1951 = vmul.f32 %v1831, 0.38439733
    %v1952 = vmul.f32 %v1832, 0.38439733
    %v1953 = vmul.f32 %v1833, 0.38439733
    %v1954 = vmul.f32 %v1834, 0.38439733
    %v1955 = vmul.f32 %v1835, 0.38439733
    %v1956 = vmul.f32 %v1836, 0.38439733
    %v1957 = vmul.f32 %v1837, 0.38439733
    %v1958 = vmul.f32 %v1838, 0.38439733
    %v1959 = vmul.f32 %v1839, 0.38439733
    %v1960 = vmul.f32 %v1840, 0.38439733
    %v1961 = vmul.f32 %v1841, 0.38439733
    %v1962 = vmul.f32 %v1842, 0.38439733
    %v1963 = vmul.f32 %v1843, 0.38439733
    %v1964 = vmul.f32 %v1844, 0.38439733
    %v1965 = vmul.f32 %v1845, 0.38439733
    %v1966 = vmul.f32 %v1846, 0.38439733
    %v1967 = vmul.f32 %v1847, 0.38439733
    %v1968 = vmul.f32 %v1848, 0.38439733
    %v1969 = vmul.f32 %v1849, 0.38439733
    %v1970 = vmul.f32 %v1850, 0.38439733
    %v1971 = vmul.f32 %v1851, 0.38439733
    %v1972 = vmul.f32 %v1852, 0.38439733
    %v1973 = vmul.f32 %v1853, 0.38439733
    %v1974 = vmul.f32 %v1854, 0.38439733
    %v1975 = vmul.f32 %v1855, 0.38439733
    %v1976 = vmul.f32 %v1856, 0.38439733
    %v1977 = vmul.f32 %v1857, 0.38439733
    %v1978 = vmul.f32 %v1858, 0.38439733
    %v1979 = vmul.f32 %v1859, 0.38439733
    %v1980 = vmul.f32 %v1860, 0.38439733
    %v1981 = vmul.f32 %v1861, 0.38439733
    %v1982 = vmul.f32 %v1862, 0.38439733
    %v1983 = vmul.f32 %v1863, 0.38439733
    %v1984 = vmul.f32 %v1864, 0.38439733
    %v1985 = vmul.f32 %v1865, 0.38439733
    %v1986 = vmul.f32 %v1866, 0.38439733
    %v1987 = vmul.f32 %v1867, 0.38439733
    %v1988 = vmul.f32 %v1868, 0.38439733
    %v1989 = vmul.f32 %v1869, 0.38439733
    %v1990 = vmul.f32 %v1870, 0.38439733
    %v1991 = vmul.f32 %v1871, 0.38439733
    %v1992 = vmul.f32 %v1872, 0.38439733
    %v1993 = vmul.f32 %v1873, 0.38439733
    %v1994 = vmul.f32 %v1874, 0.38439733
    %v1995 = vmul.f32 %v1875, 0.38439733
    %v1996 = vmul.f32 %v1876, 0.38439733
    %v1997 = vmul.f32 %v1877, 0.38439733
    %v1998 = vmul.f32 %v1878, 0.38439733
    %v1999 = vmul.f32 %v1879, 0.38439733
    %v2000 = vmul.f32 %v1880, 0.38439733
    %v2001 = vmul.f32 %v1881, 0.38439733
    %v2002 = vmul.f32 %v1882, 0.38439733
    %v2003 = vmul.f32 %v1883, 0.38439733
    %v2004 = vmul.f32 %v1884, 0.38439733
    %v2005 = vmul.f32 %v1885, 0.38439733
    %v2006 = vmul.f32 %v1886, 0.38439733
    %v2007 = vmul.f32 %v1887, 0.38439733
    %v2008 = vmul.f32 %v1888, 0.38439733
    %v2009 = vmul.f32 %v1889, 0.38439733
    %v2010 = vmul.f32 %v1890, 0.38439733
    %v2011 = vmul.f32 %v1891, 0.38439733
    %v2012 = vmul.f32 %v1892, 0.38439733
    %v2013 = vmul.f32 %v1893, 0.38439733
    %v2014 = vmul.f32 %v1894, 0.38439733
    %v2015 = vmul.f32 %v1895, 0.38439733
    %2136 = vrot.lane.b32.xlu0 %v1776, 126
    %v2137 = vpop.permute.xlu0 %2136
    %2138 = vrot.lane.b32.xlu0 %v1777, 126
    %v2139 = vpop.permute.xlu0 %2138
    %2140 = vrot.lane.b32.xlu0 %v1778, 126
    %v2141 = vpop.permute.xlu0 %2140
    %2142 = vrot.lane.b32.xlu0 %v1779, 126
    %v2143 = vpop.permute.xlu0 %2142
    %2144 = vrot.lane.b32.xlu0 %v1780, 126
    %v2145 = vpop.permute.xlu0 %2144
    %2146 = vrot.lane.b32.xlu0 %v1781, 126
    %v2147 = vpop.permute.xlu0 %2146
    %2148 = vrot.lane.b32.xlu0 %v1782, 126
    %v2149 = vpop.permute.xlu0 %2148
    %2150 = vrot.lane.b32.xlu0 %v1783, 126
    %v2151 = vpop.permute.xlu0 %2150
    %2152 = vrot.lane.b32.xlu0 %v1784, 126
    %v2153 = vpop.permute.xlu0 %2152
    %2154 = vrot.lane.b32.xlu0 %v1785, 126
    %v2155 = vpop.permute.xlu0 %2154
    %2156 = vrot.lane.b32.xlu0 %v1786, 126
    %v2157 = vpop.permute.xlu0 %2156
    %2158 = vrot.lane.b32.xlu0 %v1787, 126
    %v2159 = vpop.permute.xlu0 %2158
    %2160 = vrot.lane.b32.xlu0 %v1788, 126
    %v2161 = vpop.permute.xlu0 %2160
    %2162 = vrot.lane.b32.xlu0 %v1789, 126
    %v2163 = vpop.permute.xlu0 %2162
    %2164 = vrot.lane.b32.xlu0 %v1790, 126
    %v2165 = vpop.permute.xlu0 %2164
    %2166 = vrot.lane.b32.xlu0 %v1791, 126
    %v2167 = vpop.permute.xlu0 %2166
    %2168 = vrot.lane.b32.xlu0 %v1792, 126
    %v2169 = vpop.permute.xlu0 %2168
    %2170 = vrot.lane.b32.xlu0 %v1793, 126
    %v2171 = vpop.permute.xlu0 %2170
    %2172 = vrot.lane.b32.xlu0 %v1794, 126
    %v2173 = vpop.permute.xlu0 %2172
    %2174 = vrot.lane.b32.xlu0 %v1795, 126
    %v2175 = vpop.permute.xlu0 %2174
    %2176 = vrot.lane.b32.xlu0 %v1796, 126
    %v2177 = vpop.permute.xlu0 %2176
    %2178 = vrot.lane.b32.xlu0 %v1797, 126
    %v2179 = vpop.permute.xlu0 %2178
    %2180 = vrot.lane.b32.xlu0 %v1798, 126
    %v2181 = vpop.permute.xlu0 %2180
    %2182 = vrot.lane.b32.xlu0 %v1799, 126
    %v2183 = vpop.permute.xlu0 %2182
    %2184 = vrot.lane.b32.xlu0 %v1800, 126
    %v2185 = vpop.permute.xlu0 %2184
    %2186 = vrot.lane.b32.xlu0 %v1801, 126
    %v2187 = vpop.permute.xlu0 %2186
    %2188 = vrot.lane.b32.xlu0 %v1802, 126
    %v2189 = vpop.permute.xlu0 %2188
    %2190 = vrot.lane.b32.xlu0 %v1803, 126
    %v2191 = vpop.permute.xlu0 %2190
    %2192 = vrot.lane.b32.xlu0 %v1804, 126
    %v2193 = vpop.permute.xlu0 %2192
    %2194 = vrot.lane.b32.xlu0 %v1805, 126
    %v2195 = vpop.permute.xlu0 %2194
    %2196 = vrot.lane.b32.xlu0 %v1806, 126
    %v2197 = vpop.permute.xlu0 %2196
    %2198 = vrot.lane.b32.xlu0 %v1807, 126
    %v2199 = vpop.permute.xlu0 %2198
    %2200 = vrot.lane.b32.xlu0 %v1808, 126
    %v2201 = vpop.permute.xlu0 %2200
    %2202 = vrot.lane.b32.xlu0 %v1809, 126
    %v2203 = vpop.permute.xlu0 %2202
    %2204 = vrot.lane.b32.xlu0 %v1810, 126
    %v2205 = vpop.permute.xlu0 %2204
    %2206 = vrot.lane.b32.xlu0 %v1811, 126
    %v2207 = vpop.permute.xlu0 %2206
    %2208 = vrot.lane.b32.xlu0 %v1812, 126
    %v2209 = vpop.permute.xlu0 %2208
    %2210 = vrot.lane.b32.xlu0 %v1813, 126
    %v2211 = vpop.permute.xlu0 %2210
    %2212 = vrot.lane.b32.xlu0 %v1814, 126
    %v2213 = vpop.permute.xlu0 %2212
    %2214 = vrot.lane.b32.xlu0 %v1815, 126
    %v2215 = vpop.permute.xlu0 %2214
    %2216 = vrot.lane.b32.xlu0 %v1816, 126
    %v2217 = vpop.permute.xlu0 %2216
    %2218 = vrot.lane.b32.xlu0 %v1817, 126
    %v2219 = vpop.permute.xlu0 %2218
    %2220 = vrot.lane.b32.xlu0 %v1818, 126
    %v2221 = vpop.permute.xlu0 %2220
    %2222 = vrot.lane.b32.xlu0 %v1819, 126
    %v2223 = vpop.permute.xlu0 %2222
    %2224 = vrot.lane.b32.xlu0 %v1820, 126
    %v2225 = vpop.permute.xlu0 %2224
    %2226 = vrot.lane.b32.xlu0 %v1821, 126
    %v2227 = vpop.permute.xlu0 %2226
    %2228 = vrot.lane.b32.xlu0 %v1822, 126
    %v2229 = vpop.permute.xlu0 %2228
    %2230 = vrot.lane.b32.xlu0 %v1823, 126
    %v2231 = vpop.permute.xlu0 %2230
    %2232 = vrot.lane.b32.xlu0 %v1824, 126
    %v2233 = vpop.permute.xlu0 %2232
    %2234 = vrot.lane.b32.xlu0 %v1825, 126
    %v2235 = vpop.permute.xlu0 %2234
    %2236 = vrot.lane.b32.xlu0 %v1826, 126
    %v2237 = vpop.permute.xlu0 %2236
    %2238 = vrot.lane.b32.xlu0 %v1827, 126
    %v2239 = vpop.permute.xlu0 %2238
    %2240 = vrot.lane.b32.xlu0 %v1828, 126
    %v2241 = vpop.permute.xlu0 %2240
    %2242 = vrot.lane.b32.xlu0 %v1829, 126
    %v2243 = vpop.permute.xlu0 %2242
    %2244 = vrot.lane.b32.xlu0 %v1830, 126
    %v2245 = vpop.permute.xlu0 %2244
    %2246 = vrot.lane.b32.xlu0 %v1831, 126
    %v2247 = vpop.permute.xlu0 %2246
    %2248 = vrot.lane.b32.xlu0 %v1832, 126
    %v2249 = vpop.permute.xlu0 %2248
    %2250 = vrot.lane.b32.xlu0 %v1833, 126
    %v2251 = vpop.permute.xlu0 %2250
    %2252 = vrot.lane.b32.xlu0 %v1834, 126
    %v2253 = vpop.permute.xlu0 %2252
    %2254 = vrot.lane.b32.xlu0 %v1835, 126
    %v2255 = vpop.permute.xlu0 %2254
    %2256 = vrot.lane.b32.xlu0 %v1836, 126
    %v2257 = vpop.permute.xlu0 %2256
    %2258 = vrot.lane.b32.xlu0 %v1837, 126
    %v2259 = vpop.permute.xlu0 %2258
    %2260 = vrot.lane.b32.xlu0 %v1838, 126
    %v2261 = vpop.permute.xlu0 %2260
    %2262 = vrot.lane.b32.xlu0 %v1839, 126
    %v2263 = vpop.permute.xlu0 %2262
    %2264 = vrot.lane.b32.xlu0 %v1840, 126
    %v2265 = vpop.permute.xlu0 %2264
    %2266 = vrot.lane.b32.xlu0 %v1841, 126
    %v2267 = vpop.permute.xlu0 %2266
    %2268 = vrot.lane.b32.xlu0 %v1842, 126
    %v2269 = vpop.permute.xlu0 %2268
    %2270 = vrot.lane.b32.xlu0 %v1843, 126
    %v2271 = vpop.permute.xlu0 %2270
    %2272 = vrot.lane.b32.xlu0 %v1844, 126
    %v2273 = vpop.permute.xlu0 %2272
    %2274 = vrot.lane.b32.xlu0 %v1845, 126
    %v2275 = vpop.permute.xlu0 %2274
    %2276 = vrot.lane.b32.xlu0 %v1846, 126
    %v2277 = vpop.permute.xlu0 %2276
    %2278 = vrot.lane.b32.xlu0 %v1847, 126
    %v2279 = vpop.permute.xlu0 %2278
    %2280 = vrot.lane.b32.xlu0 %v1848, 126
    %v2281 = vpop.permute.xlu0 %2280
    %2282 = vrot.lane.b32.xlu0 %v1849, 126
    %v2283 = vpop.permute.xlu0 %2282
    %2284 = vrot.lane.b32.xlu0 %v1850, 126
    %v2285 = vpop.permute.xlu0 %2284
    %2286 = vrot.lane.b32.xlu0 %v1851, 126
    %v2287 = vpop.permute.xlu0 %2286
    %2288 = vrot.lane.b32.xlu0 %v1852, 126
    %v2289 = vpop.permute.xlu0 %2288
    %2290 = vrot.lane.b32.xlu0 %v1853, 126
    %v2291 = vpop.permute.xlu0 %2290
    %2292 = vrot.lane.b32.xlu0 %v1854, 126
    %v2293 = vpop.permute.xlu0 %2292
    %2294 = vrot.lane.b32.xlu0 %v1855, 126
    %v2295 = vpop.permute.xlu0 %2294
    %2296 = vrot.lane.b32.xlu0 %v1856, 126
    %v2297 = vpop.permute.xlu0 %2296
    %2298 = vrot.lane.b32.xlu0 %v1857, 126
    %v2299 = vpop.permute.xlu0 %2298
    %2300 = vrot.lane.b32.xlu0 %v1858, 126
    %v2301 = vpop.permute.xlu0 %2300
    %2302 = vrot.lane.b32.xlu0 %v1859, 126
    %v2303 = vpop.permute.xlu0 %2302
    %2304 = vrot.lane.b32.xlu0 %v1860, 126
    %v2305 = vpop.permute.xlu0 %2304
    %2306 = vrot.lane.b32.xlu0 %v1861, 126
    %v2307 = vpop.permute.xlu0 %2306
    %2308 = vrot.lane.b32.xlu0 %v1862, 126
    %v2309 = vpop.permute.xlu0 %2308
    %2310 = vrot.lane.b32.xlu0 %v1863, 126
    %v2311 = vpop.permute.xlu0 %2310
    %2312 = vrot.lane.b32.xlu0 %v1864, 126
    %v2313 = vpop.permute.xlu0 %2312
    %2314 = vrot.lane.b32.xlu0 %v1865, 126
    %v2315 = vpop.permute.xlu0 %2314
    %2316 = vrot.lane.b32.xlu0 %v1866, 126
    %v2317 = vpop.permute.xlu0 %2316
    %2318 = vrot.lane.b32.xlu0 %v1867, 126
    %v2319 = vpop.permute.xlu0 %2318
    %2320 = vrot.lane.b32.xlu0 %v1868, 126
    %v2321 = vpop.permute.xlu0 %2320
    %2322 = vrot.lane.b32.xlu0 %v1869, 126
    %v2323 = vpop.permute.xlu0 %2322
    %2324 = vrot.lane.b32.xlu0 %v1870, 126
    %v2325 = vpop.permute.xlu0 %2324
    %2326 = vrot.lane.b32.xlu0 %v1871, 126
    %v2327 = vpop.permute.xlu0 %2326
    %2328 = vrot.lane.b32.xlu0 %v1872, 126
    %v2329 = vpop.permute.xlu0 %2328
    %2330 = vrot.lane.b32.xlu0 %v1873, 126
    %v2331 = vpop.permute.xlu0 %2330
    %2332 = vrot.lane.b32.xlu0 %v1874, 126
    %v2333 = vpop.permute.xlu0 %2332
    %2334 = vrot.lane.b32.xlu0 %v1875, 126
    %v2335 = vpop.permute.xlu0 %2334
    %2336 = vrot.lane.b32.xlu0 %v1876, 126
    %v2337 = vpop.permute.xlu0 %2336
    %2338 = vrot.lane.b32.xlu0 %v1877, 126
    %v2339 = vpop.permute.xlu0 %2338
    %2340 = vrot.lane.b32.xlu0 %v1878, 126
    %v2341 = vpop.permute.xlu0 %2340
    %2342 = vrot.lane.b32.xlu0 %v1879, 126
    %v2343 = vpop.permute.xlu0 %2342
    %2344 = vrot.lane.b32.xlu0 %v1880, 126
    %v2345 = vpop.permute.xlu0 %2344
    %2346 = vrot.lane.b32.xlu0 %v1881, 126
    %v2347 = vpop.permute.xlu0 %2346
    %2348 = vrot.lane.b32.xlu0 %v1882, 126
    %v2349 = vpop.permute.xlu0 %2348
    %2350 = vrot.lane.b32.xlu0 %v1883, 126
    %v2351 = vpop.permute.xlu0 %2350
    %2352 = vrot.lane.b32.xlu0 %v1884, 126
    %v2353 = vpop.permute.xlu0 %2352
    %2354 = vrot.lane.b32.xlu0 %v1885, 126
    %v2355 = vpop.permute.xlu0 %2354
    %2356 = vrot.lane.b32.xlu0 %v1886, 126
    %v2357 = vpop.permute.xlu0 %2356
    %2358 = vrot.lane.b32.xlu0 %v1887, 126
    %v2359 = vpop.permute.xlu0 %2358
    %2360 = vrot.lane.b32.xlu0 %v1888, 126
    %v2361 = vpop.permute.xlu0 %2360
    %2362 = vrot.lane.b32.xlu0 %v1889, 126
    %v2363 = vpop.permute.xlu0 %2362
    %2364 = vrot.lane.b32.xlu0 %v1890, 126
    %v2365 = vpop.permute.xlu0 %2364
    %2366 = vrot.lane.b32.xlu0 %v1891, 126
    %v2367 = vpop.permute.xlu0 %2366
    %2368 = vrot.lane.b32.xlu0 %v1892, 126
    %v2369 = vpop.permute.xlu0 %2368
    %2370 = vrot.lane.b32.xlu0 %v1893, 126
    %v2371 = vpop.permute.xlu0 %2370
    %2372 = vrot.lane.b32.xlu0 %v1894, 126
    %v2373 = vpop.permute.xlu0 %2372
    %2374 = vrot.lane.b32.xlu0 %v1895, 126
    %v2375 = vpop.permute.xlu0 %2374
    %v2496 = vadd.f32 %v1776, %v2137
    %v2497 = vadd.f32 %v1777, %v2139
    %v2498 = vadd.f32 %v1778, %v2141
    %v2499 = vadd.f32 %v1779, %v2143
    %v2500 = vadd.f32 %v1780, %v2145
    %v2501 = vadd.f32 %v1781, %v2147
    %v2502 = vadd.f32 %v1782, %v2149
    %v2503 = vadd.f32 %v1783, %v2151
    %v2504 = vadd.f32 %v1784, %v2153
    %v2505 = vadd.f32 %v1785, %v2155
    %v2506 = vadd.f32 %v1786, %v2157
    %v2507 = vadd.f32 %v1787, %v2159
    %v2508 = vadd.f32 %v1788, %v2161
    %v2509 = vadd.f32 %v1789, %v2163
    %v2510 = vadd.f32 %v1790, %v2165
    %v2511 = vadd.f32 %v1791, %v2167
    %v2512 = vadd.f32 %v1792, %v2169
    %v2513 = vadd.f32 %v1793, %v2171
    %v2514 = vadd.f32 %v1794, %v2173
    %v2515 = vadd.f32 %v1795, %v2175
    %v2516 = vadd.f32 %v1796, %v2177
    %v2517 = vadd.f32 %v1797, %v2179
    %v2518 = vadd.f32 %v1798, %v2181
    %v2519 = vadd.f32 %v1799, %v2183
    %v2520 = vadd.f32 %v1800, %v2185
    %v2521 = vadd.f32 %v1801, %v2187
    %v2522 = vadd.f32 %v1802, %v2189
    %v2523 = vadd.f32 %v1803, %v2191
    %v2524 = vadd.f32 %v1804, %v2193
    %v2525 = vadd.f32 %v1805, %v2195
    %v2526 = vadd.f32 %v1806, %v2197
    %v2527 = vadd.f32 %v1807, %v2199
    %v2528 = vadd.f32 %v1808, %v2201
    %v2529 = vadd.f32 %v1809, %v2203
    %v2530 = vadd.f32 %v1810, %v2205
    %v2531 = vadd.f32 %v1811, %v2207
    %v2532 = vadd.f32 %v1812, %v2209
    %v2533 = vadd.f32 %v1813, %v2211
    %v2534 = vadd.f32 %v1814, %v2213
    %v2535 = vadd.f32 %v1815, %v2215
    %v2536 = vadd.f32 %v1816, %v2217
    %v2537 = vadd.f32 %v1817, %v2219
    %v2538 = vadd.f32 %v1818, %v2221
    %v2539 = vadd.f32 %v1819, %v2223
    %v2540 = vadd.f32 %v1820, %v2225
    %v2541 = vadd.f32 %v1821, %v2227
    %v2542 = vadd.f32 %v1822, %v2229
    %v2543 = vadd.f32 %v1823, %v2231
    %v2544 = vadd.f32 %v1824, %v2233
    %v2545 = vadd.f32 %v1825, %v2235
    %v2546 = vadd.f32 %v1826, %v2237
    %v2547 = vadd.f32 %v1827, %v2239
    %v2548 = vadd.f32 %v1828, %v2241
    %v2549 = vadd.f32 %v1829, %v2243
    %v2550 = vadd.f32 %v1830, %v2245
    %v2551 = vadd.f32 %v1831, %v2247
    %v2552 = vadd.f32 %v1832, %v2249
    %v2553 = vadd.f32 %v1833, %v2251
    %v2554 = vadd.f32 %v1834, %v2253
    %v2555 = vadd.f32 %v1835, %v2255
    %v2556 = vadd.f32 %v1836, %v2257
    %v2557 = vadd.f32 %v1837, %v2259
    %v2558 = vadd.f32 %v1838, %v2261
    %v2559 = vadd.f32 %v1839, %v2263
    %v2560 = vadd.f32 %v1840, %v2265
    %v2561 = vadd.f32 %v1841, %v2267
    %v2562 = vadd.f32 %v1842, %v2269
    %v2563 = vadd.f32 %v1843, %v2271
    %v2564 = vadd.f32 %v1844, %v2273
    %v2565 = vadd.f32 %v1845, %v2275
    %v2566 = vadd.f32 %v1846, %v2277
    %v2567 = vadd.f32 %v1847, %v2279
    %v2568 = vadd.f32 %v1848, %v2281
    %v2569 = vadd.f32 %v1849, %v2283
    %v2570 = vadd.f32 %v1850, %v2285
    %v2571 = vadd.f32 %v1851, %v2287
    %v2572 = vadd.f32 %v1852, %v2289
    %v2573 = vadd.f32 %v1853, %v2291
    %v2574 = vadd.f32 %v1854, %v2293
    %v2575 = vadd.f32 %v1855, %v2295
    %v2576 = vadd.f32 %v1856, %v2297
    %v2577 = vadd.f32 %v1857, %v2299
    %v2578 = vadd.f32 %v1858, %v2301
    %v2579 = vadd.f32 %v1859, %v2303
    %v2580 = vadd.f32 %v1860, %v2305
    %v2581 = vadd.f32 %v1861, %v2307
    %v2582 = vadd.f32 %v1862, %v2309
    %v2583 = vadd.f32 %v1863, %v2311
    %v2584 = vadd.f32 %v1864, %v2313
    %v2585 = vadd.f32 %v1865, %v2315
    %v2586 = vadd.f32 %v1866, %v2317
    %v2587 = vadd.f32 %v1867, %v2319
    %v2588 = vadd.f32 %v1868, %v2321
    %v2589 = vadd.f32 %v1869, %v2323
    %v2590 = vadd.f32 %v1870, %v2325
    %v2591 = vadd.f32 %v1871, %v2327
    %v2592 = vadd.f32 %v1872, %v2329
    %v2593 = vadd.f32 %v1873, %v2331
    %v2594 = vadd.f32 %v1874, %v2333
    %v2595 = vadd.f32 %v1875, %v2335
    %v2596 = vadd.f32 %v1876, %v2337
    %v2597 = vadd.f32 %v1877, %v2339
    %v2598 = vadd.f32 %v1878, %v2341
    %v2599 = vadd.f32 %v1879, %v2343
    %v2600 = vadd.f32 %v1880, %v2345
    %v2601 = vadd.f32 %v1881, %v2347
    %v2602 = vadd.f32 %v1882, %v2349
    %v2603 = vadd.f32 %v1883, %v2351
    %v2604 = vadd.f32 %v1884, %v2353
    %v2605 = vadd.f32 %v1885, %v2355
    %v2606 = vadd.f32 %v1886, %v2357
    %v2607 = vadd.f32 %v1887, %v2359
    %v2608 = vadd.f32 %v1888, %v2361
    %v2609 = vadd.f32 %v1889, %v2363
    %v2610 = vadd.f32 %v1890, %v2365
    %v2611 = vadd.f32 %v1891, %v2367
    %v2612 = vadd.f32 %v1892, %v2369
    %v2613 = vadd.f32 %v1893, %v2371
    %v2614 = vadd.f32 %v1894, %v2373
    %v2615 = vadd.f32 %v1895, %v2375
    %v2616 = vmul.f32 %v2496, 0.30780134
    %v2617 = vmul.f32 %v2497, 0.30780134
    %v2618 = vmul.f32 %v2498, 0.30780134
    %v2619 = vmul.f32 %v2499, 0.30780134
    %v2620 = vmul.f32 %v2500, 0.30780134
    %v2621 = vmul.f32 %v2501, 0.30780134
    %v2622 = vmul.f32 %v2502, 0.30780134
    %v2623 = vmul.f32 %v2503, 0.30780134
    %v2624 = vmul.f32 %v2504, 0.30780134
    %v2625 = vmul.f32 %v2505, 0.30780134
    %v2626 = vmul.f32 %v2506, 0.30780134
    %v2627 = vmul.f32 %v2507, 0.30780134
    %v2628 = vmul.f32 %v2508, 0.30780134
    %v2629 = vmul.f32 %v2509, 0.30780134
    %v2630 = vmul.f32 %v2510, 0.30780134
    %v2631 = vmul.f32 %v2511, 0.30780134
    %v2632 = vmul.f32 %v2512, 0.30780134
    %v2633 = vmul.f32 %v2513, 0.30780134
    %v2634 = vmul.f32 %v2514, 0.30780134
    %v2635 = vmul.f32 %v2515, 0.30780134
    %v2636 = vmul.f32 %v2516, 0.30780134
    %v2637 = vmul.f32 %v2517, 0.30780134
    %v2638 = vmul.f32 %v2518, 0.30780134
    %v2639 = vmul.f32 %v2519, 0.30780134
    %v2640 = vmul.f32 %v2520, 0.30780134
    %v2641 = vmul.f32 %v2521, 0.30780134
    %v2642 = vmul.f32 %v2522, 0.30780134
    %v2643 = vmul.f32 %v2523, 0.30780134
    %v2644 = vmul.f32 %v2524, 0.30780134
    %v2645 = vmul.f32 %v2525, 0.30780134
    %v2646 = vmul.f32 %v2526, 0.30780134
    %v2647 = vmul.f32 %v2527, 0.30780134
    %v2648 = vmul.f32 %v2528, 0.30780134
    %v2649 = vmul.f32 %v2529, 0.30780134
    %v2650 = vmul.f32 %v2530, 0.30780134
    %v2651 = vmul.f32 %v2531, 0.30780134
    %v2652 = vmul.f32 %v2532, 0.30780134
    %v2653 = vmul.f32 %v2533, 0.30780134
    %v2654 = vmul.f32 %v2534, 0.30780134
    %v2655 = vmul.f32 %v2535, 0.30780134
    %v2656 = vmul.f32 %v2536, 0.30780134
    %v2657 = vmul.f32 %v2537, 0.30780134
    %v2658 = vmul.f32 %v2538, 0.30780134
    %v2659 = vmul.f32 %v2539, 0.30780134
    %v2660 = vmul.f32 %v2540, 0.30780134
    %v2661 = vmul.f32 %v2541, 0.30780134
    %v2662 = vmul.f32 %v2542, 0.30780134
    %v2663 = vmul.f32 %v2543, 0.30780134
    %v2664 = vmul.f32 %v2544, 0.30780134
    %v2665 = vmul.f32 %v2545, 0.30780134
    %v2666 = vmul.f32 %v2546, 0.30780134
    %v2667 = vmul.f32 %v2547, 0.30780134
    %v2668 = vmul.f32 %v2548, 0.30780134
    %v2669 = vmul.f32 %v2549, 0.30780134
    %v2670 = vmul.f32 %v2550, 0.30780134
    %v2671 = vmul.f32 %v2551, 0.30780134
    %v2672 = vmul.f32 %v2552, 0.30780134
    %v2673 = vmul.f32 %v2553, 0.30780134
    %v2674 = vmul.f32 %v2554, 0.30780134
    %v2675 = vmul.f32 %v2555, 0.30780134
    %v2676 = vmul.f32 %v2556, 0.30780134
    %v2677 = vmul.f32 %v2557, 0.30780134
    %v2678 = vmul.f32 %v2558, 0.30780134
    %v2679 = vmul.f32 %v2559, 0.30780134
    %v2680 = vmul.f32 %v2560, 0.30780134
    %v2681 = vmul.f32 %v2561, 0.30780134
    %v2682 = vmul.f32 %v2562, 0.30780134
    %v2683 = vmul.f32 %v2563, 0.30780134
    %v2684 = vmul.f32 %v2564, 0.30780134
    %v2685 = vmul.f32 %v2565, 0.30780134
    %v2686 = vmul.f32 %v2566, 0.30780134
    %v2687 = vmul.f32 %v2567, 0.30780134
    %v2688 = vmul.f32 %v2568, 0.30780134
    %v2689 = vmul.f32 %v2569, 0.30780134
    %v2690 = vmul.f32 %v2570, 0.30780134
    %v2691 = vmul.f32 %v2571, 0.30780134
    %v2692 = vmul.f32 %v2572, 0.30780134
    %v2693 = vmul.f32 %v2573, 0.30780134
    %v2694 = vmul.f32 %v2574, 0.30780134
    %v2695 = vmul.f32 %v2575, 0.30780134
    %v2696 = vmul.f32 %v2576, 0.30780134
    %v2697 = vmul.f32 %v2577, 0.30780134
    %v2698 = vmul.f32 %v2578, 0.30780134
    %v2699 = vmul.f32 %v2579, 0.30780134
    %v2700 = vmul.f32 %v2580, 0.30780134
    %v2701 = vmul.f32 %v2581, 0.30780134
    %v2702 = vmul.f32 %v2582, 0.30780134
    %v2703 = vmul.f32 %v2583, 0.30780134
    %v2704 = vmul.f32 %v2584, 0.30780134
    %v2705 = vmul.f32 %v2585, 0.30780134
    %v2706 = vmul.f32 %v2586, 0.30780134
    %v2707 = vmul.f32 %v2587, 0.30780134
    %v2708 = vmul.f32 %v2588, 0.30780134
    %v2709 = vmul.f32 %v2589, 0.30780134
    %v2710 = vmul.f32 %v2590, 0.30780134
    %v2711 = vmul.f32 %v2591, 0.30780134
    %v2712 = vmul.f32 %v2592, 0.30780134
    %v2713 = vmul.f32 %v2593, 0.30780134
    %v2714 = vmul.f32 %v2594, 0.30780134
    %v2715 = vmul.f32 %v2595, 0.30780134
    %v2716 = vmul.f32 %v2596, 0.30780134
    %v2717 = vmul.f32 %v2597, 0.30780134
    %v2718 = vmul.f32 %v2598, 0.30780134
    %v2719 = vmul.f32 %v2599, 0.30780134
    %v2720 = vmul.f32 %v2600, 0.30780134
    %v2721 = vmul.f32 %v2601, 0.30780134
    %v2722 = vmul.f32 %v2602, 0.30780134
    %v2723 = vmul.f32 %v2603, 0.30780134
    %v2724 = vmul.f32 %v2604, 0.30780134
    %v2725 = vmul.f32 %v2605, 0.30780134
    %v2726 = vmul.f32 %v2606, 0.30780134
    %v2727 = vmul.f32 %v2607, 0.30780134
    %v2728 = vmul.f32 %v2608, 0.30780134
    %v2729 = vmul.f32 %v2609, 0.30780134
    %v2730 = vmul.f32 %v2610, 0.30780134
    %v2731 = vmul.f32 %v2611, 0.30780134
    %v2732 = vmul.f32 %v2612, 0.30780134
    %v2733 = vmul.f32 %v2613, 0.30780134
    %v2734 = vmul.f32 %v2614, 0.30780134
    %v2735 = vmul.f32 %v2615, 0.30780134
    %2856 = vrot.lane.b32.xlu0 %v2616, 1
    %v2857 = vpop.permute.xlu0 %2856
    %2858 = vrot.lane.b32.xlu0 %v2617, 1
    %v2859 = vpop.permute.xlu0 %2858
    %2860 = vrot.lane.b32.xlu0 %v2618, 1
    %v2861 = vpop.permute.xlu0 %2860
    %2862 = vrot.lane.b32.xlu0 %v2619, 1
    %v2863 = vpop.permute.xlu0 %2862
    %2864 = vrot.lane.b32.xlu0 %v2620, 1
    %v2865 = vpop.permute.xlu0 %2864
    %2866 = vrot.lane.b32.xlu0 %v2621, 1
    %v2867 = vpop.permute.xlu0 %2866
    %2868 = vrot.lane.b32.xlu0 %v2622, 1
    %v2869 = vpop.permute.xlu0 %2868
    %2870 = vrot.lane.b32.xlu0 %v2623, 1
    %v2871 = vpop.permute.xlu0 %2870
    %2872 = vrot.lane.b32.xlu0 %v2624, 1
    %v2873 = vpop.permute.xlu0 %2872
    %2874 = vrot.lane.b32.xlu0 %v2625, 1
    %v2875 = vpop.permute.xlu0 %2874
    %2876 = vrot.lane.b32.xlu0 %v2626, 1
    %v2877 = vpop.permute.xlu0 %2876
    %2878 = vrot.lane.b32.xlu0 %v2627, 1
    %v2879 = vpop.permute.xlu0 %2878
    %2880 = vrot.lane.b32.xlu0 %v2628, 1
    %v2881 = vpop.permute.xlu0 %2880
    %2882 = vrot.lane.b32.xlu0 %v2629, 1
    %v2883 = vpop.permute.xlu0 %2882
    %2884 = vrot.lane.b32.xlu0 %v2630, 1
    %v2885 = vpop.permute.xlu0 %2884
    %2886 = vrot.lane.b32.xlu0 %v2631, 1
    %v2887 = vpop.permute.xlu0 %2886
    %2888 = vrot.lane.b32.xlu0 %v2632, 1
    %v2889 = vpop.permute.xlu0 %2888
    %2890 = vrot.lane.b32.xlu0 %v2633, 1
    %v2891 = vpop.permute.xlu0 %2890
    %2892 = vrot.lane.b32.xlu0 %v2634, 1
    %v2893 = vpop.permute.xlu0 %2892
    %2894 = vrot.lane.b32.xlu0 %v2635, 1
    %v2895 = vpop.permute.xlu0 %2894
    %2896 = vrot.lane.b32.xlu0 %v2636, 1
    %v2897 = vpop.permute.xlu0 %2896
    %2898 = vrot.lane.b32.xlu0 %v2637, 1
    %v2899 = vpop.permute.xlu0 %2898
    %2900 = vrot.lane.b32.xlu0 %v2638, 1
    %v2901 = vpop.permute.xlu0 %2900
    %2902 = vrot.lane.b32.xlu0 %v2639, 1
    %v2903 = vpop.permute.xlu0 %2902
    %2904 = vrot.lane.b32.xlu0 %v2640, 1
    %v2905 = vpop.permute.xlu0 %2904
    %2906 = vrot.lane.b32.xlu0 %v2641, 1
    %v2907 = vpop.permute.xlu0 %2906
    %2908 = vrot.lane.b32.xlu0 %v2642, 1
    %v2909 = vpop.permute.xlu0 %2908
    %2910 = vrot.lane.b32.xlu0 %v2643, 1
    %v2911 = vpop.permute.xlu0 %2910
    %2912 = vrot.lane.b32.xlu0 %v2644, 1
    %v2913 = vpop.permute.xlu0 %2912
    %2914 = vrot.lane.b32.xlu0 %v2645, 1
    %v2915 = vpop.permute.xlu0 %2914
    %2916 = vrot.lane.b32.xlu0 %v2646, 1
    %v2917 = vpop.permute.xlu0 %2916
    %2918 = vrot.lane.b32.xlu0 %v2647, 1
    %v2919 = vpop.permute.xlu0 %2918
    %2920 = vrot.lane.b32.xlu0 %v2648, 1
    %v2921 = vpop.permute.xlu0 %2920
    %2922 = vrot.lane.b32.xlu0 %v2649, 1
    %v2923 = vpop.permute.xlu0 %2922
    %2924 = vrot.lane.b32.xlu0 %v2650, 1
    %v2925 = vpop.permute.xlu0 %2924
    %2926 = vrot.lane.b32.xlu0 %v2651, 1
    %v2927 = vpop.permute.xlu0 %2926
    %2928 = vrot.lane.b32.xlu0 %v2652, 1
    %v2929 = vpop.permute.xlu0 %2928
    %2930 = vrot.lane.b32.xlu0 %v2653, 1
    %v2931 = vpop.permute.xlu0 %2930
    %2932 = vrot.lane.b32.xlu0 %v2654, 1
    %v2933 = vpop.permute.xlu0 %2932
    %2934 = vrot.lane.b32.xlu0 %v2655, 1
    %v2935 = vpop.permute.xlu0 %2934
    %2936 = vrot.lane.b32.xlu0 %v2656, 1
    %v2937 = vpop.permute.xlu0 %2936
    %2938 = vrot.lane.b32.xlu0 %v2657, 1
    %v2939 = vpop.permute.xlu0 %2938
    %2940 = vrot.lane.b32.xlu0 %v2658, 1
    %v2941 = vpop.permute.xlu0 %2940
    %2942 = vrot.lane.b32.xlu0 %v2659, 1
    %v2943 = vpop.permute.xlu0 %2942
    %2944 = vrot.lane.b32.xlu0 %v2660, 1
    %v2945 = vpop.permute.xlu0 %2944
    %2946 = vrot.lane.b32.xlu0 %v2661, 1
    %v2947 = vpop.permute.xlu0 %2946
    %2948 = vrot.lane.b32.xlu0 %v2662, 1
    %v2949 = vpop.permute.xlu0 %2948
    %2950 = vrot.lane.b32.xlu0 %v2663, 1
    %v2951 = vpop.permute.xlu0 %2950
    %2952 = vrot.lane.b32.xlu0 %v2664, 1
    %v2953 = vpop.permute.xlu0 %2952
    %2954 = vrot.lane.b32.xlu0 %v2665, 1
    %v2955 = vpop.permute.xlu0 %2954
    %2956 = vrot.lane.b32.xlu0 %v2666, 1
    %v2957 = vpop.permute.xlu0 %2956
    %2958 = vrot.lane.b32.xlu0 %v2667, 1
    %v2959 = vpop.permute.xlu0 %2958
    %2960 = vrot.lane.b32.xlu0 %v2668, 1
    %v2961 = vpop.permute.xlu0 %2960
    %2962 = vrot.lane.b32.xlu0 %v2669, 1
    %v2963 = vpop.permute.xlu0 %2962
    %2964 = vrot.lane.b32.xlu0 %v2670, 1
    %v2965 = vpop.permute.xlu0 %2964
    %2966 = vrot.lane.b32.xlu0 %v2671, 1
    %v2967 = vpop.permute.xlu0 %2966
    %2968 = vrot.lane.b32.xlu0 %v2672, 1
    %v2969 = vpop.permute.xlu0 %2968
    %2970 = vrot.lane.b32.xlu0 %v2673, 1
    %v2971 = vpop.permute.xlu0 %2970
    %2972 = vrot.lane.b32.xlu0 %v2674, 1
    %v2973 = vpop.permute.xlu0 %2972
    %2974 = vrot.lane.b32.xlu0 %v2675, 1
    %v2975 = vpop.permute.xlu0 %2974
    %2976 = vrot.lane.b32.xlu0 %v2676, 1
    %v2977 = vpop.permute.xlu0 %2976
    %2978 = vrot.lane.b32.xlu0 %v2677, 1
    %v2979 = vpop.permute.xlu0 %2978
    %2980 = vrot.lane.b32.xlu0 %v2678, 1
    %v2981 = vpop.permute.xlu0 %2980
    %2982 = vrot.lane.b32.xlu0 %v2679, 1
    %v2983 = vpop.permute.xlu0 %2982
    %2984 = vrot.lane.b32.xlu0 %v2680, 1
    %v2985 = vpop.permute.xlu0 %2984
    %2986 = vrot.lane.b32.xlu0 %v2681, 1
    %v2987 = vpop.permute.xlu0 %2986
    %2988 = vrot.lane.b32.xlu0 %v2682, 1
    %v2989 = vpop.permute.xlu0 %2988
    %2990 = vrot.lane.b32.xlu0 %v2683, 1
    %v2991 = vpop.permute.xlu0 %2990
    %2992 = vrot.lane.b32.xlu0 %v2684, 1
    %v2993 = vpop.permute.xlu0 %2992
    %2994 = vrot.lane.b32.xlu0 %v2685, 1
    %v2995 = vpop.permute.xlu0 %2994
    %2996 = vrot.lane.b32.xlu0 %v2686, 1
    %v2997 = vpop.permute.xlu0 %2996
    %2998 = vrot.lane.b32.xlu0 %v2687, 1
    %v2999 = vpop.permute.xlu0 %2998
    %3000 = vrot.lane.b32.xlu0 %v2688, 1
    %v3001 = vpop.permute.xlu0 %3000
    %3002 = vrot.lane.b32.xlu0 %v2689, 1
    %v3003 = vpop.permute.xlu0 %3002
    %3004 = vrot.lane.b32.xlu0 %v2690, 1
    %v3005 = vpop.permute.xlu0 %3004
    %3006 = vrot.lane.b32.xlu0 %v2691, 1
    %v3007 = vpop.permute.xlu0 %3006
    %3008 = vrot.lane.b32.xlu0 %v2692, 1
    %v3009 = vpop.permute.xlu0 %3008
    %3010 = vrot.lane.b32.xlu0 %v2693, 1
    %v3011 = vpop.permute.xlu0 %3010
    %3012 = vrot.lane.b32.xlu0 %v2694, 1
    %v3013 = vpop.permute.xlu0 %3012
    %3014 = vrot.lane.b32.xlu0 %v2695, 1
    %v3015 = vpop.permute.xlu0 %3014
    %3016 = vrot.lane.b32.xlu0 %v2696, 1
    %v3017 = vpop.permute.xlu0 %3016
    %3018 = vrot.lane.b32.xlu0 %v2697, 1
    %v3019 = vpop.permute.xlu0 %3018
    %3020 = vrot.lane.b32.xlu0 %v2698, 1
    %v3021 = vpop.permute.xlu0 %3020
    %3022 = vrot.lane.b32.xlu0 %v2699, 1
    %v3023 = vpop.permute.xlu0 %3022
    %3024 = vrot.lane.b32.xlu0 %v2700, 1
    %v3025 = vpop.permute.xlu0 %3024
    %3026 = vrot.lane.b32.xlu0 %v2701, 1
    %v3027 = vpop.permute.xlu0 %3026
    %3028 = vrot.lane.b32.xlu0 %v2702, 1
    %v3029 = vpop.permute.xlu0 %3028
    %3030 = vrot.lane.b32.xlu0 %v2703, 1
    %v3031 = vpop.permute.xlu0 %3030
    %3032 = vrot.lane.b32.xlu0 %v2704, 1
    %v3033 = vpop.permute.xlu0 %3032
    %3034 = vrot.lane.b32.xlu0 %v2705, 1
    %v3035 = vpop.permute.xlu0 %3034
    %3036 = vrot.lane.b32.xlu0 %v2706, 1
    %v3037 = vpop.permute.xlu0 %3036
    %3038 = vrot.lane.b32.xlu0 %v2707, 1
    %v3039 = vpop.permute.xlu0 %3038
    %3040 = vrot.lane.b32.xlu0 %v2708, 1
    %v3041 = vpop.permute.xlu0 %3040
    %3042 = vrot.lane.b32.xlu0 %v2709, 1
    %v3043 = vpop.permute.xlu0 %3042
    %3044 = vrot.lane.b32.xlu0 %v2710, 1
    %v3045 = vpop.permute.xlu0 %3044
    %3046 = vrot.lane.b32.xlu0 %v2711, 1
    %v3047 = vpop.permute.xlu0 %3046
    %3048 = vrot.lane.b32.xlu0 %v2712, 1
    %v3049 = vpop.permute.xlu0 %3048
    %3050 = vrot.lane.b32.xlu0 %v2713, 1
    %v3051 = vpop.permute.xlu0 %3050
    %3052 = vrot.lane.b32.xlu0 %v2714, 1
    %v3053 = vpop.permute.xlu0 %3052
    %3054 = vrot.lane.b32.xlu0 %v2715, 1
    %v3055 = vpop.permute.xlu0 %3054
    %3056 = vrot.lane.b32.xlu0 %v2716, 1
    %v3057 = vpop.permute.xlu0 %3056
    %3058 = vrot.lane.b32.xlu0 %v2717, 1
    %v3059 = vpop.permute.xlu0 %3058
    %3060 = vrot.lane.b32.xlu0 %v2718, 1
    %v3061 = vpop.permute.xlu0 %3060
    %3062 = vrot.lane.b32.xlu0 %v2719, 1
    %v3063 = vpop.permute.xlu0 %3062
    %3064 = vrot.lane.b32.xlu0 %v2720, 1
    %v3065 = vpop.permute.xlu0 %3064
    %3066 = vrot.lane.b32.xlu0 %v2721, 1
    %v3067 = vpop.permute.xlu0 %3066
    %3068 = vrot.lane.b32.xlu0 %v2722, 1
    %v3069 = vpop.permute.xlu0 %3068
    %3070 = vrot.lane.b32.xlu0 %v2723, 1
    %v3071 = vpop.permute.xlu0 %3070
    %3072 = vrot.lane.b32.xlu0 %v2724, 1
    %v3073 = vpop.permute.xlu0 %3072
    %3074 = vrot.lane.b32.xlu0 %v2725, 1
    %v3075 = vpop.permute.xlu0 %3074
    %3076 = vrot.lane.b32.xlu0 %v2726, 1
    %v3077 = vpop.permute.xlu0 %3076
    %3078 = vrot.lane.b32.xlu0 %v2727, 1
    %v3079 = vpop.permute.xlu0 %3078
    %3080 = vrot.lane.b32.xlu0 %v2728, 1
    %v3081 = vpop.permute.xlu0 %3080
    %3082 = vrot.lane.b32.xlu0 %v2729, 1
    %v3083 = vpop.permute.xlu0 %3082
    %3084 = vrot.lane.b32.xlu0 %v2730, 1
    %v3085 = vpop.permute.xlu0 %3084
    %3086 = vrot.lane.b32.xlu0 %v2731, 1
    %v3087 = vpop.permute.xlu0 %3086
    %3088 = vrot.lane.b32.xlu0 %v2732, 1
    %v3089 = vpop.permute.xlu0 %3088
    %3090 = vrot.lane.b32.xlu0 %v2733, 1
    %v3091 = vpop.permute.xlu0 %3090
    %3092 = vrot.lane.b32.xlu0 %v2734, 1
    %v3093 = vpop.permute.xlu0 %3092
    %3094 = vrot.lane.b32.xlu0 %v2735, 1
    %v3095 = vpop.permute.xlu0 %3094
    %v3216 = vadd.f32 %v1896, %v2857
    %v3217 = vadd.f32 %v1897, %v2859
    %v3218 = vadd.f32 %v1898, %v2861
    %v3219 = vadd.f32 %v1899, %v2863
    %v3220 = vadd.f32 %v1900, %v2865
    %v3221 = vadd.f32 %v1901, %v2867
    %v3222 = vadd.f32 %v1902, %v2869
    %v3223 = vadd.f32 %v1903, %v2871
    %v3224 = vadd.f32 %v1904, %v2873
    %v3225 = vadd.f32 %v1905, %v2875
    %v3226 = vadd.f32 %v1906, %v2877
    %v3227 = vadd.f32 %v1907, %v2879
    %v3228 = vadd.f32 %v1908, %v2881
    %v3229 = vadd.f32 %v1909, %v2883
    %v3230 = vadd.f32 %v1910, %v2885
    %v3231 = vadd.f32 %v1911, %v2887
    %v3232 = vadd.f32 %v1912, %v2889
    %v3233 = vadd.f32 %v1913, %v2891
    %v3234 = vadd.f32 %v1914, %v2893
    %v3235 = vadd.f32 %v1915, %v2895
    %v3236 = vadd.f32 %v1916, %v2897
    %v3237 = vadd.f32 %v1917, %v2899
    %v3238 = vadd.f32 %v1918, %v2901
    %v3239 = vadd.f32 %v1919, %v2903
    %v3240 = vadd.f32 %v1920, %v2905
    %v3241 = vadd.f32 %v1921, %v2907
    %v3242 = vadd.f32 %v1922, %v2909
    %v3243 = vadd.f32 %v1923, %v2911
    %v3244 = vadd.f32 %v1924, %v2913
    %v3245 = vadd.f32 %v1925, %v2915
    %v3246 = vadd.f32 %v1926, %v2917
    %v3247 = vadd.f32 %v1927, %v2919
    %v3248 = vadd.f32 %v1928, %v2921
    %v3249 = vadd.f32 %v1929, %v2923
    %v3250 = vadd.f32 %v1930, %v2925
    %v3251 = vadd.f32 %v1931, %v2927
    %v3252 = vadd.f32 %v1932, %v2929
    %v3253 = vadd.f32 %v1933, %v2931
    %v3254 = vadd.f32 %v1934, %v2933
    %v3255 = vadd.f32 %v1935, %v2935
    %v3256 = vadd.f32 %v1936, %v2937
    %v3257 = vadd.f32 %v1937, %v2939
    %v3258 = vadd.f32 %v1938, %v2941
    %v3259 = vadd.f32 %v1939, %v2943
    %v3260 = vadd.f32 %v1940, %v2945
    %v3261 = vadd.f32 %v1941, %v2947
    %v3262 = vadd.f32 %v1942, %v2949
    %v3263 = vadd.f32 %v1943, %v2951
    %v3264 = vadd.f32 %v1944, %v2953
    %v3265 = vadd.f32 %v1945, %v2955
    %v3266 = vadd.f32 %v1946, %v2957
    %v3267 = vadd.f32 %v1947, %v2959
    %v3268 = vadd.f32 %v1948, %v2961
    %v3269 = vadd.f32 %v1949, %v2963
    %v3270 = vadd.f32 %v1950, %v2965
    %v3271 = vadd.f32 %v1951, %v2967
    %v3272 = vadd.f32 %v1952, %v2969
    %v3273 = vadd.f32 %v1953, %v2971
    %v3274 = vadd.f32 %v1954, %v2973
    %v3275 = vadd.f32 %v1955, %v2975
    %v3276 = vadd.f32 %v1956, %v2977
    %v3277 = vadd.f32 %v1957, %v2979
    %v3278 = vadd.f32 %v1958, %v2981
    %v3279 = vadd.f32 %v1959, %v2983
    %v3280 = vadd.f32 %v1960, %v2985
    %v3281 = vadd.f32 %v1961, %v2987
    %v3282 = vadd.f32 %v1962, %v2989
    %v3283 = vadd.f32 %v1963, %v2991
    %v3284 = vadd.f32 %v1964, %v2993
    %v3285 = vadd.f32 %v1965, %v2995
    %v3286 = vadd.f32 %v1966, %v2997
    %v3287 = vadd.f32 %v1967, %v2999
    %v3288 = vadd.f32 %v1968, %v3001
    %v3289 = vadd.f32 %v1969, %v3003
    %v3290 = vadd.f32 %v1970, %v3005
    %v3291 = vadd.f32 %v1971, %v3007
    %v3292 = vadd.f32 %v1972, %v3009
    %v3293 = vadd.f32 %v1973, %v3011
    %v3294 = vadd.f32 %v1974, %v3013
    %v3295 = vadd.f32 %v1975, %v3015
    %v3296 = vadd.f32 %v1976, %v3017
    %v3297 = vadd.f32 %v1977, %v3019
    %v3298 = vadd.f32 %v1978, %v3021
    %v3299 = vadd.f32 %v1979, %v3023
    %v3300 = vadd.f32 %v1980, %v3025
    %v3301 = vadd.f32 %v1981, %v3027
    %v3302 = vadd.f32 %v1982, %v3029
    %v3303 = vadd.f32 %v1983, %v3031
    %v3304 = vadd.f32 %v1984, %v3033
    %v3305 = vadd.f32 %v1985, %v3035
    %v3306 = vadd.f32 %v1986, %v3037
    %v3307 = vadd.f32 %v1987, %v3039
    %v3308 = vadd.f32 %v1988, %v3041
    %v3309 = vadd.f32 %v1989, %v3043
    %v3310 = vadd.f32 %v1990, %v3045
    %v3311 = vadd.f32 %v1991, %v3047
    %v3312 = vadd.f32 %v1992, %v3049
    %v3313 = vadd.f32 %v1993, %v3051
    %v3314 = vadd.f32 %v1994, %v3053
    %v3315 = vadd.f32 %v1995, %v3055
    %v3316 = vadd.f32 %v1996, %v3057
    %v3317 = vadd.f32 %v1997, %v3059
    %v3318 = vadd.f32 %v1998, %v3061
    %v3319 = vadd.f32 %v1999, %v3063
    %v3320 = vadd.f32 %v2000, %v3065
    %v3321 = vadd.f32 %v2001, %v3067
    %v3322 = vadd.f32 %v2002, %v3069
    %v3323 = vadd.f32 %v2003, %v3071
    %v3324 = vadd.f32 %v2004, %v3073
    %v3325 = vadd.f32 %v2005, %v3075
    %v3326 = vadd.f32 %v2006, %v3077
    %v3327 = vadd.f32 %v2007, %v3079
    %v3328 = vadd.f32 %v2008, %v3081
    %v3329 = vadd.f32 %v2009, %v3083
    %v3330 = vadd.f32 %v2010, %v3085
    %v3331 = vadd.f32 %v2011, %v3087
    %v3332 = vadd.f32 %v2012, %v3089
    %v3333 = vadd.f32 %v2013, %v3091
    %v3334 = vadd.f32 %v2014, %v3093
    %v3335 = vadd.f32 %v2015, %v3095
    %v3336 = vmul.f32 %v3216, 0.38439733
    %v3337 = vmul.f32 %v3217, 0.38439733
    %v3338 = vmul.f32 %v3218, 0.38439733
    %v3339 = vmul.f32 %v3219, 0.38439733
    %v3340 = vmul.f32 %v3220, 0.38439733
    %v3341 = vmul.f32 %v3221, 0.38439733
    %v3342 = vmul.f32 %v3222, 0.38439733
    %v3343 = vmul.f32 %v3223, 0.38439733
    %v3344 = vmul.f32 %v3224, 0.38439733
    %v3345 = vmul.f32 %v3225, 0.38439733
    %v3346 = vmul.f32 %v3226, 0.38439733
    %v3347 = vmul.f32 %v3227, 0.38439733
    %v3348 = vmul.f32 %v3228, 0.38439733
    %v3349 = vmul.f32 %v3229, 0.38439733
    %v3350 = vmul.f32 %v3230, 0.38439733
    %v3351 = vmul.f32 %v3231, 0.38439733
    %v3352 = vmul.f32 %v3232, 0.38439733
    %v3353 = vmul.f32 %v3233, 0.38439733
    %v3354 = vmul.f32 %v3234, 0.38439733
    %v3355 = vmul.f32 %v3235, 0.38439733
    %v3356 = vmul.f32 %v3236, 0.38439733
    %v3357 = vmul.f32 %v3237, 0.38439733
    %v3358 = vmul.f32 %v3238, 0.38439733
    %v3359 = vmul.f32 %v3239, 0.38439733
    %v3360 = vmul.f32 %v3240, 0.38439733
    %v3361 = vmul.f32 %v3241, 0.38439733
    %v3362 = vmul.f32 %v3242, 0.38439733
    %v3363 = vmul.f32 %v3243, 0.38439733
    %v3364 = vmul.f32 %v3244, 0.38439733
    %v3365 = vmul.f32 %v3245, 0.38439733
    %v3366 = vmul.f32 %v3246, 0.38439733
    %v3367 = vmul.f32 %v3247, 0.38439733
    %v3368 = vmul.f32 %v3248, 0.38439733
    %v3369 = vmul.f32 %v3249, 0.38439733
    %v3370 = vmul.f32 %v3250, 0.38439733
    %v3371 = vmul.f32 %v3251, 0.38439733
    %v3372 = vmul.f32 %v3252, 0.38439733
    %v3373 = vmul.f32 %v3253, 0.38439733
    %v3374 = vmul.f32 %v3254, 0.38439733
    %v3375 = vmul.f32 %v3255, 0.38439733
    %v3376 = vmul.f32 %v3256, 0.38439733
    %v3377 = vmul.f32 %v3257, 0.38439733
    %v3378 = vmul.f32 %v3258, 0.38439733
    %v3379 = vmul.f32 %v3259, 0.38439733
    %v3380 = vmul.f32 %v3260, 0.38439733
    %v3381 = vmul.f32 %v3261, 0.38439733
    %v3382 = vmul.f32 %v3262, 0.38439733
    %v3383 = vmul.f32 %v3263, 0.38439733
    %v3384 = vmul.f32 %v3264, 0.38439733
    %v3385 = vmul.f32 %v3265, 0.38439733
    %v3386 = vmul.f32 %v3266, 0.38439733
    %v3387 = vmul.f32 %v3267, 0.38439733
    %v3388 = vmul.f32 %v3268, 0.38439733
    %v3389 = vmul.f32 %v3269, 0.38439733
    %v3390 = vmul.f32 %v3270, 0.38439733
    %v3391 = vmul.f32 %v3271, 0.38439733
    %v3392 = vmul.f32 %v3272, 0.38439733
    %v3393 = vmul.f32 %v3273, 0.38439733
    %v3394 = vmul.f32 %v3274, 0.38439733
    %v3395 = vmul.f32 %v3275, 0.38439733
    %v3396 = vmul.f32 %v3276, 0.38439733
    %v3397 = vmul.f32 %v3277, 0.38439733
    %v3398 = vmul.f32 %v3278, 0.38439733
    %v3399 = vmul.f32 %v3279, 0.38439733
    %v3400 = vmul.f32 %v3280, 0.38439733
    %v3401 = vmul.f32 %v3281, 0.38439733
    %v3402 = vmul.f32 %v3282, 0.38439733
    %v3403 = vmul.f32 %v3283, 0.38439733
    %v3404 = vmul.f32 %v3284, 0.38439733
    %v3405 = vmul.f32 %v3285, 0.38439733
    %v3406 = vmul.f32 %v3286, 0.38439733
    %v3407 = vmul.f32 %v3287, 0.38439733
    %v3408 = vmul.f32 %v3288, 0.38439733
    %v3409 = vmul.f32 %v3289, 0.38439733
    %v3410 = vmul.f32 %v3290, 0.38439733
    %v3411 = vmul.f32 %v3291, 0.38439733
    %v3412 = vmul.f32 %v3292, 0.38439733
    %v3413 = vmul.f32 %v3293, 0.38439733
    %v3414 = vmul.f32 %v3294, 0.38439733
    %v3415 = vmul.f32 %v3295, 0.38439733
    %v3416 = vmul.f32 %v3296, 0.38439733
    %v3417 = vmul.f32 %v3297, 0.38439733
    %v3418 = vmul.f32 %v3298, 0.38439733
    %v3419 = vmul.f32 %v3299, 0.38439733
    %v3420 = vmul.f32 %v3300, 0.38439733
    %v3421 = vmul.f32 %v3301, 0.38439733
    %v3422 = vmul.f32 %v3302, 0.38439733
    %v3423 = vmul.f32 %v3303, 0.38439733
    %v3424 = vmul.f32 %v3304, 0.38439733
    %v3425 = vmul.f32 %v3305, 0.38439733
    %v3426 = vmul.f32 %v3306, 0.38439733
    %v3427 = vmul.f32 %v3307, 0.38439733
    %v3428 = vmul.f32 %v3308, 0.38439733
    %v3429 = vmul.f32 %v3309, 0.38439733
    %v3430 = vmul.f32 %v3310, 0.38439733
    %v3431 = vmul.f32 %v3311, 0.38439733
    %v3432 = vmul.f32 %v3312, 0.38439733
    %v3433 = vmul.f32 %v3313, 0.38439733
    %v3434 = vmul.f32 %v3314, 0.38439733
    %v3435 = vmul.f32 %v3315, 0.38439733
    %v3436 = vmul.f32 %v3316, 0.38439733
    %v3437 = vmul.f32 %v3317, 0.38439733
    %v3438 = vmul.f32 %v3318, 0.38439733
    %v3439 = vmul.f32 %v3319, 0.38439733
    %v3440 = vmul.f32 %v3320, 0.38439733
    %v3441 = vmul.f32 %v3321, 0.38439733
    %v3442 = vmul.f32 %v3322, 0.38439733
    %v3443 = vmul.f32 %v3323, 0.38439733
    %v3444 = vmul.f32 %v3324, 0.38439733
    %v3445 = vmul.f32 %v3325, 0.38439733
    %v3446 = vmul.f32 %v3326, 0.38439733
    %v3447 = vmul.f32 %v3327, 0.38439733
    %v3448 = vmul.f32 %v3328, 0.38439733
    %v3449 = vmul.f32 %v3329, 0.38439733
    %v3450 = vmul.f32 %v3330, 0.38439733
    %v3451 = vmul.f32 %v3331, 0.38439733
    %v3452 = vmul.f32 %v3332, 0.38439733
    %v3453 = vmul.f32 %v3333, 0.38439733
    %v3454 = vmul.f32 %v3334, 0.38439733
    %v3455 = vmul.f32 %v3335, 0.38439733
    %vm3576 = vcmask 1045504
    %v3577 = vrot.slane %v3216, 2
    %v3578 = vrot.slane %v3217, 2
    %v3579 = vsel %vm3576, %v3577, %v3578
    %v3580 = vrot.slane %v3218, 2
    %v3581 = vsel %vm3576, %v3578, %v3580
    %v3582 = vrot.slane %v3219, 2
    %v3583 = vrot.slane %v3220, 2
    %v3584 = vsel %vm3576, %v3582, %v3583
    %v3585 = vrot.slane %v3221, 2
    %v3586 = vsel %vm3576, %v3583, %v3585
    %v3587 = vrot.slane %v3222, 2
    %v3588 = vrot.slane %v3223, 2
    %v3589 = vsel %vm3576, %v3587, %v3588
    %v3590 = vrot.slane %v3224, 2
    %v3591 = vsel %vm3576, %v3588, %v3590
    %v3592 = vrot.slane %v3225, 2
    %v3593 = vrot.slane %v3226, 2
    %v3594 = vsel %vm3576, %v3592, %v3593
    %v3595 = vrot.slane %v3227, 2
    %v3596 = vsel %vm3576, %v3593, %v3595
    %v3597 = vrot.slane %v3228, 2
    %v3598 = vrot.slane %v3229, 2
    %v3599 = vsel %vm3576, %v3597, %v3598
    %v3600 = vrot.slane %v3230, 2
    %v3601 = vsel %vm3576, %v3598, %v3600
    %v3602 = vrot.slane %v3231, 2
    %v3603 = vrot.slane %v3232, 2
    %v3604 = vsel %vm3576, %v3602, %v3603
    %v3605 = vrot.slane %v3233, 2
    %v3606 = vsel %vm3576, %v3603, %v3605
    %v3607 = vrot.slane %v3234, 2
    %v3608 = vrot.slane %v3235, 2
    %v3609 = vsel %vm3576, %v3607, %v3608
    %v3610 = vrot.slane %v3236, 2
    %v3611 = vsel %vm3576, %v3608, %v3610
    %v3612 = vrot.slane %v3237, 2
    %v3613 = vrot.slane %v3238, 2
    %v3614 = vsel %vm3576, %v3612, %v3613
    %v3615 = vrot.slane %v3239, 2
    %v3616 = vsel %vm3576, %v3613, %v3615
    %v3617 = vrot.slane %v3240, 2
    %v3618 = vrot.slane %v3241, 2
    %v3619 = vsel %vm3576, %v3617, %v3618
    %v3620 = vrot.slane %v3242, 2
    %v3621 = vsel %vm3576, %v3618, %v3620
    %v3622 = vrot.slane %v3243, 2
    %v3623 = vrot.slane %v3244, 2
    %v3624 = vsel %vm3576, %v3622, %v3623
    %v3625 = vrot.slane %v3245, 2
    %v3626 = vsel %vm3576, %v3623, %v3625
    %v3627 = vrot.slane %v3246, 2
    %v3628 = vrot.slane %v3247, 2
    %v3629 = vsel %vm3576, %v3627, %v3628
    %v3630 = vrot.slane %v3248, 2
    %v3631 = vsel %vm3576, %v3628, %v3630
    %v3632 = vrot.slane %v3249, 2
    %v3633 = vrot.slane %v3250, 2
    %v3634 = vsel %vm3576, %v3632, %v3633
    %v3635 = vrot.slane %v3251, 2
    %v3636 = vsel %vm3576, %v3633, %v3635
    %v3637 = vrot.slane %v3252, 2
    %v3638 = vrot.slane %v3253, 2
    %v3639 = vsel %vm3576, %v3637, %v3638
    %v3640 = vrot.slane %v3254, 2
    %v3641 = vsel %vm3576, %v3638, %v3640
    %v3642 = vrot.slane %v3255, 2
    %v3643 = vrot.slane %v3256, 2
    %v3644 = vsel %vm3576, %v3642, %v3643
    %v3645 = vrot.slane %v3257, 2
    %v3646 = vsel %vm3576, %v3643, %v3645
    %v3647 = vrot.slane %v3258, 2
    %v3648 = vrot.slane %v3259, 2
    %v3649 = vsel %vm3576, %v3647, %v3648
    %v3650 = vrot.slane %v3260, 2
    %v3651 = vsel %vm3576, %v3648, %v3650
    %v3652 = vrot.slane %v3261, 2
    %v3653 = vrot.slane %v3262, 2
    %v3654 = vsel %vm3576, %v3652, %v3653
    %v3655 = vrot.slane %v3263, 2
    %v3656 = vsel %vm3576, %v3653, %v3655
    %v3657 = vrot.slane %v3264, 2
    %v3658 = vrot.slane %v3265, 2
    %v3659 = vsel %vm3576, %v3657, %v3658
    %v3660 = vrot.slane %v3266, 2
    %v3661 = vsel %vm3576, %v3658, %v3660
    %v3662 = vrot.slane %v3267, 2
    %v3663 = vrot.slane %v3268, 2
    %v3664 = vsel %vm3576, %v3662, %v3663
    %v3665 = vrot.slane %v3269, 2
    %v3666 = vsel %vm3576, %v3663, %v3665
    %v3667 = vrot.slane %v3270, 2
    %v3668 = vrot.slane %v3271, 2
    %v3669 = vsel %vm3576, %v3667, %v3668
    %v3670 = vrot.slane %v3272, 2
    %v3671 = vsel %vm3576, %v3668, %v3670
    %v3672 = vrot.slane %v3273, 2
    %v3673 = vrot.slane %v3274, 2
    %v3674 = vsel %vm3576, %v3672, %v3673
    %v3675 = vrot.slane %v3275, 2
    %v3676 = vsel %vm3576, %v3673, %v3675
    %v3677 = vrot.slane %v3276, 2
    %v3678 = vrot.slane %v3277, 2
    %v3679 = vsel %vm3576, %v3677, %v3678
    %v3680 = vrot.slane %v3278, 2
    %v3681 = vsel %vm3576, %v3678, %v3680
    %v3682 = vrot.slane %v3279, 2
    %v3683 = vrot.slane %v3280, 2
    %v3684 = vsel %vm3576, %v3682, %v3683
    %v3685 = vrot.slane %v3281, 2
    %v3686 = vsel %vm3576, %v3683, %v3685
    %v3687 = vrot.slane %v3282, 2
    %v3688 = vrot.slane %v3283, 2
    %v3689 = vsel %vm3576, %v3687, %v3688
    %v3690 = vrot.slane %v3284, 2
    %v3691 = vsel %vm3576, %v3688, %v3690
    %v3692 = vrot.slane %v3285, 2
    %v3693 = vrot.slane %v3286, 2
    %v3694 = vsel %vm3576, %v3692, %v3693
    %v3695 = vrot.slane %v3287, 2
    %v3696 = vsel %vm3576, %v3693, %v3695
    %v3697 = vrot.slane %v3288, 2
    %v3698 = vrot.slane %v3289, 2
    %v3699 = vsel %vm3576, %v3697, %v3698
    %v3700 = vrot.slane %v3290, 2
    %v3701 = vsel %vm3576, %v3698, %v3700
    %v3702 = vrot.slane %v3291, 2
    %v3703 = vrot.slane %v3292, 2
    %v3704 = vsel %vm3576, %v3702, %v3703
    %v3705 = vrot.slane %v3293, 2
    %v3706 = vsel %vm3576, %v3703, %v3705
    %v3707 = vrot.slane %v3294, 2
    %v3708 = vrot.slane %v3295, 2
    %v3709 = vsel %vm3576, %v3707, %v3708
    %v3710 = vrot.slane %v3296, 2
    %v3711 = vsel %vm3576, %v3708, %v3710
    %v3712 = vrot.slane %v3297, 2
    %v3713 = vrot.slane %v3298, 2
    %v3714 = vsel %vm3576, %v3712, %v3713
    %v3715 = vrot.slane %v3299, 2
    %v3716 = vsel %vm3576, %v3713, %v3715
    %v3717 = vrot.slane %v3300, 2
    %v3718 = vrot.slane %v3301, 2
    %v3719 = vsel %vm3576, %v3717, %v3718
    %v3720 = vrot.slane %v3302, 2
    %v3721 = vsel %vm3576, %v3718, %v3720
    %v3722 = vrot.slane %v3303, 2
    %v3723 = vrot.slane %v3304, 2
    %v3724 = vsel %vm3576, %v3722, %v3723
    %v3725 = vrot.slane %v3305, 2
    %v3726 = vsel %vm3576, %v3723, %v3725
    %v3727 = vrot.slane %v3306, 2
    %v3728 = vrot.slane %v3307, 2
    %v3729 = vsel %vm3576, %v3727, %v3728
    %v3730 = vrot.slane %v3308, 2
    %v3731 = vsel %vm3576, %v3728, %v3730
    %v3732 = vrot.slane %v3309, 2
    %v3733 = vrot.slane %v3310, 2
    %v3734 = vsel %vm3576, %v3732, %v3733
    %v3735 = vrot.slane %v3311, 2
    %v3736 = vsel %vm3576, %v3733, %v3735
    %v3737 = vrot.slane %v3312, 2
    %v3738 = vrot.slane %v3313, 2
    %v3739 = vsel %vm3576, %v3737, %v3738
    %v3740 = vrot.slane %v3314, 2
    %v3741 = vsel %vm3576, %v3738, %v3740
    %v3742 = vrot.slane %v3315, 2
    %v3743 = vrot.slane %v3316, 2
    %v3744 = vsel %vm3576, %v3742, %v3743
    %v3745 = vrot.slane %v3317, 2
    %v3746 = vsel %vm3576, %v3743, %v3745
    %v3747 = vrot.slane %v3318, 2
    %v3748 = vrot.slane %v3319, 2
    %v3749 = vsel %vm3576, %v3747, %v3748
    %v3750 = vrot.slane %v3320, 2
    %v3751 = vsel %vm3576, %v3748, %v3750
    %v3752 = vrot.slane %v3321, 2
    %v3753 = vrot.slane %v3322, 2
    %v3754 = vsel %vm3576, %v3752, %v3753
    %v3755 = vrot.slane %v3323, 2
    %v3756 = vsel %vm3576, %v3753, %v3755
    %v3757 = vrot.slane %v3324, 2
    %v3758 = vrot.slane %v3325, 2
    %v3759 = vsel %vm3576, %v3757, %v3758
    %v3760 = vrot.slane %v3326, 2
    %v3761 = vsel %vm3576, %v3758, %v3760
    %v3762 = vrot.slane %v3327, 2
    %v3763 = vrot.slane %v3328, 2
    %v3764 = vsel %vm3576, %v3762, %v3763
    %v3765 = vrot.slane %v3329, 2
    %v3766 = vsel %vm3576, %v3763, %v3765
    %v3767 = vrot.slane %v3330, 2
    %v3768 = vrot.slane %v3331, 2
    %v3769 = vsel %vm3576, %v3767, %v3768
    %v3770 = vrot.slane %v3332, 2
    %v3771 = vsel %vm3576, %v3768, %v3770
    %v3772 = vrot.slane %v3333, 2
    %v3773 = vrot.slane %v3334, 2
    %v3774 = vsel %vm3576, %v3772, %v3773
    %v3775 = vrot.slane %v3335, 2
    %v3776 = vsel %vm3576, %v3773, %v3775
    %v3857 = vadd.f32 %v3216, %v3579
    %v3858 = vadd.f32 %v3217, %v3581
    %v3859 = vadd.f32 %v3219, %v3584
    %v3860 = vadd.f32 %v3220, %v3586
    %v3861 = vadd.f32 %v3222, %v3589
    %v3862 = vadd.f32 %v3223, %v3591
    %v3863 = vadd.f32 %v3225, %v3594
    %v3864 = vadd.f32 %v3226, %v3596
    %v3865 = vadd.f32 %v3228, %v3599
    %v3866 = vadd.f32 %v3229, %v3601
    %v3867 = vadd.f32 %v3231, %v3604
    %v3868 = vadd.f32 %v3232, %v3606
    %v3869 = vadd.f32 %v3234, %v3609
    %v3870 = vadd.f32 %v3235, %v3611
    %v3871 = vadd.f32 %v3237, %v3614
    %v3872 = vadd.f32 %v3238, %v3616
    %v3873 = vadd.f32 %v3240, %v3619
    %v3874 = vadd.f32 %v3241, %v3621
    %v3875 = vadd.f32 %v3243, %v3624
    %v3876 = vadd.f32 %v3244, %v3626
    %v3877 = vadd.f32 %v3246, %v3629
    %v3878 = vadd.f32 %v3247, %v3631
    %v3879 = vadd.f32 %v3249, %v3634
    %v3880 = vadd.f32 %v3250, %v3636
    %v3881 = vadd.f32 %v3252, %v3639
    %v3882 = vadd.f32 %v3253, %v3641
    %v3883 = vadd.f32 %v3255, %v3644
    %v3884 = vadd.f32 %v3256, %v3646
    %v3885 = vadd.f32 %v3258, %v3649
    %v3886 = vadd.f32 %v3259, %v3651
    %v3887 = vadd.f32 %v3261, %v3654
    %v3888 = vadd.f32 %v3262, %v3656
    %v3889 = vadd.f32 %v3264, %v3659
    %v3890 = vadd.f32 %v3265, %v3661
    %v3891 = vadd.f32 %v3267, %v3664
    %v3892 = vadd.f32 %v3268, %v3666
    %v3893 = vadd.f32 %v3270, %v3669
    %v3894 = vadd.f32 %v3271, %v3671
    %v3895 = vadd.f32 %v3273, %v3674
    %v3896 = vadd.f32 %v3274, %v3676
    %v3897 = vadd.f32 %v3276, %v3679
    %v3898 = vadd.f32 %v3277, %v3681
    %v3899 = vadd.f32 %v3279, %v3684
    %v3900 = vadd.f32 %v3280, %v3686
    %v3901 = vadd.f32 %v3282, %v3689
    %v3902 = vadd.f32 %v3283, %v3691
    %v3903 = vadd.f32 %v3285, %v3694
    %v3904 = vadd.f32 %v3286, %v3696
    %v3905 = vadd.f32 %v3288, %v3699
    %v3906 = vadd.f32 %v3289, %v3701
    %v3907 = vadd.f32 %v3291, %v3704
    %v3908 = vadd.f32 %v3292, %v3706
    %v3909 = vadd.f32 %v3294, %v3709
    %v3910 = vadd.f32 %v3295, %v3711
    %v3911 = vadd.f32 %v3297, %v3714
    %v3912 = vadd.f32 %v3298, %v3716
    %v3913 = vadd.f32 %v3300, %v3719
    %v3914 = vadd.f32 %v3301, %v3721
    %v3915 = vadd.f32 %v3303, %v3724
    %v3916 = vadd.f32 %v3304, %v3726
    %v3917 = vadd.f32 %v3306, %v3729
    %v3918 = vadd.f32 %v3307, %v3731
    %v3919 = vadd.f32 %v3309, %v3734
    %v3920 = vadd.f32 %v3310, %v3736
    %v3921 = vadd.f32 %v3312, %v3739
    %v3922 = vadd.f32 %v3313, %v3741
    %v3923 = vadd.f32 %v3315, %v3744
    %v3924 = vadd.f32 %v3316, %v3746
    %v3925 = vadd.f32 %v3318, %v3749
    %v3926 = vadd.f32 %v3319, %v3751
    %v3927 = vadd.f32 %v3321, %v3754
    %v3928 = vadd.f32 %v3322, %v3756
    %v3929 = vadd.f32 %v3324, %v3759
    %v3930 = vadd.f32 %v3325, %v3761
    %v3931 = vadd.f32 %v3327, %v3764
    %v3932 = vadd.f32 %v3328, %v3766
    %v3933 = vadd.f32 %v3330, %v3769
    %v3934 = vadd.f32 %v3331, %v3771
    %v3935 = vadd.f32 %v3333, %v3774
    %v3936 = vadd.f32 %v3334, %v3776
    %v3937 = vmul.f32 %v3857, 0.30780134
    %v3938 = vmul.f32 %v3858, 0.30780134
    %v3939 = vmul.f32 %v3859, 0.30780134
    %v3940 = vmul.f32 %v3860, 0.30780134
    %v3941 = vmul.f32 %v3861, 0.30780134
    %v3942 = vmul.f32 %v3862, 0.30780134
    %v3943 = vmul.f32 %v3863, 0.30780134
    %v3944 = vmul.f32 %v3864, 0.30780134
    %v3945 = vmul.f32 %v3865, 0.30780134
    %v3946 = vmul.f32 %v3866, 0.30780134
    %v3947 = vmul.f32 %v3867, 0.30780134
    %v3948 = vmul.f32 %v3868, 0.30780134
    %v3949 = vmul.f32 %v3869, 0.30780134
    %v3950 = vmul.f32 %v3870, 0.30780134
    %v3951 = vmul.f32 %v3871, 0.30780134
    %v3952 = vmul.f32 %v3872, 0.30780134
    %v3953 = vmul.f32 %v3873, 0.30780134
    %v3954 = vmul.f32 %v3874, 0.30780134
    %v3955 = vmul.f32 %v3875, 0.30780134
    %v3956 = vmul.f32 %v3876, 0.30780134
    %v3957 = vmul.f32 %v3877, 0.30780134
    %v3958 = vmul.f32 %v3878, 0.30780134
    %v3959 = vmul.f32 %v3879, 0.30780134
    %v3960 = vmul.f32 %v3880, 0.30780134
    %v3961 = vmul.f32 %v3881, 0.30780134
    %v3962 = vmul.f32 %v3882, 0.30780134
    %v3963 = vmul.f32 %v3883, 0.30780134
    %v3964 = vmul.f32 %v3884, 0.30780134
    %v3965 = vmul.f32 %v3885, 0.30780134
    %v3966 = vmul.f32 %v3886, 0.30780134
    %v3967 = vmul.f32 %v3887, 0.30780134
    %v3968 = vmul.f32 %v3888, 0.30780134
    %v3969 = vmul.f32 %v3889, 0.30780134
    %v3970 = vmul.f32 %v3890, 0.30780134
    %v3971 = vmul.f32 %v3891, 0.30780134
    %v3972 = vmul.f32 %v3892, 0.30780134
    %v3973 = vmul.f32 %v3893, 0.30780134
    %v3974 = vmul.f32 %v3894, 0.30780134
    %v3975 = vmul.f32 %v3895, 0.30780134
    %v3976 = vmul.f32 %v3896, 0.30780134
    %v3977 = vmul.f32 %v3897, 0.30780134
    %v3978 = vmul.f32 %v3898, 0.30780134
    %v3979 = vmul.f32 %v3899, 0.30780134
    %v3980 = vmul.f32 %v3900, 0.30780134
    %v3981 = vmul.f32 %v3901, 0.30780134
    %v3982 = vmul.f32 %v3902, 0.30780134
    %v3983 = vmul.f32 %v3903, 0.30780134
    %v3984 = vmul.f32 %v3904, 0.30780134
    %v3985 = vmul.f32 %v3905, 0.30780134
    %v3986 = vmul.f32 %v3906, 0.30780134
    %v3987 = vmul.f32 %v3907, 0.30780134
    %v3988 = vmul.f32 %v3908, 0.30780134
    %v3989 = vmul.f32 %v3909, 0.30780134
    %v3990 = vmul.f32 %v3910, 0.30780134
    %v3991 = vmul.f32 %v3911, 0.30780134
    %v3992 = vmul.f32 %v3912, 0.30780134
    %v3993 = vmul.f32 %v3913, 0.30780134
    %v3994 = vmul.f32 %v3914, 0.30780134
    %v3995 = vmul.f32 %v3915, 0.30780134
    %v3996 = vmul.f32 %v3916, 0.30780134
    %v3997 = vmul.f32 %v3917, 0.30780134
    %v3998 = vmul.f32 %v3918, 0.30780134
    %v3999 = vmul.f32 %v3919, 0.30780134
    %v4000 = vmul.f32 %v3920, 0.30780134
    %v4001 = vmul.f32 %v3921, 0.30780134
    %v4002 = vmul.f32 %v3922, 0.30780134
    %v4003 = vmul.f32 %v3923, 0.30780134
    %v4004 = vmul.f32 %v3924, 0.30780134
    %v4005 = vmul.f32 %v3925, 0.30780134
    %v4006 = vmul.f32 %v3926, 0.30780134
    %v4007 = vmul.f32 %v3927, 0.30780134
    %v4008 = vmul.f32 %v3928, 0.30780134
    %v4009 = vmul.f32 %v3929, 0.30780134
    %v4010 = vmul.f32 %v3930, 0.30780134
    %v4011 = vmul.f32 %v3931, 0.30780134
    %v4012 = vmul.f32 %v3932, 0.30780134
    %v4013 = vmul.f32 %v3933, 0.30780134
    %v4014 = vmul.f32 %v3934, 0.30780134
    %v4015 = vmul.f32 %v3935, 0.30780134
    %v4016 = vmul.f32 %v3936, 0.30780134
    %vm4097 = vcmask 1040384
    %v4098 = vrot.slane %v3937, 7
    %v4099 = vrot.slane %v3938, 7
    %v4100 = vsel %vm4097, %v4098, %v4099
    %v4101 = vrot.slane %v3939, 7
    %v4102 = vrot.slane %v3940, 7
    %v4103 = vsel %vm4097, %v4101, %v4102
    %v4104 = vrot.slane %v3941, 7
    %v4105 = vrot.slane %v3942, 7
    %v4106 = vsel %vm4097, %v4104, %v4105
    %v4107 = vrot.slane %v3943, 7
    %v4108 = vrot.slane %v3944, 7
    %v4109 = vsel %vm4097, %v4107, %v4108
    %v4110 = vrot.slane %v3945, 7
    %v4111 = vrot.slane %v3946, 7
    %v4112 = vsel %vm4097, %v4110, %v4111
    %v4113 = vrot.slane %v3947, 7
    %v4114 = vrot.slane %v3948, 7
    %v4115 = vsel %vm4097, %v4113, %v4114
    %v4116 = vrot.slane %v3949, 7
    %v4117 = vrot.slane %v3950, 7
    %v4118 = vsel %vm4097, %v4116, %v4117
    %v4119 = vrot.slane %v3951, 7
    %v4120 = vrot.slane %v3952, 7
    %v4121 = vsel %vm4097, %v4119, %v4120
    %v4122 = vrot.slane %v3953, 7
    %v4123 = vrot.slane %v3954, 7
    %v4124 = vsel %vm4097, %v4122, %v4123
    %v4125 = vrot.slane %v3955, 7
    %v4126 = vrot.slane %v3956, 7
    %v4127 = vsel %vm4097, %v4125, %v4126
    %v4128 = vrot.slane %v3957, 7
    %v4129 = vrot.slane %v3958, 7
    %v4130 = vsel %vm4097, %v4128, %v4129
    %v4131 = vrot.slane %v3959, 7
    %v4132 = vrot.slane %v3960, 7
    %v4133 = vsel %vm4097, %v4131, %v4132
    %v4134 = vrot.slane %v3961, 7
    %v4135 = vrot.slane %v3962, 7
    %v4136 = vsel %vm4097, %v4134, %v4135
    %v4137 = vrot.slane %v3963, 7
    %v4138 = vrot.slane %v3964, 7
    %v4139 = vsel %vm4097, %v4137, %v4138
    %v4140 = vrot.slane %v3965, 7
    %v4141 = vrot.slane %v3966, 7
    %v4142 = vsel %vm4097, %v4140, %v4141
    %v4143 = vrot.slane %v3967, 7
    %v4144 = vrot.slane %v3968, 7
    %v4145 = vsel %vm4097, %v4143, %v4144
    %v4146 = vrot.slane %v3969, 7
    %v4147 = vrot.slane %v3970, 7
    %v4148 = vsel %vm4097, %v4146, %v4147
    %v4149 = vrot.slane %v3971, 7
    %v4150 = vrot.slane %v3972, 7
    %v4151 = vsel %vm4097, %v4149, %v4150
    %v4152 = vrot.slane %v3973, 7
    %v4153 = vrot.slane %v3974, 7
    %v4154 = vsel %vm4097, %v4152, %v4153
    %v4155 = vrot.slane %v3975, 7
    %v4156 = vrot.slane %v3976, 7
    %v4157 = vsel %vm4097, %v4155, %v4156
    %v4158 = vrot.slane %v3977, 7
    %v4159 = vrot.slane %v3978, 7
    %v4160 = vsel %vm4097, %v4158, %v4159
    %v4161 = vrot.slane %v3979, 7
    %v4162 = vrot.slane %v3980, 7
    %v4163 = vsel %vm4097, %v4161, %v4162
    %v4164 = vrot.slane %v3981, 7
    %v4165 = vrot.slane %v3982, 7
    %v4166 = vsel %vm4097, %v4164, %v4165
    %v4167 = vrot.slane %v3983, 7
    %v4168 = vrot.slane %v3984, 7
    %v4169 = vsel %vm4097, %v4167, %v4168
    %v4170 = vrot.slane %v3985, 7
    %v4171 = vrot.slane %v3986, 7
    %v4172 = vsel %vm4097, %v4170, %v4171
    %v4173 = vrot.slane %v3987, 7
    %v4174 = vrot.slane %v3988, 7
    %v4175 = vsel %vm4097, %v4173, %v4174
    %v4176 = vrot.slane %v3989, 7
    %v4177 = vrot.slane %v3990, 7
    %v4178 = vsel %vm4097, %v4176, %v4177
    %v4179 = vrot.slane %v3991, 7
    %v4180 = vrot.slane %v3992, 7
    %v4181 = vsel %vm4097, %v4179, %v4180
    %v4182 = vrot.slane %v3993, 7
    %v4183 = vrot.slane %v3994, 7
    %v4184 = vsel %vm4097, %v4182, %v4183
    %v4185 = vrot.slane %v3995, 7
    %v4186 = vrot.slane %v3996, 7
    %v4187 = vsel %vm4097, %v4185, %v4186
    %v4188 = vrot.slane %v3997, 7
    %v4189 = vrot.slane %v3998, 7
    %v4190 = vsel %vm4097, %v4188, %v4189
    %v4191 = vrot.slane %v3999, 7
    %v4192 = vrot.slane %v4000, 7
    %v4193 = vsel %vm4097, %v4191, %v4192
    %v4194 = vrot.slane %v4001, 7
    %v4195 = vrot.slane %v4002, 7
    %v4196 = vsel %vm4097, %v4194, %v4195
    %v4197 = vrot.slane %v4003, 7
    %v4198 = vrot.slane %v4004, 7
    %v4199 = vsel %vm4097, %v4197, %v4198
    %v4200 = vrot.slane %v4005, 7
    %v4201 = vrot.slane %v4006, 7
    %v4202 = vsel %vm4097, %v4200, %v4201
    %v4203 = vrot.slane %v4007, 7
    %v4204 = vrot.slane %v4008, 7
    %v4205 = vsel %vm4097, %v4203, %v4204
    %v4206 = vrot.slane %v4009, 7
    %v4207 = vrot.slane %v4010, 7
    %v4208 = vsel %vm4097, %v4206, %v4207
    %v4209 = vrot.slane %v4011, 7
    %v4210 = vrot.slane %v4012, 7
    %v4211 = vsel %vm4097, %v4209, %v4210
    %v4212 = vrot.slane %v4013, 7
    %v4213 = vrot.slane %v4014, 7
    %v4214 = vsel %vm4097, %v4212, %v4213
    %v4215 = vrot.slane %v4015, 7
    %v4216 = vrot.slane %v4016, 7
    %v4217 = vsel %vm4097, %v4215, %v4216
    %v4338 = vadd.f32 %v3336, %v4098
    %v4339 = vadd.f32 %v3337, %v4100
    %v4340 = vadd.f32 %v3338, %v4099
    %v4341 = vadd.f32 %v3339, %v4101
    %v4342 = vadd.f32 %v3340, %v4103
    %v4343 = vadd.f32 %v3341, %v4102
    %v4344 = vadd.f32 %v3342, %v4104
    %v4345 = vadd.f32 %v3343, %v4106
    %v4346 = vadd.f32 %v3344, %v4105
    %v4347 = vadd.f32 %v3345, %v4107
    %v4348 = vadd.f32 %v3346, %v4109
    %v4349 = vadd.f32 %v3347, %v4108
    %v4350 = vadd.f32 %v3348, %v4110
    %v4351 = vadd.f32 %v3349, %v4112
    %v4352 = vadd.f32 %v3350, %v4111
    %v4353 = vadd.f32 %v3351, %v4113
    %v4354 = vadd.f32 %v3352, %v4115
    %v4355 = vadd.f32 %v3353, %v4114
    %v4356 = vadd.f32 %v3354, %v4116
    %v4357 = vadd.f32 %v3355, %v4118
    %v4358 = vadd.f32 %v3356, %v4117
    %v4359 = vadd.f32 %v3357, %v4119
    %v4360 = vadd.f32 %v3358, %v4121
    %v4361 = vadd.f32 %v3359, %v4120
    %v4362 = vadd.f32 %v3360, %v4122
    %v4363 = vadd.f32 %v3361, %v4124
    %v4364 = vadd.f32 %v3362, %v4123
    %v4365 = vadd.f32 %v3363, %v4125
    %v4366 = vadd.f32 %v3364, %v4127
    %v4367 = vadd.f32 %v3365, %v4126
    %v4368 = vadd.f32 %v3366, %v4128
    %v4369 = vadd.f32 %v3367, %v4130
    %v4370 = vadd.f32 %v3368, %v4129
    %v4371 = vadd.f32 %v3369, %v4131
    %v4372 = vadd.f32 %v3370, %v4133
    %v4373 = vadd.f32 %v3371, %v4132
    %v4374 = vadd.f32 %v3372, %v4134
    %v4375 = vadd.f32 %v3373, %v4136
    %v4376 = vadd.f32 %v3374, %v4135
    %v4377 = vadd.f32 %v3375, %v4137
    %v4378 = vadd.f32 %v3376, %v4139
    %v4379 = vadd.f32 %v3377, %v4138
    %v4380 = vadd.f32 %v3378, %v4140
    %v4381 = vadd.f32 %v3379, %v4142
    %v4382 = vadd.f32 %v3380, %v4141
    %v4383 = vadd.f32 %v3381, %v4143
    %v4384 = vadd.f32 %v3382, %v4145
    %v4385 = vadd.f32 %v3383, %v4144
    %v4386 = vadd.f32 %v3384, %v4146
    %v4387 = vadd.f32 %v3385, %v4148
    %v4388 = vadd.f32 %v3386, %v4147
    %v4389 = vadd.f32 %v3387, %v4149
    %v4390 = vadd.f32 %v3388, %v4151
    %v4391 = vadd.f32 %v3389, %v4150
    %v4392 = vadd.f32 %v3390, %v4152
    %v4393 = vadd.f32 %v3391, %v4154
    %v4394 = vadd.f32 %v3392, %v4153
    %v4395 = vadd.f32 %v3393, %v4155
    %v4396 = vadd.f32 %v3394, %v4157
    %v4397 = vadd.f32 %v3395, %v4156
    %v4398 = vadd.f32 %v3396, %v4158
    %v4399 = vadd.f32 %v3397, %v4160
    %v4400 = vadd.f32 %v3398, %v4159
    %v4401 = vadd.f32 %v3399, %v4161
    %v4402 = vadd.f32 %v3400, %v4163
    %v4403 = vadd.f32 %v3401, %v4162
    %v4404 = vadd.f32 %v3402, %v4164
    %v4405 = vadd.f32 %v3403, %v4166
    %v4406 = vadd.f32 %v3404, %v4165
    %v4407 = vadd.f32 %v3405, %v4167
    %v4408 = vadd.f32 %v3406, %v4169
    %v4409 = vadd.f32 %v3407, %v4168
    %v4410 = vadd.f32 %v3408, %v4170
    %v4411 = vadd.f32 %v3409, %v4172
    %v4412 = vadd.f32 %v3410, %v4171
    %v4413 = vadd.f32 %v3411, %v4173
    %v4414 = vadd.f32 %v3412, %v4175
    %v4415 = vadd.f32 %v3413, %v4174
    %v4416 = vadd.f32 %v3414, %v4176
    %v4417 = vadd.f32 %v3415, %v4178
    %v4418 = vadd.f32 %v3416, %v4177
    %v4419 = vadd.f32 %v3417, %v4179
    %v4420 = vadd.f32 %v3418, %v4181
    %v4421 = vadd.f32 %v3419, %v4180
    %v4422 = vadd.f32 %v3420, %v4182
    %v4423 = vadd.f32 %v3421, %v4184
    %v4424 = vadd.f32 %v3422, %v4183
    %v4425 = vadd.f32 %v3423, %v4185
    %v4426 = vadd.f32 %v3424, %v4187
    %v4427 = vadd.f32 %v3425, %v4186
    %v4428 = vadd.f32 %v3426, %v4188
    %v4429 = vadd.f32 %v3427, %v4190
    %v4430 = vadd.f32 %v3428, %v4189
    %v4431 = vadd.f32 %v3429, %v4191
    %v4432 = vadd.f32 %v3430, %v4193
    %v4433 = vadd.f32 %v3431, %v4192
    %v4434 = vadd.f32 %v3432, %v4194
    %v4435 = vadd.f32 %v3433, %v4196
    %v4436 = vadd.f32 %v3434, %v4195
    %v4437 = vadd.f32 %v3435, %v4197
    %v4438 = vadd.f32 %v3436, %v4199
    %v4439 = vadd.f32 %v3437, %v4198
    %v4440 = vadd.f32 %v3438, %v4200
    %v4441 = vadd.f32 %v3439, %v4202
    %v4442 = vadd.f32 %v3440, %v4201
    %v4443 = vadd.f32 %v3441, %v4203
    %v4444 = vadd.f32 %v3442, %v4205
    %v4445 = vadd.f32 %v3443, %v4204
    %v4446 = vadd.f32 %v3444, %v4206
    %v4447 = vadd.f32 %v3445, %v4208
    %v4448 = vadd.f32 %v3446, %v4207
    %v4449 = vadd.f32 %v3447, %v4209
    %v4450 = vadd.f32 %v3448, %v4211
    %v4451 = vadd.f32 %v3449, %v4210
    %v4452 = vadd.f32 %v3450, %v4212
    %v4453 = vadd.f32 %v3451, %v4214
    %v4454 = vadd.f32 %v3452, %v4213
    %v4455 = vadd.f32 %v3453, %v4215
    %v4456 = vadd.f32 %v3454, %v4217
    %v4457 = vadd.f32 %v3455, %v4216
    %v4458 = vmul.f32 %v4338, %v4338
    %v4459 = vmul.f32 %v4339, %v4339
    %v4460 = vmul.f32 %v4340, %v4340
    %v4461 = vmul.f32 %v4341, %v4341
    %v4462 = vmul.f32 %v4342, %v4342
    %v4463 = vmul.f32 %v4343, %v4343
    %v4464 = vmul.f32 %v4344, %v4344
    %v4465 = vmul.f32 %v4345, %v4345
    %v4466 = vmul.f32 %v4346, %v4346
    %v4467 = vmul.f32 %v4347, %v4347
    %v4468 = vmul.f32 %v4348, %v4348
    %v4469 = vmul.f32 %v4349, %v4349
    %v4470 = vmul.f32 %v4350, %v4350
    %v4471 = vmul.f32 %v4351, %v4351
    %v4472 = vmul.f32 %v4352, %v4352
    %v4473 = vmul.f32 %v4353, %v4353
    %v4474 = vmul.f32 %v4354, %v4354
    %v4475 = vmul.f32 %v4355, %v4355
    %v4476 = vmul.f32 %v4356, %v4356
    %v4477 = vmul.f32 %v4357, %v4357
    %v4478 = vmul.f32 %v4358, %v4358
    %v4479 = vmul.f32 %v4359, %v4359
    %v4480 = vmul.f32 %v4360, %v4360
    %v4481 = vmul.f32 %v4361, %v4361
    %v4482 = vmul.f32 %v4362, %v4362
    %v4483 = vmul.f32 %v4363, %v4363
    %v4484 = vmul.f32 %v4364, %v4364
    %v4485 = vmul.f32 %v4365, %v4365
    %v4486 = vmul.f32 %v4366, %v4366
    %v4487 = vmul.f32 %v4367, %v4367
    %v4488 = vmul.f32 %v4368, %v4368
    %v4489 = vmul.f32 %v4369, %v4369
    %v4490 = vmul.f32 %v4370, %v4370
    %v4491 = vmul.f32 %v4371, %v4371
    %v4492 = vmul.f32 %v4372, %v4372
    %v4493 = vmul.f32 %v4373, %v4373
    %v4494 = vmul.f32 %v4374, %v4374
    %v4495 = vmul.f32 %v4375, %v4375
    %v4496 = vmul.f32 %v4376, %v4376
    %v4497 = vmul.f32 %v4377, %v4377
    %v4498 = vmul.f32 %v4378, %v4378
    %v4499 = vmul.f32 %v4379, %v4379
    %v4500 = vmul.f32 %v4380, %v4380
    %v4501 = vmul.f32 %v4381, %v4381
    %v4502 = vmul.f32 %v4382, %v4382
    %v4503 = vmul.f32 %v4383, %v4383
    %v4504 = vmul.f32 %v4384, %v4384
    %v4505 = vmul.f32 %v4385, %v4385
    %v4506 = vmul.f32 %v4338, %v4362
    %v4507 = vmul.f32 %v4339, %v4363
    %v4508 = vmul.f32 %v4340, %v4364
    %v4509 = vmul.f32 %v4341, %v4365
    %v4510 = vmul.f32 %v4342, %v4366
    %v4511 = vmul.f32 %v4343, %v4367
    %v4512 = vmul.f32 %v4344, %v4368
    %v4513 = vmul.f32 %v4345, %v4369
    %v4514 = vmul.f32 %v4346, %v4370
    %v4515 = vmul.f32 %v4347, %v4371
    %v4516 = vmul.f32 %v4348, %v4372
    %v4517 = vmul.f32 %v4349, %v4373
    %v4518 = vmul.f32 %v4350, %v4374
    %v4519 = vmul.f32 %v4351, %v4375
    %v4520 = vmul.f32 %v4352, %v4376
    %v4521 = vmul.f32 %v4353, %v4377
    %v4522 = vmul.f32 %v4354, %v4378
    %v4523 = vmul.f32 %v4355, %v4379
    %v4524 = vmul.f32 %v4356, %v4380
    %v4525 = vmul.f32 %v4357, %v4381
    %v4526 = vmul.f32 %v4358, %v4382
    %v4527 = vmul.f32 %v4359, %v4383
    %v4528 = vmul.f32 %v4360, %v4384
    %v4529 = vmul.f32 %v4361, %v4385
    %v4530 = vsub.f32 %v4386, %v4458
    %v4531 = vsub.f32 %v4387, %v4459
    %v4532 = vsub.f32 %v4388, %v4460
    %v4533 = vsub.f32 %v4389, %v4461
    %v4534 = vsub.f32 %v4390, %v4462
    %v4535 = vsub.f32 %v4391, %v4463
    %v4536 = vsub.f32 %v4392, %v4464
    %v4537 = vsub.f32 %v4393, %v4465
    %v4538 = vsub.f32 %v4394, %v4466
    %v4539 = vsub.f32 %v4395, %v4467
    %v4540 = vsub.f32 %v4396, %v4468
    %v4541 = vsub.f32 %v4397, %v4469
    %v4542 = vsub.f32 %v4398, %v4470
    %v4543 = vsub.f32 %v4399, %v4471
    %v4544 = vsub.f32 %v4400, %v4472
    %v4545 = vsub.f32 %v4401, %v4473
    %v4546 = vsub.f32 %v4402, %v4474
    %v4547 = vsub.f32 %v4403, %v4475
    %v4548 = vsub.f32 %v4404, %v4476
    %v4549 = vsub.f32 %v4405, %v4477
    %v4550 = vsub.f32 %v4406, %v4478
    %v4551 = vsub.f32 %v4407, %v4479
    %v4552 = vsub.f32 %v4408, %v4480
    %v4553 = vsub.f32 %v4409, %v4481
    %v4554 = vsub.f32 %v4410, %v4482
    %v4555 = vsub.f32 %v4411, %v4483
    %v4556 = vsub.f32 %v4412, %v4484
    %v4557 = vsub.f32 %v4413, %v4485
    %v4558 = vsub.f32 %v4414, %v4486
    %v4559 = vsub.f32 %v4415, %v4487
    %v4560 = vsub.f32 %v4416, %v4488
    %v4561 = vsub.f32 %v4417, %v4489
    %v4562 = vsub.f32 %v4418, %v4490
    %v4563 = vsub.f32 %v4419, %v4491
    %v4564 = vsub.f32 %v4420, %v4492
    %v4565 = vsub.f32 %v4421, %v4493
    %v4566 = vsub.f32 %v4422, %v4494
    %v4567 = vsub.f32 %v4423, %v4495
    %v4568 = vsub.f32 %v4424, %v4496
    %v4569 = vsub.f32 %v4425, %v4497
    %v4570 = vsub.f32 %v4426, %v4498
    %v4571 = vsub.f32 %v4427, %v4499
    %v4572 = vsub.f32 %v4428, %v4500
    %v4573 = vsub.f32 %v4429, %v4501
    %v4574 = vsub.f32 %v4430, %v4502
    %v4575 = vsub.f32 %v4431, %v4503
    %v4576 = vsub.f32 %v4432, %v4504
    %v4577 = vsub.f32 %v4433, %v4505
    %v4578 = vsub.f32 %v4434, %v4506
    %v4579 = vsub.f32 %v4435, %v4507
    %v4580 = vsub.f32 %v4436, %v4508
    %v4581 = vsub.f32 %v4437, %v4509
    %v4582 = vsub.f32 %v4438, %v4510
    %v4583 = vsub.f32 %v4439, %v4511
    %v4584 = vsub.f32 %v4440, %v4512
    %v4585 = vsub.f32 %v4441, %v4513
    %v4586 = vsub.f32 %v4442, %v4514
    %v4587 = vsub.f32 %v4443, %v4515
    %v4588 = vsub.f32 %v4444, %v4516
    %v4589 = vsub.f32 %v4445, %v4517
    %v4590 = vsub.f32 %v4446, %v4518
    %v4591 = vsub.f32 %v4447, %v4519
    %v4592 = vsub.f32 %v4448, %v4520
    %v4593 = vsub.f32 %v4449, %v4521
    %v4594 = vsub.f32 %v4450, %v4522
    %v4595 = vsub.f32 %v4451, %v4523
    %v4596 = vsub.f32 %v4452, %v4524
    %v4597 = vsub.f32 %v4453, %v4525
    %v4598 = vsub.f32 %v4454, %v4526
    %v4599 = vsub.f32 %v4455, %v4527
    %v4600 = vsub.f32 %v4456, %v4528
    %v4601 = vsub.f32 %v4457, %v4529
    %v4602 = vmul.f32 %v4506, 2.0
    %v4603 = vmul.f32 %v4507, 2.0
    %v4604 = vmul.f32 %v4508, 2.0
    %v4605 = vmul.f32 %v4509, 2.0
    %v4606 = vmul.f32 %v4510, 2.0
    %v4607 = vmul.f32 %v4511, 2.0
    %v4608 = vmul.f32 %v4512, 2.0
    %v4609 = vmul.f32 %v4513, 2.0
    %v4610 = vmul.f32 %v4514, 2.0
    %v4611 = vmul.f32 %v4515, 2.0
    %v4612 = vmul.f32 %v4516, 2.0
    %v4613 = vmul.f32 %v4517, 2.0
    %v4614 = vmul.f32 %v4518, 2.0
    %v4615 = vmul.f32 %v4519, 2.0
    %v4616 = vmul.f32 %v4520, 2.0
    %v4617 = vmul.f32 %v4521, 2.0
    %v4618 = vmul.f32 %v4522, 2.0
    %v4619 = vmul.f32 %v4523, 2.0
    %v4620 = vmul.f32 %v4524, 2.0
    %v4621 = vmul.f32 %v4525, 2.0
    %v4622 = vmul.f32 %v4526, 2.0
    %v4623 = vmul.f32 %v4527, 2.0
    %v4624 = vmul.f32 %v4528, 2.0
    %v4625 = vmul.f32 %v4529, 2.0
    %v4626 = vadd.f32 %v4602, 0.0001
    %v4627 = vadd.f32 %v4603, 0.0001
    %v4628 = vadd.f32 %v4604, 0.0001
    %v4629 = vadd.f32 %v4605, 0.0001
    %v4630 = vadd.f32 %v4606, 0.0001
    %v4631 = vadd.f32 %v4607, 0.0001
    %v4632 = vadd.f32 %v4608, 0.0001
    %v4633 = vadd.f32 %v4609, 0.0001
    %v4634 = vadd.f32 %v4610, 0.0001
    %v4635 = vadd.f32 %v4611, 0.0001
    %v4636 = vadd.f32 %v4612, 0.0001
    %v4637 = vadd.f32 %v4613, 0.0001
    %v4638 = vadd.f32 %v4614, 0.0001
    %v4639 = vadd.f32 %v4615, 0.0001
    %v4640 = vadd.f32 %v4616, 0.0001
    %v4641 = vadd.f32 %v4617, 0.0001
    %v4642 = vadd.f32 %v4618, 0.0001
    %v4643 = vadd.f32 %v4619, 0.0001
    %v4644 = vadd.f32 %v4620, 0.0001
    %v4645 = vadd.f32 %v4621, 0.0001
    %v4646 = vadd.f32 %v4622, 0.0001
    %v4647 = vadd.f32 %v4623, 0.0001
    %v4648 = vadd.f32 %v4624, 0.0001
    %v4649 = vadd.f32 %v4625, 0.0001
    %v4650 = vmul.f32 %v4578, 2.0
    %v4651 = vmul.f32 %v4579, 2.0
    %v4652 = vmul.f32 %v4580, 2.0
    %v4653 = vmul.f32 %v4581, 2.0
    %v4654 = vmul.f32 %v4582, 2.0
    %v4655 = vmul.f32 %v4583, 2.0
    %v4656 = vmul.f32 %v4584, 2.0
    %v4657 = vmul.f32 %v4585, 2.0
    %v4658 = vmul.f32 %v4586, 2.0
    %v4659 = vmul.f32 %v4587, 2.0
    %v4660 = vmul.f32 %v4588, 2.0
    %v4661 = vmul.f32 %v4589, 2.0
    %v4662 = vmul.f32 %v4590, 2.0
    %v4663 = vmul.f32 %v4591, 2.0
    %v4664 = vmul.f32 %v4592, 2.0
    %v4665 = vmul.f32 %v4593, 2.0
    %v4666 = vmul.f32 %v4594, 2.0
    %v4667 = vmul.f32 %v4595, 2.0
    %v4668 = vmul.f32 %v4596, 2.0
    %v4669 = vmul.f32 %v4597, 2.0
    %v4670 = vmul.f32 %v4598, 2.0
    %v4671 = vmul.f32 %v4599, 2.0
    %v4672 = vmul.f32 %v4600, 2.0
    %v4673 = vmul.f32 %v4601, 2.0
    %v4674 = vadd.f32 %v4650, 0.0009
    %v4675 = vadd.f32 %v4651, 0.0009
    %v4676 = vadd.f32 %v4652, 0.0009
    %v4677 = vadd.f32 %v4653, 0.0009
    %v4678 = vadd.f32 %v4654, 0.0009
    %v4679 = vadd.f32 %v4655, 0.0009
    %v4680 = vadd.f32 %v4656, 0.0009
    %v4681 = vadd.f32 %v4657, 0.0009
    %v4682 = vadd.f32 %v4658, 0.0009
    %v4683 = vadd.f32 %v4659, 0.0009
    %v4684 = vadd.f32 %v4660, 0.0009
    %v4685 = vadd.f32 %v4661, 0.0009
    %v4686 = vadd.f32 %v4662, 0.0009
    %v4687 = vadd.f32 %v4663, 0.0009
    %v4688 = vadd.f32 %v4664, 0.0009
    %v4689 = vadd.f32 %v4665, 0.0009
    %v4690 = vadd.f32 %v4666, 0.0009
    %v4691 = vadd.f32 %v4667, 0.0009
    %v4692 = vadd.f32 %v4668, 0.0009
    %v4693 = vadd.f32 %v4669, 0.0009
    %v4694 = vadd.f32 %v4670, 0.0009
    %v4695 = vadd.f32 %v4671, 0.0009
    %v4696 = vadd.f32 %v4672, 0.0009
    %v4697 = vadd.f32 %v4673, 0.0009
    %v4698 = vmul.f32 %v4626, %v4674
    %v4699 = vmul.f32 %v4627, %v4675
    %v4700 = vmul.f32 %v4628, %v4676
    %v4701 = vmul.f32 %v4629, %v4677
    %v4702 = vmul.f32 %v4630, %v4678
    %v4703 = vmul.f32 %v4631, %v4679
    %v4704 = vmul.f32 %v4632, %v4680
    %v4705 = vmul.f32 %v4633, %v4681
    %v4706 = vmul.f32 %v4634, %v4682
    %v4707 = vmul.f32 %v4635, %v4683
    %v4708 = vmul.f32 %v4636, %v4684
    %v4709 = vmul.f32 %v4637, %v4685
    %v4710 = vmul.f32 %v4638, %v4686
    %v4711 = vmul.f32 %v4639, %v4687
    %v4712 = vmul.f32 %v4640, %v4688
    %v4713 = vmul.f32 %v4641, %v4689
    %v4714 = vmul.f32 %v4642, %v4690
    %v4715 = vmul.f32 %v4643, %v4691
    %v4716 = vmul.f32 %v4644, %v4692
    %v4717 = vmul.f32 %v4645, %v4693
    %v4718 = vmul.f32 %v4646, %v4694
    %v4719 = vmul.f32 %v4647, %v4695
    %v4720 = vmul.f32 %v4648, %v4696
    %v4721 = vmul.f32 %v4649, %v4697
    %v4722 = vadd.f32 %v4458, %v4482
    %v4723 = vadd.f32 %v4459, %v4483
    %v4724 = vadd.f32 %v4460, %v4484
    %v4725 = vadd.f32 %v4461, %v4485
    %v4726 = vadd.f32 %v4462, %v4486
    %v4727 = vadd.f32 %v4463, %v4487
    %v4728 = vadd.f32 %v4464, %v4488
    %v4729 = vadd.f32 %v4465, %v4489
    %v4730 = vadd.f32 %v4466, %v4490
    %v4731 = vadd.f32 %v4467, %v4491
    %v4732 = vadd.f32 %v4468, %v4492
    %v4733 = vadd.f32 %v4469, %v4493
    %v4734 = vadd.f32 %v4470, %v4494
    %v4735 = vadd.f32 %v4471, %v4495
    %v4736 = vadd.f32 %v4472, %v4496
    %v4737 = vadd.f32 %v4473, %v4497
    %v4738 = vadd.f32 %v4474, %v4498
    %v4739 = vadd.f32 %v4475, %v4499
    %v4740 = vadd.f32 %v4476, %v4500
    %v4741 = vadd.f32 %v4477, %v4501
    %v4742 = vadd.f32 %v4478, %v4502
    %v4743 = vadd.f32 %v4479, %v4503
    %v4744 = vadd.f32 %v4480, %v4504
    %v4745 = vadd.f32 %v4481, %v4505
    %v4746 = vadd.f32 %v4722, 0.0001
    %v4747 = vadd.f32 %v4723, 0.0001
    %v4748 = vadd.f32 %v4724, 0.0001
    %v4749 = vadd.f32 %v4725, 0.0001
    %v4750 = vadd.f32 %v4726, 0.0001
    %v4751 = vadd.f32 %v4727, 0.0001
    %v4752 = vadd.f32 %v4728, 0.0001
    %v4753 = vadd.f32 %v4729, 0.0001
    %v4754 = vadd.f32 %v4730, 0.0001
    %v4755 = vadd.f32 %v4731, 0.0001
    %v4756 = vadd.f32 %v4732, 0.0001
    %v4757 = vadd.f32 %v4733, 0.0001
    %v4758 = vadd.f32 %v4734, 0.0001
    %v4759 = vadd.f32 %v4735, 0.0001
    %v4760 = vadd.f32 %v4736, 0.0001
    %v4761 = vadd.f32 %v4737, 0.0001
    %v4762 = vadd.f32 %v4738, 0.0001
    %v4763 = vadd.f32 %v4739, 0.0001
    %v4764 = vadd.f32 %v4740, 0.0001
    %v4765 = vadd.f32 %v4741, 0.0001
    %v4766 = vadd.f32 %v4742, 0.0001
    %v4767 = vadd.f32 %v4743, 0.0001
    %v4768 = vadd.f32 %v4744, 0.0001
    %v4769 = vadd.f32 %v4745, 0.0001
    %v4770 = vadd.f32 %v4530, %v4554
    %v4771 = vadd.f32 %v4531, %v4555
    %v4772 = vadd.f32 %v4532, %v4556
    %v4773 = vadd.f32 %v4533, %v4557
    %v4774 = vadd.f32 %v4534, %v4558
    %v4775 = vadd.f32 %v4535, %v4559
    %v4776 = vadd.f32 %v4536, %v4560
    %v4777 = vadd.f32 %v4537, %v4561
    %v4778 = vadd.f32 %v4538, %v4562
    %v4779 = vadd.f32 %v4539, %v4563
    %v4780 = vadd.f32 %v4540, %v4564
    %v4781 = vadd.f32 %v4541, %v4565
    %v4782 = vadd.f32 %v4542, %v4566
    %v4783 = vadd.f32 %v4543, %v4567
    %v4784 = vadd.f32 %v4544, %v4568
    %v4785 = vadd.f32 %v4545, %v4569
    %v4786 = vadd.f32 %v4546, %v4570
    %v4787 = vadd.f32 %v4547, %v4571
    %v4788 = vadd.f32 %v4548, %v4572
    %v4789 = vadd.f32 %v4549, %v4573
    %v4790 = vadd.f32 %v4550, %v4574
    %v4791 = vadd.f32 %v4551, %v4575
    %v4792 = vadd.f32 %v4552, %v4576
    %v4793 = vadd.f32 %v4553, %v4577
    %v4794 = vadd.f32 %v4770, 0.0009
    %v4795 = vadd.f32 %v4771, 0.0009
    %v4796 = vadd.f32 %v4772, 0.0009
    %v4797 = vadd.f32 %v4773, 0.0009
    %v4798 = vadd.f32 %v4774, 0.0009
    %v4799 = vadd.f32 %v4775, 0.0009
    %v4800 = vadd.f32 %v4776, 0.0009
    %v4801 = vadd.f32 %v4777, 0.0009
    %v4802 = vadd.f32 %v4778, 0.0009
    %v4803 = vadd.f32 %v4779, 0.0009
    %v4804 = vadd.f32 %v4780, 0.0009
    %v4805 = vadd.f32 %v4781, 0.0009
    %v4806 = vadd.f32 %v4782, 0.0009
    %v4807 = vadd.f32 %v4783, 0.0009
    %v4808 = vadd.f32 %v4784, 0.0009
    %v4809 = vadd.f32 %v4785, 0.0009
    %v4810 = vadd.f32 %v4786, 0.0009
    %v4811 = vadd.f32 %v4787, 0.0009
    %v4812 = vadd.f32 %v4788, 0.0009
    %v4813 = vadd.f32 %v4789, 0.0009
    %v4814 = vadd.f32 %v4790, 0.0009
    %v4815 = vadd.f32 %v4791, 0.0009
    %v4816 = vadd.f32 %v4792, 0.0009
    %v4817 = vadd.f32 %v4793, 0.0009
    %v4818 = vmul.f32 %v4746, %v4794
    %v4819 = vmul.f32 %v4747, %v4795
    %v4820 = vmul.f32 %v4748, %v4796
    %v4821 = vmul.f32 %v4749, %v4797
    %v4822 = vmul.f32 %v4750, %v4798
    %v4823 = vmul.f32 %v4751, %v4799
    %v4824 = vmul.f32 %v4752, %v4800
    %v4825 = vmul.f32 %v4753, %v4801
    %v4826 = vmul.f32 %v4754, %v4802
    %v4827 = vmul.f32 %v4755, %v4803
    %v4828 = vmul.f32 %v4756, %v4804
    %v4829 = vmul.f32 %v4757, %v4805
    %v4830 = vmul.f32 %v4758, %v4806
    %v4831 = vmul.f32 %v4759, %v4807
    %v4832 = vmul.f32 %v4760, %v4808
    %v4833 = vmul.f32 %v4761, %v4809
    %v4834 = vmul.f32 %v4762, %v4810
    %v4835 = vmul.f32 %v4763, %v4811
    %v4836 = vmul.f32 %v4764, %v4812
    %v4837 = vmul.f32 %v4765, %v4813
    %v4838 = vmul.f32 %v4766, %v4814
    %v4839 = vmul.f32 %v4767, %v4815
    %v4840 = vmul.f32 %v4768, %v4816
    %v4841 = vmul.f32 %v4769, %v4817
    %v4842 = vrcp.pop %v4818
    %v4843 = vrcp.pop %v4819
    %v4844 = vrcp.pop %v4820
    %v4845 = vrcp.pop %v4821
    %v4846 = vrcp.pop %v4822
    %v4847 = vrcp.pop %v4823
    %v4848 = vrcp.pop %v4824
    %v4849 = vrcp.pop %v4825
    %v4850 = vrcp.pop %v4826
    %v4851 = vrcp.pop %v4827
    %v4852 = vrcp.pop %v4828
    %v4853 = vrcp.pop %v4829
    %v4854 = vrcp.pop %v4830
    %v4855 = vrcp.pop %v4831
    %v4856 = vrcp.pop %v4832
    %v4857 = vrcp.pop %v4833
    %v4858 = vrcp.pop %v4834
    %v4859 = vrcp.pop %v4835
    %v4860 = vrcp.pop %v4836
    %v4861 = vrcp.pop %v4837
    %v4862 = vrcp.pop %v4838
    %v4863 = vrcp.pop %v4839
    %v4864 = vrcp.pop %v4840
    %v4865 = vrcp.pop %v4841
    %v4866 = vmul.f32 %v4698, %v4842
    %v4867 = vmul.f32 %v4699, %v4843
    %v4868 = vmul.f32 %v4700, %v4844
    %v4869 = vmul.f32 %v4701, %v4845
    %v4870 = vmul.f32 %v4702, %v4846
    %v4871 = vmul.f32 %v4703, %v4847
    %v4872 = vmul.f32 %v4704, %v4848
    %v4873 = vmul.f32 %v4705, %v4849
    %v4874 = vmul.f32 %v4706, %v4850
    %v4875 = vmul.f32 %v4707, %v4851
    %v4876 = vmul.f32 %v4708, %v4852
    %v4877 = vmul.f32 %v4709, %v4853
    %v4878 = vmul.f32 %v4710, %v4854
    %v4879 = vmul.f32 %v4711, %v4855
    %v4880 = vmul.f32 %v4712, %v4856
    %v4881 = vmul.f32 %v4713, %v4857
    %v4882 = vmul.f32 %v4714, %v4858
    %v4883 = vmul.f32 %v4715, %v4859
    %v4884 = vmul.f32 %v4716, %v4860
    %v4885 = vmul.f32 %v4717, %v4861
    %v4886 = vmul.f32 %v4718, %v4862
    %v4887 = vmul.f32 %v4719, %v4863
    %v4888 = vmul.f32 %v4720, %v4864
    %v4889 = vmul.f32 %v4721, %v4865
    %v4890 = vsub.f32 1.0, %v4866
    %v4891 = vsub.f32 1.0, %v4867
    %v4892 = vsub.f32 1.0, %v4868
    %v4893 = vsub.f32 1.0, %v4869
    %v4894 = vsub.f32 1.0, %v4870
    %v4895 = vsub.f32 1.0, %v4871
    %v4896 = vsub.f32 1.0, %v4872
    %v4897 = vsub.f32 1.0, %v4873
    %v4898 = vsub.f32 1.0, %v4874
    %v4899 = vsub.f32 1.0, %v4875
    %v4900 = vsub.f32 1.0, %v4876
    %v4901 = vsub.f32 1.0, %v4877
    %v4902 = vsub.f32 1.0, %v4878
    %v4903 = vsub.f32 1.0, %v4879
    %v4904 = vsub.f32 1.0, %v4880
    %v4905 = vsub.f32 1.0, %v4881
    %v4906 = vsub.f32 1.0, %v4882
    %v4907 = vsub.f32 1.0, %v4883
    %v4908 = vsub.f32 1.0, %v4884
    %v4909 = vsub.f32 1.0, %v4885
    %v4910 = vsub.f32 1.0, %v4886
    %v4911 = vsub.f32 1.0, %v4887
    %v4912 = vsub.f32 1.0, %v4888
    %v4913 = vsub.f32 1.0, %v4889
    %v4914 = vmul.f32 %v4890, 0.5
    %v4915 = vmul.f32 %v4891, 0.5
    %v4916 = vmul.f32 %v4892, 0.5
    %v4917 = vmul.f32 %v4893, 0.5
    %v4918 = vmul.f32 %v4894, 0.5
    %v4919 = vmul.f32 %v4895, 0.5
    %v4920 = vmul.f32 %v4896, 0.5
    %v4921 = vmul.f32 %v4897, 0.5
    %v4922 = vmul.f32 %v4898, 0.5
    %v4923 = vmul.f32 %v4899, 0.5
    %v4924 = vmul.f32 %v4900, 0.5
    %v4925 = vmul.f32 %v4901, 0.5
    %v4926 = vmul.f32 %v4902, 0.5
    %v4927 = vmul.f32 %v4903, 0.5
    %v4928 = vmul.f32 %v4904, 0.5
    %v4929 = vmul.f32 %v4905, 0.5
    %v4930 = vmul.f32 %v4906, 0.5
    %v4931 = vmul.f32 %v4907, 0.5
    %v4932 = vmul.f32 %v4908, 0.5
    %v4933 = vmul.f32 %v4909, 0.5
    %v4934 = vmul.f32 %v4910, 0.5
    %v4935 = vmul.f32 %v4911, 0.5
    %v4936 = vmul.f32 %v4912, 0.5
    %v4937 = vmul.f32 %v4913, 0.5
    %v4938 = vmax.f32 %v4914, 0.0
    %v4939 = vmax.f32 %v4915, 0.0
    %v4940 = vmax.f32 %v4916, 0.0
    %v4941 = vmax.f32 %v4917, 0.0
    %v4942 = vmax.f32 %v4918, 0.0
    %v4943 = vmax.f32 %v4919, 0.0
    %v4944 = vmax.f32 %v4920, 0.0
    %v4945 = vmax.f32 %v4921, 0.0
    %v4946 = vmax.f32 %v4922, 0.0
    %v4947 = vmax.f32 %v4923, 0.0
    %v4948 = vmax.f32 %v4924, 0.0
    %v4949 = vmax.f32 %v4925, 0.0
    %v4950 = vmax.f32 %v4926, 0.0
    %v4951 = vmax.f32 %v4927, 0.0
    %v4952 = vmax.f32 %v4928, 0.0
    %v4953 = vmax.f32 %v4929, 0.0
    %v4954 = vmax.f32 %v4930, 0.0
    %v4955 = vmax.f32 %v4931, 0.0
    %v4956 = vmax.f32 %v4932, 0.0
    %v4957 = vmax.f32 %v4933, 0.0
    %v4958 = vmax.f32 %v4934, 0.0
    %v4959 = vmax.f32 %v4935, 0.0
    %v4960 = vmax.f32 %v4936, 0.0
    %v4961 = vmax.f32 %v4937, 0.0
    %v4962 = vmin.f32 %v4938, 1.0
    %v4963 = vmin.f32 %v4939, 1.0
    %v4964 = vmin.f32 %v4940, 1.0
    %v4965 = vmin.f32 %v4941, 1.0
    %v4966 = vmin.f32 %v4942, 1.0
    %v4967 = vmin.f32 %v4943, 1.0
    %v4968 = vmin.f32 %v4944, 1.0
    %v4969 = vmin.f32 %v4945, 1.0
    %v4970 = vmin.f32 %v4946, 1.0
    %v4971 = vmin.f32 %v4947, 1.0
    %v4972 = vmin.f32 %v4948, 1.0
    %v4973 = vmin.f32 %v4949, 1.0
    %v4974 = vmin.f32 %v4950, 1.0
    %v4975 = vmin.f32 %v4951, 1.0
    %v4976 = vmin.f32 %v4952, 1.0
    %v4977 = vmin.f32 %v4953, 1.0
    %v4978 = vmin.f32 %v4954, 1.0
    %v4979 = vmin.f32 %v4955, 1.0
    %v4980 = vmin.f32 %v4956, 1.0
    %v4981 = vmin.f32 %v4957, 1.0
    %v4982 = vmin.f32 %v4958, 1.0
    %v4983 = vmin.f32 %v4959, 1.0
    %v4984 = vmin.f32 %v4960, 1.0
    %v4985 = vmin.f32 %v4961, 1.0
    %vm5010 = vcmask 1046528
    %v5011 = vrot.slane %v4962, 1
    %v5012 = vrot.slane %v4963, 1
    %v5013 = vsel %vm5010, %v5011, %v5012
    %v5014 = vrot.slane %v4964, 1
    %v5015 = vsel %vm5010, %v5012, %v5014
    %v5016 = vrot.slane %v4965, 1
    %v5017 = vrot.slane %v4966, 1
    %v5018 = vsel %vm5010, %v5016, %v5017
    %v5019 = vrot.slane %v4967, 1
    %v5020 = vsel %vm5010, %v5017, %v5019
    %v5021 = vrot.slane %v4968, 1
    %v5022 = vrot.slane %v4969, 1
    %v5023 = vsel %vm5010, %v5021, %v5022
    %v5024 = vrot.slane %v4970, 1
    %v5025 = vsel %vm5010, %v5022, %v5024
    %v5026 = vrot.slane %v4971, 1
    %v5027 = vrot.slane %v4972, 1
    %v5028 = vsel %vm5010, %v5026, %v5027
    %v5029 = vrot.slane %v4973, 1
    %v5030 = vsel %vm5010, %v5027, %v5029
    %v5031 = vrot.slane %v4974, 1
    %v5032 = vrot.slane %v4975, 1
    %v5033 = vsel %vm5010, %v5031, %v5032
    %v5034 = vrot.slane %v4976, 1
    %v5035 = vsel %vm5010, %v5032, %v5034
    %v5036 = vrot.slane %v4977, 1
    %v5037 = vrot.slane %v4978, 1
    %v5038 = vsel %vm5010, %v5036, %v5037
    %v5039 = vrot.slane %v4979, 1
    %v5040 = vsel %vm5010, %v5037, %v5039
    %v5041 = vrot.slane %v4980, 1
    %v5042 = vrot.slane %v4981, 1
    %v5043 = vsel %vm5010, %v5041, %v5042
    %v5044 = vrot.slane %v4982, 1
    %v5045 = vsel %vm5010, %v5042, %v5044
    %v5046 = vrot.slane %v4983, 1
    %v5047 = vrot.slane %v4984, 1
    %v5048 = vsel %vm5010, %v5046, %v5047
    %v5049 = vrot.slane %v4985, 1
    %v5050 = vsel %vm5010, %v5047, %v5049
    %5051 = vrot.lane.b32.xlu0 %v5013, 127
    %v5052 = vpop.permute.xlu0 %5051
    %5053 = vrot.lane.b32.xlu0 %v5015, 127
    %v5054 = vpop.permute.xlu0 %5053
    %5055 = vrot.lane.b32.xlu0 %v5018, 127
    %v5056 = vpop.permute.xlu0 %5055
    %5057 = vrot.lane.b32.xlu0 %v5020, 127
    %v5058 = vpop.permute.xlu0 %5057
    %5059 = vrot.lane.b32.xlu0 %v5023, 127
    %v5060 = vpop.permute.xlu0 %5059
    %5061 = vrot.lane.b32.xlu0 %v5025, 127
    %v5062 = vpop.permute.xlu0 %5061
    %5063 = vrot.lane.b32.xlu0 %v5028, 127
    %v5064 = vpop.permute.xlu0 %5063
    %5065 = vrot.lane.b32.xlu0 %v5030, 127
    %v5066 = vpop.permute.xlu0 %5065
    %5067 = vrot.lane.b32.xlu0 %v5033, 127
    %v5068 = vpop.permute.xlu0 %5067
    %5069 = vrot.lane.b32.xlu0 %v5035, 127
    %v5070 = vpop.permute.xlu0 %5069
    %5071 = vrot.lane.b32.xlu0 %v5038, 127
    %v5072 = vpop.permute.xlu0 %5071
    %5073 = vrot.lane.b32.xlu0 %v5040, 127
    %v5074 = vpop.permute.xlu0 %5073
    %5075 = vrot.lane.b32.xlu0 %v5043, 127
    %v5076 = vpop.permute.xlu0 %5075
    %5077 = vrot.lane.b32.xlu0 %v5045, 127
    %v5078 = vpop.permute.xlu0 %5077
    %5079 = vrot.lane.b32.xlu0 %v5048, 127
    %v5080 = vpop.permute.xlu0 %5079
    %5081 = vrot.lane.b32.xlu0 %v5050, 127
    %v5082 = vpop.permute.xlu0 %5081
    %v5099 = vadd.f32 %v184, %v5052
    %v5100 = vadd.f32 %v185, %v5054
    %v5101 = vadd.f32 %v186, %v5056
    %v5102 = vadd.f32 %v187, %v5058
    %v5103 = vadd.f32 %v188, %v5060
    %v5104 = vadd.f32 %v189, %v5062
    %v5105 = vadd.f32 %v190, %v5064
    %v5106 = vadd.f32 %v191, %v5066
    %v5107 = vadd.f32 %v192, %v5068
    %v5108 = vadd.f32 %v193, %v5070
    %v5109 = vadd.f32 %v194, %v5072
    %v5110 = vadd.f32 %v195, %v5074
    %v5111 = vadd.f32 %v196, %v5076
    %v5112 = vadd.f32 %v197, %v5078
    %v5113 = vadd.f32 %v198, %v5080
    %v5114 = vadd.f32 %v199, %v5082
    %vm5115 = vcmask 130048
    %v5116 = vsel %vm5115, %v5099, 0.0
    %v5117 = vsel %vm5115, %v5100, 0.0
    %v5118 = vadd.f32 %v5116, %v5117
    %v5119 = vsel %vm5115, %v5101, 0.0
    %v5120 = vadd.f32 %v5118, %v5119
    %v5121 = vsel %vm5115, %v5102, 0.0
    %v5122 = vadd.f32 %v5120, %v5121
    %v5123 = vsel %vm5115, %v5103, 0.0
    %v5124 = vadd.f32 %v5122, %v5123
    %v5125 = vsel %vm5115, %v5104, 0.0
    %v5126 = vadd.f32 %v5124, %v5125
    %v5127 = vsel %vm5115, %v5105, 0.0
    %v5128 = vadd.f32 %v5126, %v5127
    %v5129 = vsel %vm5115, %v5106, 0.0
    %v5130 = vadd.f32 %v5128, %v5129
    %v5131 = vsel %vm5115, %v5107, 0.0
    %v5132 = vadd.f32 %v5130, %v5131
    %v5133 = vsel %vm5115, %v5108, 0.0
    %v5134 = vadd.f32 %v5132, %v5133
    %v5135 = vsel %vm5115, %v5109, 0.0
    %v5136 = vadd.f32 %v5134, %v5135
    %v5137 = vsel %vm5115, %v5110, 0.0
    %v5138 = vadd.f32 %v5136, %v5137
    %v5139 = vsel %vm5115, %v5111, 0.0
    %v5140 = vadd.f32 %v5138, %v5139
    %v5141 = vsel %vm5115, %v5112, 0.0
    %v5142 = vadd.f32 %v5140, %v5141
    %v5143 = vsel %vm5115, %v5113, 0.0
    %v5144 = vadd.f32 %v5142, %v5143
    %v5145 = vsel %vm5115, %v5114, 0.0
    %v5146 = vadd.f32 %v5144, %v5145
    %5147 = vadd.xlane.f32.xlu0 %v5146
    %v5148 = vpop.xlane.xlu0 %5147
    %v5149 = vrot.slane %v5148, 4
    %v5150 = vadd.f32 %v5148, %v5149
    %v5151 = vrot.slane %v5150, 2
    %v5152 = vadd.f32 %v5150, %v5151
    %v5153 = vrot.slane %v5152, 1
    %v5154 = vadd.f32 %v5152, %v5153
    %s5155 = vtos %v5154
    %v5156 = vstv %s5155
    %5157 = vst [vmem:[#allocation8] sm:$0xff] %v5156
    // Predicated region
    $region18: #{tpu_custom_call.1} parent=1 // pred_check
      _
    $region19: #{tpu_custom_call.1} parent=1 // pred_check_branch
      %5159 = sbr.rel (0) target = $region21
    $region20: #{tpu_custom_call.1} parent=1 // pred_region
      %s5161 = ssub.s32 128, 128
      %5162 = vsyncadd [#allocation5], %s5161
      %s5164 = sshll.u32 [#allocation8], 4
      %s5165 = int_to_ptr.vmem [resolvable:$true] %s5164
      %5167 = dma.vmem_to_hbm [thread:$0]  %s5165, 128, %s2, [#allocation5]
    $region21: #{tpu_custom_call.1} parent=1 // pred_fallthru
      _
    // Predicated region
    $region22: #{tpu_custom_call.1} parent=1 // pred_check
      _
    $region23: #{tpu_custom_call.1} parent=1 // pred_check_branch
      %5169 = sbr.rel (0) target = $region25
    $region24: #{tpu_custom_call.1} parent=1 // pred_region
      %5170 = dma.done [#allocation5], 128
    $region25: #{tpu_custom_call.1} parent=1 // pred_fallthru
      _
    %5171 = vsyncpa [#allocation4], 1
    %5172 = vsyncpa [#allocation7], 1
    %5173 = vsyncpa [#allocation5], 1

</llo_original>
